<compile_context>
chip_gen: v6e
topology: v6e:2x2x1
jax: 0.10.0
libtpu: 0.0.40
codegen_flags: <defaults>
</compile_context>

<pallas_src>
import jax
import jax.numpy as jnp
from jax.experimental import pallas as pl
from jax.experimental.pallas import tpu as pltpu


def _hardswish(v):
    return v * jnp.clip(v + 3.0, 0.0, 6.0) * (1.0 / 6.0)


# --------------------------------------------------------------------------
# Single fused kernel: conv+ReLU extractors, flatten (implicit), 4 MLP heads.
# --------------------------------------------------------------------------
def fused_transfer_kernel(xpad_ref, convw_ref, convb_ref,
                          w1_ref, b1_ref,
                          w2_ref, b2_ref,
                          w3_ref, b3_ref,
                          w4_ref, b4_ref,
                          w5_ref, b5_ref,
                          out_ref):
    B = xpad_ref.shape[0]
    C, K = convw_ref.shape            # stacked conv channels, kernel size
    L = w1_ref.shape[1]               # sequence length (input_dim)
    n_heads = w2_ref.shape[0]
    H1 = w2_ref.shape[1]              # 128
    nH1 = w1_ref.shape[2]             # n_heads * H1

    xp = xpad_ref[...]                                    # (B, L + K - 1)

    # Conv1d(1, C, K, same pad) + ReLU fused with the first Linear layer:
    #   flat = Flatten(feat, NCW);  flat @ W1  ==  sum_c feat_c @ W1[c]
    # so the (B, C*L) flatten is never materialized and the dominant matmul
    # streams through the MXU once for all 4 heads (d_out = 4 * 128).
    h1 = jnp.zeros((B, nH1), jnp.float32)
    for c in range(C):                                    # C, K static -> unrolled
        acc = jnp.zeros((B, L), jnp.float32)
        for k in range(K):
            acc = acc + xp[:, k:k + L] * convw_ref[c, k]  # SMEM scalar weight
        feat_c = jnp.maximum(acc + convb_ref[c], 0.0)     # (B, L)
        h1 = h1 + jnp.dot(feat_c, w1_ref[c],
                          preferred_element_type=jnp.float32)
    h1 = _hardswish(h1 + b1_ref[...])                     # (B, n_heads*H1)

    # Remaining (tiny) per-head layers; all weights already resident in VMEM.
    # Dropout is identity in eval mode.
    w5_all = w5_ref[...]                                  # (n_heads, 32)
    for h in range(n_heads):
        v = h1[:, h * H1:(h + 1) * H1]                    # (B, 128), lane aligned
        v = _hardswish(jnp.dot(v, w2_ref[h],
                               preferred_element_type=jnp.float32) + b2_ref[h])
        v = _hardswish(jnp.dot(v, w3_ref[h],
                               preferred_element_type=jnp.float32) + b3_ref[h])
        v = _hardswish(jnp.dot(v, w4_ref[h],
                               preferred_element_type=jnp.float32) + b4_ref[h])
        y = jnp.sum(v * w5_all[h:h + 1, :], axis=-1, keepdims=True) + b5_ref[h]
        out_ref[:, h:h + 1] = jnp.maximum(y, 0.0)         # final ReLU


# --------------------------------------------------------------------------
# Wrapper: one pallas_call, no grid, weights resident in VMEM / SMEM.
# --------------------------------------------------------------------------
def transfer_model_forward(x, params):
    """x: (B, input_dim) f32 -> tuple of 4 (B, 1) task outputs."""
    B, _ = x.shape
    _, K = params["conv_w"].shape
    pad = K // 2
    xpad = jnp.pad(x, ((0, 0), (pad, pad)))               # tiny, fused by XLA
    n_heads = params["w2"].shape[0]

    vmem = pltpu.MemorySpace.VMEM
    smem = pltpu.MemorySpace.SMEM
    in_specs = [
        pl.BlockSpec(memory_space=vmem),   # xpad
        pl.BlockSpec(memory_space=smem),   # conv_w  (scalar reads)
        pl.BlockSpec(memory_space=smem),   # conv_b  (scalar reads)
        pl.BlockSpec(memory_space=vmem),   # w1 (C, L, n_heads*128)
        pl.BlockSpec(memory_space=vmem),   # b1
        pl.BlockSpec(memory_space=vmem),   # w2
        pl.BlockSpec(memory_space=vmem),   # b2
        pl.BlockSpec(memory_space=vmem),   # w3
        pl.BlockSpec(memory_space=vmem),   # b3
        pl.BlockSpec(memory_space=vmem),   # w4
        pl.BlockSpec(memory_space=vmem),   # b4
        pl.BlockSpec(memory_space=vmem),   # w5
        pl.BlockSpec(memory_space=smem),   # b5 (scalar reads)
    ]
    out = pl.pallas_call(
        fused_transfer_kernel,
        out_shape=jax.ShapeDtypeStruct((B, n_heads), jnp.float32),
        in_specs=in_specs,
        out_specs=pl.BlockSpec(memory_space=vmem),
    )(xpad, params["conv_w"], params["conv_b"],
      params["w1"], params["b1"], params["w2"], params["b2"],
      params["w3"], params["b3"], params["w4"], params["b4"],
      params["w5"], params["b5"])
    return out[:, 0:1], out[:, 1:2], out[:, 2:3], out[:, 3:4]


# --------------------------------------------------------------------------
# Deterministic synthetic parameters (shapes consistent with the module).
# --------------------------------------------------------------------------
def init_params(key, *, input_dim, nchannels_per_extractor, n_linear=4,
                n_tasks=4, kernel_size=3):
    C = int(sum(nchannels_per_extractor))
    hidden = [32 * i for i in range(1, n_linear + 1)][::-1]   # [128, 96, 64, 32]
    assert len(hidden) == 4, "kernel specialized for n_linear=4 (module default)"
    H1, H2, H3, H4 = hidden
    D = input_dim * C
    f32 = jnp.float32

    ks = jax.random.split(key, 12)
    conv_w = 0.1 * jax.random.normal(ks[0], (C, kernel_size), dtype=f32)
    conv_b = 0.1 * jax.random.normal(ks[1], (C,), dtype=f32)

    s1 = 1.0 / jnp.sqrt(jnp.float32(D))
    # per-head W1 (D, 128) concatenated along d_out, reshaped to (C, L, 4*128)
    w1 = s1 * jax.random.normal(ks[2], (C, input_dim, n_tasks * H1), dtype=f32)
    b1 = s1 * jax.random.normal(ks[3], (1, n_tasks * H1), dtype=f32)

    def lin(kw, kb, d_in, d_out):
        s = 1.0 / jnp.sqrt(jnp.float32(d_in))
        return (s * jax.random.normal(kw, (n_tasks, d_in, d_out), dtype=f32),
                s * jax.random.normal(kb, (n_tasks, 1, d_out), dtype=f32))

    w2, b2 = lin(ks[4], ks[5], H1, H2)
    w3, b3 = lin(ks[6], ks[7], H2, H3)
    w4, b4 = lin(ks[8], ks[9], H3, H4)
    s5 = 1.0 / jnp.sqrt(jnp.float32(H4))
    w5 = s5 * jax.random.normal(ks[10], (n_tasks, H4), dtype=f32)
    b5 = s5 * jax.random.normal(ks[11], (n_tasks,), dtype=f32)

    return dict(conv_w=conv_w, conv_b=conv_b, w1=w1, b1=b1, w2=w2, b2=b2,
                w3=w3, b3=b3, w4=w4, b4=b4, w5=w5, b5=b5)


# --------------------------------------------------------------------------
# Pure-JAX reference (PyTorch-faithful order: conv -> cat -> flatten -> heads).
# --------------------------------------------------------------------------
def reference_forward(x, params):
    B, L = x.shape
    C, K = params["conv_w"].shape
    pad = K // 2
    xpad = jnp.pad(x, ((0, 0), (pad, pad)))
    acc = jnp.zeros((B, C, L), jnp.float32)
    for k in range(K):
        acc = acc + xpad[:, None, k:k + L] * params["conv_w"][None, :, k:k + 1]
    feat = jnp.maximum(acc + params["conv_b"][None, :, None], 0.0)
    flat = feat.reshape(B, C * L)                        # nn.Flatten on NCW

    def hswish(v):
        return v * jnp.clip(v + 3.0, 0.0, 6.0) / 6.0

    n_heads, H1 = params["w2"].shape[0], params["w2"].shape[1]
    W1 = params["w1"].reshape(C * L, n_heads * H1)
    h1 = hswish(flat @ W1 + params["b1"])
    outs = []
    for h in range(n_heads):
        v = h1[:, h * H1:(h + 1) * H1]
        v = hswish(v @ params["w2"][h] + params["b2"][h])
        v = hswish(v @ params["w3"][h] + params["b3"][h])
        v = hswish(v @ params["w4"][h] + params["b4"][h])
        y = v @ params["w5"][h][:, None] + params["b5"][h]
        outs.append(jnp.maximum(y, 0.0))
    return tuple(outs)


if __name__ == "__main__":
    # Module-consistent small shapes: 1 pretrained TumE model -> 2 conv
    # extractors with 4 channels each (C_total = 8); input_dim = 192 (default).
    B = 2
    INPUT_DIM = 192
    NCHANNELS = [4, 4]

    root = jax.random.PRNGKey(0)
    kx, kp = jax.random.split(root)
    params = init_params(kp, input_dim=INPUT_DIM,
                         nchannels_per_extractor=NCHANNELS)
    x = jax.random.normal(kx, (B, INPUT_DIM), dtype=jnp.float32)

    fwd = jax.jit(transfer_model_forward)
    y1, y2, y3, y4 = jax.block_until_ready(fwd(x, params))

    r1, r2, r3, r4 = reference_forward(x, params)
    for got, want in zip((y1, y2, y3, y4), (r1, r2, r3, r4)):
        assert got.shape == (B, 1)
        assert jnp.allclose(got, want, atol=2e-3, rtol=2e-3)

    print("KERNEL_OK")
</pallas_src>

<mosaic_0001>
module attributes {stable_mosaic.version = 11 : i64} {
  func.func @fused_transfer_kernel(%arg0: memref<2x194xf32, #tpu.memory_space<vmem>>, %arg1: memref<8x3xf32, #tpu.memory_space<smem>>, %arg2: memref<8xf32, #tpu.memory_space<smem>>, %arg3: memref<8x192x512xf32, #tpu.memory_space<vmem>>, %arg4: memref<1x512xf32, #tpu.memory_space<vmem>>, %arg5: memref<4x128x96xf32, #tpu.memory_space<vmem>>, %arg6: memref<4x1x96xf32, #tpu.memory_space<vmem>>, %arg7: memref<4x96x64xf32, #tpu.memory_space<vmem>>, %arg8: memref<4x1x64xf32, #tpu.memory_space<vmem>>, %arg9: memref<4x64x32xf32, #tpu.memory_space<vmem>>, %arg10: memref<4x1x32xf32, #tpu.memory_space<vmem>>, %arg11: memref<4x32xf32, #tpu.memory_space<vmem>>, %arg12: memref<4xf32, #tpu.memory_space<smem>>, %arg13: memref<2x4xf32, #tpu.memory_space<vmem>>) attributes {dimension_semantics = [], scalar_prefetch = 0 : i64, scratch_operands = 0 : i64, tpu.core_type = #tpu.core_type<tc>} {
    %c0 = arith.constant 0 : index
    %c0_0 = arith.constant 0 : index
    %0 = vector.load %arg0[%c0, %c0_0] : memref<2x194xf32, #tpu.memory_space<vmem>>, vector<2x194xf32>
    %cst = arith.constant 0.000000e+00 : f32
    %1 = vector.broadcast %cst : f32 to vector<2x512xf32>
    %cst_1 = arith.constant 0.000000e+00 : f32
    %2 = vector.broadcast %cst_1 : f32 to vector<2x192xf32>
    %3 = vector.extract_strided_slice %0 {offsets = [0, 0], sizes = [2, 192], strides = [1, 1]} : vector<2x194xf32> to vector<2x192xf32>
    %c0_2 = arith.constant 0 : index
    %c0_3 = arith.constant 0 : index
    %4 = memref.load %arg1[%c0_2, %c0_3] : memref<8x3xf32, #tpu.memory_space<smem>>
    %5 = vector.broadcast %4 : f32 to vector<2x192xf32>
    %6 = arith.mulf %3, %5 : vector<2x192xf32>
    %7 = arith.addf %2, %6 : vector<2x192xf32>
    %8 = vector.extract_strided_slice %0 {offsets = [0, 1], sizes = [2, 192], strides = [1, 1]} : vector<2x194xf32> to vector<2x192xf32>
    %c0_4 = arith.constant 0 : index
    %c1 = arith.constant 1 : index
    %9 = memref.load %arg1[%c0_4, %c1] : memref<8x3xf32, #tpu.memory_space<smem>>
    %10 = vector.broadcast %9 : f32 to vector<2x192xf32>
    %11 = arith.mulf %8, %10 : vector<2x192xf32>
    %12 = arith.addf %7, %11 : vector<2x192xf32>
    %13 = vector.extract_strided_slice %0 {offsets = [0, 2], sizes = [2, 192], strides = [1, 1]} : vector<2x194xf32> to vector<2x192xf32>
    %c0_5 = arith.constant 0 : index
    %c2 = arith.constant 2 : index
    %14 = memref.load %arg1[%c0_5, %c2] : memref<8x3xf32, #tpu.memory_space<smem>>
    %15 = vector.broadcast %14 : f32 to vector<2x192xf32>
    %16 = arith.mulf %13, %15 : vector<2x192xf32>
    %17 = arith.addf %12, %16 : vector<2x192xf32>
    %c0_6 = arith.constant 0 : index
    %18 = memref.load %arg2[%c0_6] : memref<8xf32, #tpu.memory_space<smem>>
    %19 = vector.broadcast %18 : f32 to vector<2x192xf32>
    %20 = arith.addf %17, %19 : vector<2x192xf32>
    %cst_7 = arith.constant 0.000000e+00 : f32
    %21 = vector.broadcast %cst_7 : f32 to vector<2x192xf32>
    %22 = arith.maximumf %20, %21 : vector<2x192xf32>
    %c0_8 = arith.constant 0 : index
    %c0_9 = arith.constant 0 : index
    %c0_10 = arith.constant 0 : index
    %23 = vector.load %arg3[%c0_8, %c0_9, %c0_10] : memref<8x192x512xf32, #tpu.memory_space<vmem>>, vector<1x192x512xf32>
    %24 = vector.shape_cast %23 : vector<1x192x512xf32> to vector<192x512xf32>
    %cst_11 = arith.constant dense<0.000000e+00> : vector<2x512xf32>
    %25 = tpu.matmul %22, %24, %cst_11 {dimension_numbers = #tpu.dot_dimension_numbers<[1], [0], [0], [1], [0, 0, 1, 1], [], []>} : vector<2x192xf32>, vector<192x512xf32>, vector<2x512xf32> -> vector<2x512xf32>
    %26 = arith.addf %1, %25 : vector<2x512xf32>
    %cst_12 = arith.constant 0.000000e+00 : f32
    %27 = vector.broadcast %cst_12 : f32 to vector<2x192xf32>
    %28 = vector.extract_strided_slice %0 {offsets = [0, 0], sizes = [2, 192], strides = [1, 1]} : vector<2x194xf32> to vector<2x192xf32>
    %c1_13 = arith.constant 1 : index
    %c0_14 = arith.constant 0 : index
    %29 = memref.load %arg1[%c1_13, %c0_14] : memref<8x3xf32, #tpu.memory_space<smem>>
    %30 = vector.broadcast %29 : f32 to vector<2x192xf32>
    %31 = arith.mulf %28, %30 : vector<2x192xf32>
    %32 = arith.addf %27, %31 : vector<2x192xf32>
    %33 = vector.extract_strided_slice %0 {offsets = [0, 1], sizes = [2, 192], strides = [1, 1]} : vector<2x194xf32> to vector<2x192xf32>
    %c1_15 = arith.constant 1 : index
    %c1_16 = arith.constant 1 : index
    %34 = memref.load %arg1[%c1_15, %c1_16] : memref<8x3xf32, #tpu.memory_space<smem>>
    %35 = vector.broadcast %34 : f32 to vector<2x192xf32>
    %36 = arith.mulf %33, %35 : vector<2x192xf32>
    %37 = arith.addf %32, %36 : vector<2x192xf32>
    %38 = vector.extract_strided_slice %0 {offsets = [0, 2], sizes = [2, 192], strides = [1, 1]} : vector<2x194xf32> to vector<2x192xf32>
    %c1_17 = arith.constant 1 : index
    %c2_18 = arith.constant 2 : index
    %39 = memref.load %arg1[%c1_17, %c2_18] : memref<8x3xf32, #tpu.memory_space<smem>>
    %40 = vector.broadcast %39 : f32 to vector<2x192xf32>
    %41 = arith.mulf %38, %40 : vector<2x192xf32>
    %42 = arith.addf %37, %41 : vector<2x192xf32>
    %c1_19 = arith.constant 1 : index
    %43 = memref.load %arg2[%c1_19] : memref<8xf32, #tpu.memory_space<smem>>
    %44 = vector.broadcast %43 : f32 to vector<2x192xf32>
    %45 = arith.addf %42, %44 : vector<2x192xf32>
    %cst_20 = arith.constant 0.000000e+00 : f32
    %46 = vector.broadcast %cst_20 : f32 to vector<2x192xf32>
    %47 = arith.maximumf %45, %46 : vector<2x192xf32>
    %c1_21 = arith.constant 1 : index
    %c0_22 = arith.constant 0 : index
    %c0_23 = arith.constant 0 : index
    %48 = vector.load %arg3[%c1_21, %c0_22, %c0_23] : memref<8x192x512xf32, #tpu.memory_space<vmem>>, vector<1x192x512xf32>
    %49 = vector.shape_cast %48 : vector<1x192x512xf32> to vector<192x512xf32>
    %cst_24 = arith.constant dense<0.000000e+00> : vector<2x512xf32>
    %50 = tpu.matmul %47, %49, %cst_24 {dimension_numbers = #tpu.dot_dimension_numbers<[1], [0], [0], [1], [0, 0, 1, 1], [], []>} : vector<2x192xf32>, vector<192x512xf32>, vector<2x512xf32> -> vector<2x512xf32>
    %51 = arith.addf %26, %50 : vector<2x512xf32>
    %cst_25 = arith.constant 0.000000e+00 : f32
    %52 = vector.broadcast %cst_25 : f32 to vector<2x192xf32>
    %53 = vector.extract_strided_slice %0 {offsets = [0, 0], sizes = [2, 192], strides = [1, 1]} : vector<2x194xf32> to vector<2x192xf32>
    %c2_26 = arith.constant 2 : index
    %c0_27 = arith.constant 0 : index
    %54 = memref.load %arg1[%c2_26, %c0_27] : memref<8x3xf32, #tpu.memory_space<smem>>
    %55 = vector.broadcast %54 : f32 to vector<2x192xf32>
    %56 = arith.mulf %53, %55 : vector<2x192xf32>
    %57 = arith.addf %52, %56 : vector<2x192xf32>
    %58 = vector.extract_strided_slice %0 {offsets = [0, 1], sizes = [2, 192], strides = [1, 1]} : vector<2x194xf32> to vector<2x192xf32>
    %c2_28 = arith.constant 2 : index
    %c1_29 = arith.constant 1 : index
    %59 = memref.load %arg1[%c2_28, %c1_29] : memref<8x3xf32, #tpu.memory_space<smem>>
    %60 = vector.broadcast %59 : f32 to vector<2x192xf32>
    %61 = arith.mulf %58, %60 : vector<2x192xf32>
    %62 = arith.addf %57, %61 : vector<2x192xf32>
    %63 = vector.extract_strided_slice %0 {offsets = [0, 2], sizes = [2, 192], strides = [1, 1]} : vector<2x194xf32> to vector<2x192xf32>
    %c2_30 = arith.constant 2 : index
    %c2_31 = arith.constant 2 : index
    %64 = memref.load %arg1[%c2_30, %c2_31] : memref<8x3xf32, #tpu.memory_space<smem>>
    %65 = vector.broadcast %64 : f32 to vector<2x192xf32>
    %66 = arith.mulf %63, %65 : vector<2x192xf32>
    %67 = arith.addf %62, %66 : vector<2x192xf32>
    %c2_32 = arith.constant 2 : index
    %68 = memref.load %arg2[%c2_32] : memref<8xf32, #tpu.memory_space<smem>>
    %69 = vector.broadcast %68 : f32 to vector<2x192xf32>
    %70 = arith.addf %67, %69 : vector<2x192xf32>
    %cst_33 = arith.constant 0.000000e+00 : f32
    %71 = vector.broadcast %cst_33 : f32 to vector<2x192xf32>
    %72 = arith.maximumf %70, %71 : vector<2x192xf32>
    %c2_34 = arith.constant 2 : index
    %c0_35 = arith.constant 0 : index
    %c0_36 = arith.constant 0 : index
    %73 = vector.load %arg3[%c2_34, %c0_35, %c0_36] : memref<8x192x512xf32, #tpu.memory_space<vmem>>, vector<1x192x512xf32>
    %74 = vector.shape_cast %73 : vector<1x192x512xf32> to vector<192x512xf32>
    %cst_37 = arith.constant dense<0.000000e+00> : vector<2x512xf32>
    %75 = tpu.matmul %72, %74, %cst_37 {dimension_numbers = #tpu.dot_dimension_numbers<[1], [0], [0], [1], [0, 0, 1, 1], [], []>} : vector<2x192xf32>, vector<192x512xf32>, vector<2x512xf32> -> vector<2x512xf32>
    %76 = arith.addf %51, %75 : vector<2x512xf32>
    %cst_38 = arith.constant 0.000000e+00 : f32
    %77 = vector.broadcast %cst_38 : f32 to vector<2x192xf32>
    %78 = vector.extract_strided_slice %0 {offsets = [0, 0], sizes = [2, 192], strides = [1, 1]} : vector<2x194xf32> to vector<2x192xf32>
    %c3 = arith.constant 3 : index
    %c0_39 = arith.constant 0 : index
    %79 = memref.load %arg1[%c3, %c0_39] : memref<8x3xf32, #tpu.memory_space<smem>>
    %80 = vector.broadcast %79 : f32 to vector<2x192xf32>
    %81 = arith.mulf %78, %80 : vector<2x192xf32>
    %82 = arith.addf %77, %81 : vector<2x192xf32>
    %83 = vector.extract_strided_slice %0 {offsets = [0, 1], sizes = [2, 192], strides = [1, 1]} : vector<2x194xf32> to vector<2x192xf32>
    %c3_40 = arith.constant 3 : index
    %c1_41 = arith.constant 1 : index
    %84 = memref.load %arg1[%c3_40, %c1_41] : memref<8x3xf32, #tpu.memory_space<smem>>
    %85 = vector.broadcast %84 : f32 to vector<2x192xf32>
    %86 = arith.mulf %83, %85 : vector<2x192xf32>
    %87 = arith.addf %82, %86 : vector<2x192xf32>
    %88 = vector.extract_strided_slice %0 {offsets = [0, 2], sizes = [2, 192], strides = [1, 1]} : vector<2x194xf32> to vector<2x192xf32>
    %c3_42 = arith.constant 3 : index
    %c2_43 = arith.constant 2 : index
    %89 = memref.load %arg1[%c3_42, %c2_43] : memref<8x3xf32, #tpu.memory_space<smem>>
    %90 = vector.broadcast %89 : f32 to vector<2x192xf32>
    %91 = arith.mulf %88, %90 : vector<2x192xf32>
    %92 = arith.addf %87, %91 : vector<2x192xf32>
    %c3_44 = arith.constant 3 : index
    %93 = memref.load %arg2[%c3_44] : memref<8xf32, #tpu.memory_space<smem>>
    %94 = vector.broadcast %93 : f32 to vector<2x192xf32>
    %95 = arith.addf %92, %94 : vector<2x192xf32>
    %cst_45 = arith.constant 0.000000e+00 : f32
    %96 = vector.broadcast %cst_45 : f32 to vector<2x192xf32>
    %97 = arith.maximumf %95, %96 : vector<2x192xf32>
    %c3_46 = arith.constant 3 : index
    %c0_47 = arith.constant 0 : index
    %c0_48 = arith.constant 0 : index
    %98 = vector.load %arg3[%c3_46, %c0_47, %c0_48] : memref<8x192x512xf32, #tpu.memory_space<vmem>>, vector<1x192x512xf32>
    %99 = vector.shape_cast %98 : vector<1x192x512xf32> to vector<192x512xf32>
    %cst_49 = arith.constant dense<0.000000e+00> : vector<2x512xf32>
    %100 = tpu.matmul %97, %99, %cst_49 {dimension_numbers = #tpu.dot_dimension_numbers<[1], [0], [0], [1], [0, 0, 1, 1], [], []>} : vector<2x192xf32>, vector<192x512xf32>, vector<2x512xf32> -> vector<2x512xf32>
    %101 = arith.addf %76, %100 : vector<2x512xf32>
    %cst_50 = arith.constant 0.000000e+00 : f32
    %102 = vector.broadcast %cst_50 : f32 to vector<2x192xf32>
    %103 = vector.extract_strided_slice %0 {offsets = [0, 0], sizes = [2, 192], strides = [1, 1]} : vector<2x194xf32> to vector<2x192xf32>
    %c4 = arith.constant 4 : index
    %c0_51 = arith.constant 0 : index
    %104 = memref.load %arg1[%c4, %c0_51] : memref<8x3xf32, #tpu.memory_space<smem>>
    %105 = vector.broadcast %104 : f32 to vector<2x192xf32>
    %106 = arith.mulf %103, %105 : vector<2x192xf32>
    %107 = arith.addf %102, %106 : vector<2x192xf32>
    %108 = vector.extract_strided_slice %0 {offsets = [0, 1], sizes = [2, 192], strides = [1, 1]} : vector<2x194xf32> to vector<2x192xf32>
    %c4_52 = arith.constant 4 : index
    %c1_53 = arith.constant 1 : index
    %109 = memref.load %arg1[%c4_52, %c1_53] : memref<8x3xf32, #tpu.memory_space<smem>>
    %110 = vector.broadcast %109 : f32 to vector<2x192xf32>
    %111 = arith.mulf %108, %110 : vector<2x192xf32>
    %112 = arith.addf %107, %111 : vector<2x192xf32>
    %113 = vector.extract_strided_slice %0 {offsets = [0, 2], sizes = [2, 192], strides = [1, 1]} : vector<2x194xf32> to vector<2x192xf32>
    %c4_54 = arith.constant 4 : index
    %c2_55 = arith.constant 2 : index
    %114 = memref.load %arg1[%c4_54, %c2_55] : memref<8x3xf32, #tpu.memory_space<smem>>
    %115 = vector.broadcast %114 : f32 to vector<2x192xf32>
    %116 = arith.mulf %113, %115 : vector<2x192xf32>
    %117 = arith.addf %112, %116 : vector<2x192xf32>
    %c4_56 = arith.constant 4 : index
    %118 = memref.load %arg2[%c4_56] : memref<8xf32, #tpu.memory_space<smem>>
    %119 = vector.broadcast %118 : f32 to vector<2x192xf32>
    %120 = arith.addf %117, %119 : vector<2x192xf32>
    %cst_57 = arith.constant 0.000000e+00 : f32
    %121 = vector.broadcast %cst_57 : f32 to vector<2x192xf32>
    %122 = arith.maximumf %120, %121 : vector<2x192xf32>
    %c4_58 = arith.constant 4 : index
    %c0_59 = arith.constant 0 : index
    %c0_60 = arith.constant 0 : index
    %123 = vector.load %arg3[%c4_58, %c0_59, %c0_60] : memref<8x192x512xf32, #tpu.memory_space<vmem>>, vector<1x192x512xf32>
    %124 = vector.shape_cast %123 : vector<1x192x512xf32> to vector<192x512xf32>
    %cst_61 = arith.constant dense<0.000000e+00> : vector<2x512xf32>
    %125 = tpu.matmul %122, %124, %cst_61 {dimension_numbers = #tpu.dot_dimension_numbers<[1], [0], [0], [1], [0, 0, 1, 1], [], []>} : vector<2x192xf32>, vector<192x512xf32>, vector<2x512xf32> -> vector<2x512xf32>
    %126 = arith.addf %101, %125 : vector<2x512xf32>
    %cst_62 = arith.constant 0.000000e+00 : f32
    %127 = vector.broadcast %cst_62 : f32 to vector<2x192xf32>
    %128 = vector.extract_strided_slice %0 {offsets = [0, 0], sizes = [2, 192], strides = [1, 1]} : vector<2x194xf32> to vector<2x192xf32>
    %c5 = arith.constant 5 : index
    %c0_63 = arith.constant 0 : index
    %129 = memref.load %arg1[%c5, %c0_63] : memref<8x3xf32, #tpu.memory_space<smem>>
    %130 = vector.broadcast %129 : f32 to vector<2x192xf32>
    %131 = arith.mulf %128, %130 : vector<2x192xf32>
    %132 = arith.addf %127, %131 : vector<2x192xf32>
    %133 = vector.extract_strided_slice %0 {offsets = [0, 1], sizes = [2, 192], strides = [1, 1]} : vector<2x194xf32> to vector<2x192xf32>
    %c5_64 = arith.constant 5 : index
    %c1_65 = arith.constant 1 : index
    %134 = memref.load %arg1[%c5_64, %c1_65] : memref<8x3xf32, #tpu.memory_space<smem>>
    %135 = vector.broadcast %134 : f32 to vector<2x192xf32>
    %136 = arith.mulf %133, %135 : vector<2x192xf32>
    %137 = arith.addf %132, %136 : vector<2x192xf32>
    %138 = vector.extract_strided_slice %0 {offsets = [0, 2], sizes = [2, 192], strides = [1, 1]} : vector<2x194xf32> to vector<2x192xf32>
    %c5_66 = arith.constant 5 : index
    %c2_67 = arith.constant 2 : index
    %139 = memref.load %arg1[%c5_66, %c2_67] : memref<8x3xf32, #tpu.memory_space<smem>>
    %140 = vector.broadcast %139 : f32 to vector<2x192xf32>
    %141 = arith.mulf %138, %140 : vector<2x192xf32>
    %142 = arith.addf %137, %141 : vector<2x192xf32>
    %c5_68 = arith.constant 5 : index
    %143 = memref.load %arg2[%c5_68] : memref<8xf32, #tpu.memory_space<smem>>
    %144 = vector.broadcast %143 : f32 to vector<2x192xf32>
    %145 = arith.addf %142, %144 : vector<2x192xf32>
    %cst_69 = arith.constant 0.000000e+00 : f32
    %146 = vector.broadcast %cst_69 : f32 to vector<2x192xf32>
    %147 = arith.maximumf %145, %146 : vector<2x192xf32>
    %c5_70 = arith.constant 5 : index
    %c0_71 = arith.constant 0 : index
    %c0_72 = arith.constant 0 : index
    %148 = vector.load %arg3[%c5_70, %c0_71, %c0_72] : memref<8x192x512xf32, #tpu.memory_space<vmem>>, vector<1x192x512xf32>
    %149 = vector.shape_cast %148 : vector<1x192x512xf32> to vector<192x512xf32>
    %cst_73 = arith.constant dense<0.000000e+00> : vector<2x512xf32>
    %150 = tpu.matmul %147, %149, %cst_73 {dimension_numbers = #tpu.dot_dimension_numbers<[1], [0], [0], [1], [0, 0, 1, 1], [], []>} : vector<2x192xf32>, vector<192x512xf32>, vector<2x512xf32> -> vector<2x512xf32>
    %151 = arith.addf %126, %150 : vector<2x512xf32>
    %cst_74 = arith.constant 0.000000e+00 : f32
    %152 = vector.broadcast %cst_74 : f32 to vector<2x192xf32>
    %153 = vector.extract_strided_slice %0 {offsets = [0, 0], sizes = [2, 192], strides = [1, 1]} : vector<2x194xf32> to vector<2x192xf32>
    %c6 = arith.constant 6 : index
    %c0_75 = arith.constant 0 : index
    %154 = memref.load %arg1[%c6, %c0_75] : memref<8x3xf32, #tpu.memory_space<smem>>
    %155 = vector.broadcast %154 : f32 to vector<2x192xf32>
    %156 = arith.mulf %153, %155 : vector<2x192xf32>
    %157 = arith.addf %152, %156 : vector<2x192xf32>
    %158 = vector.extract_strided_slice %0 {offsets = [0, 1], sizes = [2, 192], strides = [1, 1]} : vector<2x194xf32> to vector<2x192xf32>
    %c6_76 = arith.constant 6 : index
    %c1_77 = arith.constant 1 : index
    %159 = memref.load %arg1[%c6_76, %c1_77] : memref<8x3xf32, #tpu.memory_space<smem>>
    %160 = vector.broadcast %159 : f32 to vector<2x192xf32>
    %161 = arith.mulf %158, %160 : vector<2x192xf32>
    %162 = arith.addf %157, %161 : vector<2x192xf32>
    %163 = vector.extract_strided_slice %0 {offsets = [0, 2], sizes = [2, 192], strides = [1, 1]} : vector<2x194xf32> to vector<2x192xf32>
    %c6_78 = arith.constant 6 : index
    %c2_79 = arith.constant 2 : index
    %164 = memref.load %arg1[%c6_78, %c2_79] : memref<8x3xf32, #tpu.memory_space<smem>>
    %165 = vector.broadcast %164 : f32 to vector<2x192xf32>
    %166 = arith.mulf %163, %165 : vector<2x192xf32>
    %167 = arith.addf %162, %166 : vector<2x192xf32>
    %c6_80 = arith.constant 6 : index
    %168 = memref.load %arg2[%c6_80] : memref<8xf32, #tpu.memory_space<smem>>
    %169 = vector.broadcast %168 : f32 to vector<2x192xf32>
    %170 = arith.addf %167, %169 : vector<2x192xf32>
    %cst_81 = arith.constant 0.000000e+00 : f32
    %171 = vector.broadcast %cst_81 : f32 to vector<2x192xf32>
    %172 = arith.maximumf %170, %171 : vector<2x192xf32>
    %c6_82 = arith.constant 6 : index
    %c0_83 = arith.constant 0 : index
    %c0_84 = arith.constant 0 : index
    %173 = vector.load %arg3[%c6_82, %c0_83, %c0_84] : memref<8x192x512xf32, #tpu.memory_space<vmem>>, vector<1x192x512xf32>
    %174 = vector.shape_cast %173 : vector<1x192x512xf32> to vector<192x512xf32>
    %cst_85 = arith.constant dense<0.000000e+00> : vector<2x512xf32>
    %175 = tpu.matmul %172, %174, %cst_85 {dimension_numbers = #tpu.dot_dimension_numbers<[1], [0], [0], [1], [0, 0, 1, 1], [], []>} : vector<2x192xf32>, vector<192x512xf32>, vector<2x512xf32> -> vector<2x512xf32>
    %176 = arith.addf %151, %175 : vector<2x512xf32>
    %cst_86 = arith.constant 0.000000e+00 : f32
    %177 = vector.broadcast %cst_86 : f32 to vector<2x192xf32>
    %178 = vector.extract_strided_slice %0 {offsets = [0, 0], sizes = [2, 192], strides = [1, 1]} : vector<2x194xf32> to vector<2x192xf32>
    %c7 = arith.constant 7 : index
    %c0_87 = arith.constant 0 : index
    %179 = memref.load %arg1[%c7, %c0_87] : memref<8x3xf32, #tpu.memory_space<smem>>
    %180 = vector.broadcast %179 : f32 to vector<2x192xf32>
    %181 = arith.mulf %178, %180 : vector<2x192xf32>
    %182 = arith.addf %177, %181 : vector<2x192xf32>
    %183 = vector.extract_strided_slice %0 {offsets = [0, 1], sizes = [2, 192], strides = [1, 1]} : vector<2x194xf32> to vector<2x192xf32>
    %c7_88 = arith.constant 7 : index
    %c1_89 = arith.constant 1 : index
    %184 = memref.load %arg1[%c7_88, %c1_89] : memref<8x3xf32, #tpu.memory_space<smem>>
    %185 = vector.broadcast %184 : f32 to vector<2x192xf32>
    %186 = arith.mulf %183, %185 : vector<2x192xf32>
    %187 = arith.addf %182, %186 : vector<2x192xf32>
    %188 = vector.extract_strided_slice %0 {offsets = [0, 2], sizes = [2, 192], strides = [1, 1]} : vector<2x194xf32> to vector<2x192xf32>
    %c7_90 = arith.constant 7 : index
    %c2_91 = arith.constant 2 : index
    %189 = memref.load %arg1[%c7_90, %c2_91] : memref<8x3xf32, #tpu.memory_space<smem>>
    %190 = vector.broadcast %189 : f32 to vector<2x192xf32>
    %191 = arith.mulf %188, %190 : vector<2x192xf32>
    %192 = arith.addf %187, %191 : vector<2x192xf32>
    %c7_92 = arith.constant 7 : index
    %193 = memref.load %arg2[%c7_92] : memref<8xf32, #tpu.memory_space<smem>>
    %194 = vector.broadcast %193 : f32 to vector<2x192xf32>
    %195 = arith.addf %192, %194 : vector<2x192xf32>
    %cst_93 = arith.constant 0.000000e+00 : f32
    %196 = vector.broadcast %cst_93 : f32 to vector<2x192xf32>
    %197 = arith.maximumf %195, %196 : vector<2x192xf32>
    %c7_94 = arith.constant 7 : index
    %c0_95 = arith.constant 0 : index
    %c0_96 = arith.constant 0 : index
    %198 = vector.load %arg3[%c7_94, %c0_95, %c0_96] : memref<8x192x512xf32, #tpu.memory_space<vmem>>, vector<1x192x512xf32>
    %199 = vector.shape_cast %198 : vector<1x192x512xf32> to vector<192x512xf32>
    %cst_97 = arith.constant dense<0.000000e+00> : vector<2x512xf32>
    %200 = tpu.matmul %197, %199, %cst_97 {dimension_numbers = #tpu.dot_dimension_numbers<[1], [0], [0], [1], [0, 0, 1, 1], [], []>} : vector<2x192xf32>, vector<192x512xf32>, vector<2x512xf32> -> vector<2x512xf32>
    %201 = arith.addf %176, %200 : vector<2x512xf32>
    %c0_98 = arith.constant 0 : index
    %c0_99 = arith.constant 0 : index
    %202 = vector.load %arg4[%c0_98, %c0_99] : memref<1x512xf32, #tpu.memory_space<vmem>>, vector<1x512xf32>
    %203 = vector.broadcast %202 : vector<1x512xf32> to vector<2x512xf32>
    %204 = arith.addf %201, %203 : vector<2x512xf32>
    %cst_100 = arith.constant 3.000000e+00 : f32
    %205 = vector.broadcast %cst_100 : f32 to vector<2x512xf32>
    %206 = arith.addf %204, %205 : vector<2x512xf32>
    %cst_101 = arith.constant 0.000000e+00 : f32
    %cst_102 = arith.constant 6.000000e+00 : f32
    %207 = vector.broadcast %cst_101 : f32 to vector<2x512xf32>
    %208 = arith.maximumf %207, %206 : vector<2x512xf32>
    %209 = vector.broadcast %cst_102 : f32 to vector<2x512xf32>
    %210 = arith.minimumf %209, %208 : vector<2x512xf32>
    %211 = arith.mulf %204, %210 : vector<2x512xf32>
    %cst_103 = arith.constant 0.166666672 : f32
    %212 = vector.broadcast %cst_103 : f32 to vector<2x512xf32>
    %213 = arith.mulf %211, %212 : vector<2x512xf32>
    %c0_104 = arith.constant 0 : index
    %c0_105 = arith.constant 0 : index
    %214 = vector.load %arg11[%c0_104, %c0_105] : memref<4x32xf32, #tpu.memory_space<vmem>>, vector<4x32xf32>
    %215 = vector.extract_strided_slice %213 {offsets = [0, 0], sizes = [2, 128], strides = [1, 1]} : vector<2x512xf32> to vector<2x128xf32>
    %c0_106 = arith.constant 0 : index
    %c0_107 = arith.constant 0 : index
    %c0_108 = arith.constant 0 : index
    %216 = vector.load %arg5[%c0_106, %c0_107, %c0_108] : memref<4x128x96xf32, #tpu.memory_space<vmem>>, vector<1x128x96xf32>
    %217 = vector.shape_cast %216 : vector<1x128x96xf32> to vector<128x96xf32>
    %cst_109 = arith.constant dense<0.000000e+00> : vector<2x96xf32>
    %218 = tpu.matmul %215, %217, %cst_109 {dimension_numbers = #tpu.dot_dimension_numbers<[1], [0], [0], [1], [0, 0, 1, 1], [], []>} : vector<2x128xf32>, vector<128x96xf32>, vector<2x96xf32> -> vector<2x96xf32>
    %c0_110 = arith.constant 0 : index
    %c0_111 = arith.constant 0 : index
    %c0_112 = arith.constant 0 : index
    %219 = vector.load %arg6[%c0_110, %c0_111, %c0_112] : memref<4x1x96xf32, #tpu.memory_space<vmem>>, vector<1x1x96xf32>
    %220 = vector.shape_cast %219 : vector<1x1x96xf32> to vector<1x96xf32>
    %221 = vector.broadcast %220 : vector<1x96xf32> to vector<2x96xf32>
    %222 = arith.addf %218, %221 : vector<2x96xf32>
    %cst_113 = arith.constant 3.000000e+00 : f32
    %223 = vector.broadcast %cst_113 : f32 to vector<2x96xf32>
    %224 = arith.addf %222, %223 : vector<2x96xf32>
    %cst_114 = arith.constant 0.000000e+00 : f32
    %cst_115 = arith.constant 6.000000e+00 : f32
    %225 = vector.broadcast %cst_114 : f32 to vector<2x96xf32>
    %226 = arith.maximumf %225, %224 : vector<2x96xf32>
    %227 = vector.broadcast %cst_115 : f32 to vector<2x96xf32>
    %228 = arith.minimumf %227, %226 : vector<2x96xf32>
    %229 = arith.mulf %222, %228 : vector<2x96xf32>
    %cst_116 = arith.constant 0.166666672 : f32
    %230 = vector.broadcast %cst_116 : f32 to vector<2x96xf32>
    %231 = arith.mulf %229, %230 : vector<2x96xf32>
    %c0_117 = arith.constant 0 : index
    %c0_118 = arith.constant 0 : index
    %c0_119 = arith.constant 0 : index
    %232 = vector.load %arg7[%c0_117, %c0_118, %c0_119] : memref<4x96x64xf32, #tpu.memory_space<vmem>>, vector<1x96x64xf32>
    %233 = vector.shape_cast %232 : vector<1x96x64xf32> to vector<96x64xf32>
    %cst_120 = arith.constant dense<0.000000e+00> : vector<2x64xf32>
    %234 = tpu.matmul %231, %233, %cst_120 {dimension_numbers = #tpu.dot_dimension_numbers<[1], [0], [0], [1], [0, 0, 1, 1], [], []>} : vector<2x96xf32>, vector<96x64xf32>, vector<2x64xf32> -> vector<2x64xf32>
    %c0_121 = arith.constant 0 : index
    %c0_122 = arith.constant 0 : index
    %c0_123 = arith.constant 0 : index
    %235 = vector.load %arg8[%c0_121, %c0_122, %c0_123] : memref<4x1x64xf32, #tpu.memory_space<vmem>>, vector<1x1x64xf32>
    %236 = vector.shape_cast %235 : vector<1x1x64xf32> to vector<1x64xf32>
    %237 = vector.broadcast %236 : vector<1x64xf32> to vector<2x64xf32>
    %238 = arith.addf %234, %237 : vector<2x64xf32>
    %cst_124 = arith.constant 3.000000e+00 : f32
    %239 = vector.broadcast %cst_124 : f32 to vector<2x64xf32>
    %240 = arith.addf %238, %239 : vector<2x64xf32>
    %cst_125 = arith.constant 0.000000e+00 : f32
    %cst_126 = arith.constant 6.000000e+00 : f32
    %241 = vector.broadcast %cst_125 : f32 to vector<2x64xf32>
    %242 = arith.maximumf %241, %240 : vector<2x64xf32>
    %243 = vector.broadcast %cst_126 : f32 to vector<2x64xf32>
    %244 = arith.minimumf %243, %242 : vector<2x64xf32>
    %245 = arith.mulf %238, %244 : vector<2x64xf32>
    %cst_127 = arith.constant 0.166666672 : f32
    %246 = vector.broadcast %cst_127 : f32 to vector<2x64xf32>
    %247 = arith.mulf %245, %246 : vector<2x64xf32>
    %c0_128 = arith.constant 0 : index
    %c0_129 = arith.constant 0 : index
    %c0_130 = arith.constant 0 : index
    %248 = vector.load %arg9[%c0_128, %c0_129, %c0_130] : memref<4x64x32xf32, #tpu.memory_space<vmem>>, vector<1x64x32xf32>
    %249 = vector.shape_cast %248 : vector<1x64x32xf32> to vector<64x32xf32>
    %cst_131 = arith.constant dense<0.000000e+00> : vector<2x32xf32>
    %250 = tpu.matmul %247, %249, %cst_131 {dimension_numbers = #tpu.dot_dimension_numbers<[1], [0], [0], [1], [0, 0, 1, 1], [], []>} : vector<2x64xf32>, vector<64x32xf32>, vector<2x32xf32> -> vector<2x32xf32>
    %c0_132 = arith.constant 0 : index
    %c0_133 = arith.constant 0 : index
    %c0_134 = arith.constant 0 : index
    %251 = vector.load %arg10[%c0_132, %c0_133, %c0_134] : memref<4x1x32xf32, #tpu.memory_space<vmem>>, vector<1x1x32xf32>
    %252 = vector.shape_cast %251 : vector<1x1x32xf32> to vector<1x32xf32>
    %253 = vector.broadcast %252 : vector<1x32xf32> to vector<2x32xf32>
    %254 = arith.addf %250, %253 : vector<2x32xf32>
    %cst_135 = arith.constant 3.000000e+00 : f32
    %255 = vector.broadcast %cst_135 : f32 to vector<2x32xf32>
    %256 = arith.addf %254, %255 : vector<2x32xf32>
    %cst_136 = arith.constant 0.000000e+00 : f32
    %cst_137 = arith.constant 6.000000e+00 : f32
    %257 = vector.broadcast %cst_136 : f32 to vector<2x32xf32>
    %258 = arith.maximumf %257, %256 : vector<2x32xf32>
    %259 = vector.broadcast %cst_137 : f32 to vector<2x32xf32>
    %260 = arith.minimumf %259, %258 : vector<2x32xf32>
    %261 = arith.mulf %254, %260 : vector<2x32xf32>
    %cst_138 = arith.constant 0.166666672 : f32
    %262 = vector.broadcast %cst_138 : f32 to vector<2x32xf32>
    %263 = arith.mulf %261, %262 : vector<2x32xf32>
    %264 = vector.extract_strided_slice %214 {offsets = [0, 0], sizes = [1, 32], strides = [1, 1]} : vector<4x32xf32> to vector<1x32xf32>
    %265 = vector.broadcast %264 : vector<1x32xf32> to vector<2x32xf32>
    %266 = arith.mulf %263, %265 : vector<2x32xf32>
    %cst_139 = arith.constant dense<0.000000e+00> : vector<2xf32>
    %267 = vector.multi_reduction <add>, %266, %cst_139 [1] : vector<2x32xf32> to vector<2xf32>
    %268 = vector.shape_cast %267 : vector<2xf32> to vector<2x1xf32>
    %c0_140 = arith.constant 0 : index
    %269 = memref.load %arg12[%c0_140] : memref<4xf32, #tpu.memory_space<smem>>
    %270 = vector.broadcast %269 : f32 to vector<2x1xf32>
    %271 = arith.addf %268, %270 : vector<2x1xf32>
    %cst_141 = arith.constant 0.000000e+00 : f32
    %272 = vector.broadcast %cst_141 : f32 to vector<2x1xf32>
    %273 = arith.maximumf %271, %272 : vector<2x1xf32>
    %c0_142 = arith.constant 0 : index
    %c0_143 = arith.constant 0 : index
    %274 = vector.load %arg13[%c0_142, %c0_143] : memref<2x4xf32, #tpu.memory_space<vmem>>, vector<2x1xf32>
    tpu.vector_store %arg13[%c0_142, %c0_143], %273 {strides = array<i32>} : memref<2x4xf32, #tpu.memory_space<vmem>>, vector<2x1xf32>,
    %275 = vector.extract_strided_slice %213 {offsets = [0, 128], sizes = [2, 128], strides = [1, 1]} : vector<2x512xf32> to vector<2x128xf32>
    %c1_144 = arith.constant 1 : index
    %c0_145 = arith.constant 0 : index
    %c0_146 = arith.constant 0 : index
    %276 = vector.load %arg5[%c1_144, %c0_145, %c0_146] : memref<4x128x96xf32, #tpu.memory_space<vmem>>, vector<1x128x96xf32>
    %277 = vector.shape_cast %276 : vector<1x128x96xf32> to vector<128x96xf32>
    %cst_147 = arith.constant dense<0.000000e+00> : vector<2x96xf32>
    %278 = tpu.matmul %275, %277, %cst_147 {dimension_numbers = #tpu.dot_dimension_numbers<[1], [0], [0], [1], [0, 0, 1, 1], [], []>} : vector<2x128xf32>, vector<128x96xf32>, vector<2x96xf32> -> vector<2x96xf32>
    %c1_148 = arith.constant 1 : index
    %c0_149 = arith.constant 0 : index
    %c0_150 = arith.constant 0 : index
    %279 = vector.load %arg6[%c1_148, %c0_149, %c0_150] : memref<4x1x96xf32, #tpu.memory_space<vmem>>, vector<1x1x96xf32>
    %280 = vector.shape_cast %279 : vector<1x1x96xf32> to vector<1x96xf32>
    %281 = vector.broadcast %280 : vector<1x96xf32> to vector<2x96xf32>
    %282 = arith.addf %278, %281 : vector<2x96xf32>
    %cst_151 = arith.constant 3.000000e+00 : f32
    %283 = vector.broadcast %cst_151 : f32 to vector<2x96xf32>
    %284 = arith.addf %282, %283 : vector<2x96xf32>
    %cst_152 = arith.constant 0.000000e+00 : f32
    %cst_153 = arith.constant 6.000000e+00 : f32
    %285 = vector.broadcast %cst_152 : f32 to vector<2x96xf32>
    %286 = arith.maximumf %285, %284 : vector<2x96xf32>
    %287 = vector.broadcast %cst_153 : f32 to vector<2x96xf32>
    %288 = arith.minimumf %287, %286 : vector<2x96xf32>
    %289 = arith.mulf %282, %288 : vector<2x96xf32>
    %cst_154 = arith.constant 0.166666672 : f32
    %290 = vector.broadcast %cst_154 : f32 to vector<2x96xf32>
    %291 = arith.mulf %289, %290 : vector<2x96xf32>
    %c1_155 = arith.constant 1 : index
    %c0_156 = arith.constant 0 : index
    %c0_157 = arith.constant 0 : index
    %292 = vector.load %arg7[%c1_155, %c0_156, %c0_157] : memref<4x96x64xf32, #tpu.memory_space<vmem>>, vector<1x96x64xf32>
    %293 = vector.shape_cast %292 : vector<1x96x64xf32> to vector<96x64xf32>
    %cst_158 = arith.constant dense<0.000000e+00> : vector<2x64xf32>
    %294 = tpu.matmul %291, %293, %cst_158 {dimension_numbers = #tpu.dot_dimension_numbers<[1], [0], [0], [1], [0, 0, 1, 1], [], []>} : vector<2x96xf32>, vector<96x64xf32>, vector<2x64xf32> -> vector<2x64xf32>
    %c1_159 = arith.constant 1 : index
    %c0_160 = arith.constant 0 : index
    %c0_161 = arith.constant 0 : index
    %295 = vector.load %arg8[%c1_159, %c0_160, %c0_161] : memref<4x1x64xf32, #tpu.memory_space<vmem>>, vector<1x1x64xf32>
    %296 = vector.shape_cast %295 : vector<1x1x64xf32> to vector<1x64xf32>
    %297 = vector.broadcast %296 : vector<1x64xf32> to vector<2x64xf32>
    %298 = arith.addf %294, %297 : vector<2x64xf32>
    %cst_162 = arith.constant 3.000000e+00 : f32
    %299 = vector.broadcast %cst_162 : f32 to vector<2x64xf32>
    %300 = arith.addf %298, %299 : vector<2x64xf32>
    %cst_163 = arith.constant 0.000000e+00 : f32
    %cst_164 = arith.constant 6.000000e+00 : f32
    %301 = vector.broadcast %cst_163 : f32 to vector<2x64xf32>
    %302 = arith.maximumf %301, %300 : vector<2x64xf32>
    %303 = vector.broadcast %cst_164 : f32 to vector<2x64xf32>
    %304 = arith.minimumf %303, %302 : vector<2x64xf32>
    %305 = arith.mulf %298, %304 : vector<2x64xf32>
    %cst_165 = arith.constant 0.166666672 : f32
    %306 = vector.broadcast %cst_165 : f32 to vector<2x64xf32>
    %307 = arith.mulf %305, %306 : vector<2x64xf32>
    %c1_166 = arith.constant 1 : index
    %c0_167 = arith.constant 0 : index
    %c0_168 = arith.constant 0 : index
    %308 = vector.load %arg9[%c1_166, %c0_167, %c0_168] : memref<4x64x32xf32, #tpu.memory_space<vmem>>, vector<1x64x32xf32>
    %309 = vector.shape_cast %308 : vector<1x64x32xf32> to vector<64x32xf32>
    %cst_169 = arith.constant dense<0.000000e+00> : vector<2x32xf32>
    %310 = tpu.matmul %307, %309, %cst_169 {dimension_numbers = #tpu.dot_dimension_numbers<[1], [0], [0], [1], [0, 0, 1, 1], [], []>} : vector<2x64xf32>, vector<64x32xf32>, vector<2x32xf32> -> vector<2x32xf32>
    %c1_170 = arith.constant 1 : index
    %c0_171 = arith.constant 0 : index
    %c0_172 = arith.constant 0 : index
    %311 = vector.load %arg10[%c1_170, %c0_171, %c0_172] : memref<4x1x32xf32, #tpu.memory_space<vmem>>, vector<1x1x32xf32>
    %312 = vector.shape_cast %311 : vector<1x1x32xf32> to vector<1x32xf32>
    %313 = vector.broadcast %312 : vector<1x32xf32> to vector<2x32xf32>
    %314 = arith.addf %310, %313 : vector<2x32xf32>
    %cst_173 = arith.constant 3.000000e+00 : f32
    %315 = vector.broadcast %cst_173 : f32 to vector<2x32xf32>
    %316 = arith.addf %314, %315 : vector<2x32xf32>
    %cst_174 = arith.constant 0.000000e+00 : f32
    %cst_175 = arith.constant 6.000000e+00 : f32
    %317 = vector.broadcast %cst_174 : f32 to vector<2x32xf32>
    %318 = arith.maximumf %317, %316 : vector<2x32xf32>
    %319 = vector.broadcast %cst_175 : f32 to vector<2x32xf32>
    %320 = arith.minimumf %319, %318 : vector<2x32xf32>
    %321 = arith.mulf %314, %320 : vector<2x32xf32>
    %cst_176 = arith.constant 0.166666672 : f32
    %322 = vector.broadcast %cst_176 : f32 to vector<2x32xf32>
    %323 = arith.mulf %321, %322 : vector<2x32xf32>
    %324 = vector.extract_strided_slice %214 {offsets = [1, 0], sizes = [1, 32], strides = [1, 1]} : vector<4x32xf32> to vector<1x32xf32>
    %325 = vector.broadcast %324 : vector<1x32xf32> to vector<2x32xf32>
    %326 = arith.mulf %323, %325 : vector<2x32xf32>
    %cst_177 = arith.constant dense<0.000000e+00> : vector<2xf32>
    %327 = vector.multi_reduction <add>, %326, %cst_177 [1] : vector<2x32xf32> to vector<2xf32>
    %328 = vector.shape_cast %327 : vector<2xf32> to vector<2x1xf32>
    %c1_178 = arith.constant 1 : index
    %329 = memref.load %arg12[%c1_178] : memref<4xf32, #tpu.memory_space<smem>>
    %330 = vector.broadcast %329 : f32 to vector<2x1xf32>
    %331 = arith.addf %328, %330 : vector<2x1xf32>
    %cst_179 = arith.constant 0.000000e+00 : f32
    %332 = vector.broadcast %cst_179 : f32 to vector<2x1xf32>
    %333 = arith.maximumf %331, %332 : vector<2x1xf32>
    %c0_180 = arith.constant 0 : index
    %c1_181 = arith.constant 1 : index
    %334 = vector.load %arg13[%c0_180, %c1_181] : memref<2x4xf32, #tpu.memory_space<vmem>>, vector<2x1xf32>
    tpu.vector_store %arg13[%c0_180, %c1_181], %333 {strides = array<i32>} : memref<2x4xf32, #tpu.memory_space<vmem>>, vector<2x1xf32>,
    %335 = vector.extract_strided_slice %213 {offsets = [0, 256], sizes = [2, 128], strides = [1, 1]} : vector<2x512xf32> to vector<2x128xf32>
    %c2_182 = arith.constant 2 : index
    %c0_183 = arith.constant 0 : index
    %c0_184 = arith.constant 0 : index
    %336 = vector.load %arg5[%c2_182, %c0_183, %c0_184] : memref<4x128x96xf32, #tpu.memory_space<vmem>>, vector<1x128x96xf32>
    %337 = vector.shape_cast %336 : vector<1x128x96xf32> to vector<128x96xf32>
    %cst_185 = arith.constant dense<0.000000e+00> : vector<2x96xf32>
    %338 = tpu.matmul %335, %337, %cst_185 {dimension_numbers = #tpu.dot_dimension_numbers<[1], [0], [0], [1], [0, 0, 1, 1], [], []>} : vector<2x128xf32>, vector<128x96xf32>, vector<2x96xf32> -> vector<2x96xf32>
    %c2_186 = arith.constant 2 : index
    %c0_187 = arith.constant 0 : index
    %c0_188 = arith.constant 0 : index
    %339 = vector.load %arg6[%c2_186, %c0_187, %c0_188] : memref<4x1x96xf32, #tpu.memory_space<vmem>>, vector<1x1x96xf32>
    %340 = vector.shape_cast %339 : vector<1x1x96xf32> to vector<1x96xf32>
    %341 = vector.broadcast %340 : vector<1x96xf32> to vector<2x96xf32>
    %342 = arith.addf %338, %341 : vector<2x96xf32>
    %cst_189 = arith.constant 3.000000e+00 : f32
    %343 = vector.broadcast %cst_189 : f32 to vector<2x96xf32>
    %344 = arith.addf %342, %343 : vector<2x96xf32>
    %cst_190 = arith.constant 0.000000e+00 : f32
    %cst_191 = arith.constant 6.000000e+00 : f32
    %345 = vector.broadcast %cst_190 : f32 to vector<2x96xf32>
    %346 = arith.maximumf %345, %344 : vector<2x96xf32>
    %347 = vector.broadcast %cst_191 : f32 to vector<2x96xf32>
    %348 = arith.minimumf %347, %346 : vector<2x96xf32>
    %349 = arith.mulf %342, %348 : vector<2x96xf32>
    %cst_192 = arith.constant 0.166666672 : f32
    %350 = vector.broadcast %cst_192 : f32 to vector<2x96xf32>
    %351 = arith.mulf %349, %350 : vector<2x96xf32>
    %c2_193 = arith.constant 2 : index
    %c0_194 = arith.constant 0 : index
    %c0_195 = arith.constant 0 : index
    %352 = vector.load %arg7[%c2_193, %c0_194, %c0_195] : memref<4x96x64xf32, #tpu.memory_space<vmem>>, vector<1x96x64xf32>
    %353 = vector.shape_cast %352 : vector<1x96x64xf32> to vector<96x64xf32>
    %cst_196 = arith.constant dense<0.000000e+00> : vector<2x64xf32>
    %354 = tpu.matmul %351, %353, %cst_196 {dimension_numbers = #tpu.dot_dimension_numbers<[1], [0], [0], [1], [0, 0, 1, 1], [], []>} : vector<2x96xf32>, vector<96x64xf32>, vector<2x64xf32> -> vector<2x64xf32>
    %c2_197 = arith.constant 2 : index
    %c0_198 = arith.constant 0 : index
    %c0_199 = arith.constant 0 : index
    %355 = vector.load %arg8[%c2_197, %c0_198, %c0_199] : memref<4x1x64xf32, #tpu.memory_space<vmem>>, vector<1x1x64xf32>
    %356 = vector.shape_cast %355 : vector<1x1x64xf32> to vector<1x64xf32>
    %357 = vector.broadcast %356 : vector<1x64xf32> to vector<2x64xf32>
    %358 = arith.addf %354, %357 : vector<2x64xf32>
    %cst_200 = arith.constant 3.000000e+00 : f32
    %359 = vector.broadcast %cst_200 : f32 to vector<2x64xf32>
    %360 = arith.addf %358, %359 : vector<2x64xf32>
    %cst_201 = arith.constant 0.000000e+00 : f32
    %cst_202 = arith.constant 6.000000e+00 : f32
    %361 = vector.broadcast %cst_201 : f32 to vector<2x64xf32>
    %362 = arith.maximumf %361, %360 : vector<2x64xf32>
    %363 = vector.broadcast %cst_202 : f32 to vector<2x64xf32>
    %364 = arith.minimumf %363, %362 : vector<2x64xf32>
    %365 = arith.mulf %358, %364 : vector<2x64xf32>
    %cst_203 = arith.constant 0.166666672 : f32
    %366 = vector.broadcast %cst_203 : f32 to vector<2x64xf32>
    %367 = arith.mulf %365, %366 : vector<2x64xf32>
    %c2_204 = arith.constant 2 : index
    %c0_205 = arith.constant 0 : index
    %c0_206 = arith.constant 0 : index
    %368 = vector.load %arg9[%c2_204, %c0_205, %c0_206] : memref<4x64x32xf32, #tpu.memory_space<vmem>>, vector<1x64x32xf32>
    %369 = vector.shape_cast %368 : vector<1x64x32xf32> to vector<64x32xf32>
    %cst_207 = arith.constant dense<0.000000e+00> : vector<2x32xf32>
    %370 = tpu.matmul %367, %369, %cst_207 {dimension_numbers = #tpu.dot_dimension_numbers<[1], [0], [0], [1], [0, 0, 1, 1], [], []>} : vector<2x64xf32>, vector<64x32xf32>, vector<2x32xf32> -> vector<2x32xf32>
    %c2_208 = arith.constant 2 : index
    %c0_209 = arith.constant 0 : index
    %c0_210 = arith.constant 0 : index
    %371 = vector.load %arg10[%c2_208, %c0_209, %c0_210] : memref<4x1x32xf32, #tpu.memory_space<vmem>>, vector<1x1x32xf32>
    %372 = vector.shape_cast %371 : vector<1x1x32xf32> to vector<1x32xf32>
    %373 = vector.broadcast %372 : vector<1x32xf32> to vector<2x32xf32>
    %374 = arith.addf %370, %373 : vector<2x32xf32>
    %cst_211 = arith.constant 3.000000e+00 : f32
    %375 = vector.broadcast %cst_211 : f32 to vector<2x32xf32>
    %376 = arith.addf %374, %375 : vector<2x32xf32>
    %cst_212 = arith.constant 0.000000e+00 : f32
    %cst_213 = arith.constant 6.000000e+00 : f32
    %377 = vector.broadcast %cst_212 : f32 to vector<2x32xf32>
    %378 = arith.maximumf %377, %376 : vector<2x32xf32>
    %379 = vector.broadcast %cst_213 : f32 to vector<2x32xf32>
    %380 = arith.minimumf %379, %378 : vector<2x32xf32>
    %381 = arith.mulf %374, %380 : vector<2x32xf32>
    %cst_214 = arith.constant 0.166666672 : f32
    %382 = vector.broadcast %cst_214 : f32 to vector<2x32xf32>
    %383 = arith.mulf %381, %382 : vector<2x32xf32>
    %384 = vector.extract_strided_slice %214 {offsets = [2, 0], sizes = [1, 32], strides = [1, 1]} : vector<4x32xf32> to vector<1x32xf32>
    %385 = vector.broadcast %384 : vector<1x32xf32> to vector<2x32xf32>
    %386 = arith.mulf %383, %385 : vector<2x32xf32>
    %cst_215 = arith.constant dense<0.000000e+00> : vector<2xf32>
    %387 = vector.multi_reduction <add>, %386, %cst_215 [1] : vector<2x32xf32> to vector<2xf32>
    %388 = vector.shape_cast %387 : vector<2xf32> to vector<2x1xf32>
    %c2_216 = arith.constant 2 : index
    %389 = memref.load %arg12[%c2_216] : memref<4xf32, #tpu.memory_space<smem>>
    %390 = vector.broadcast %389 : f32 to vector<2x1xf32>
    %391 = arith.addf %388, %390 : vector<2x1xf32>
    %cst_217 = arith.constant 0.000000e+00 : f32
    %392 = vector.broadcast %cst_217 : f32 to vector<2x1xf32>
    %393 = arith.maximumf %391, %392 : vector<2x1xf32>
    %c0_218 = arith.constant 0 : index
    %c2_219 = arith.constant 2 : index
    %394 = vector.load %arg13[%c0_218, %c2_219] : memref<2x4xf32, #tpu.memory_space<vmem>>, vector<2x1xf32>
    tpu.vector_store %arg13[%c0_218, %c2_219], %393 {strides = array<i32>} : memref<2x4xf32, #tpu.memory_space<vmem>>, vector<2x1xf32>,
    %395 = vector.extract_strided_slice %213 {offsets = [0, 384], sizes = [2, 128], strides = [1, 1]} : vector<2x512xf32> to vector<2x128xf32>
    %c3_220 = arith.constant 3 : index
    %c0_221 = arith.constant 0 : index
    %c0_222 = arith.constant 0 : index
    %396 = vector.load %arg5[%c3_220, %c0_221, %c0_222] : memref<4x128x96xf32, #tpu.memory_space<vmem>>, vector<1x128x96xf32>
    %397 = vector.shape_cast %396 : vector<1x128x96xf32> to vector<128x96xf32>
    %cst_223 = arith.constant dense<0.000000e+00> : vector<2x96xf32>
    %398 = tpu.matmul %395, %397, %cst_223 {dimension_numbers = #tpu.dot_dimension_numbers<[1], [0], [0], [1], [0, 0, 1, 1], [], []>} : vector<2x128xf32>, vector<128x96xf32>, vector<2x96xf32> -> vector<2x96xf32>
    %c3_224 = arith.constant 3 : index
    %c0_225 = arith.constant 0 : index
    %c0_226 = arith.constant 0 : index
    %399 = vector.load %arg6[%c3_224, %c0_225, %c0_226] : memref<4x1x96xf32, #tpu.memory_space<vmem>>, vector<1x1x96xf32>
    %400 = vector.shape_cast %399 : vector<1x1x96xf32> to vector<1x96xf32>
    %401 = vector.broadcast %400 : vector<1x96xf32> to vector<2x96xf32>
    %402 = arith.addf %398, %401 : vector<2x96xf32>
    %cst_227 = arith.constant 3.000000e+00 : f32
    %403 = vector.broadcast %cst_227 : f32 to vector<2x96xf32>
    %404 = arith.addf %402, %403 : vector<2x96xf32>
    %cst_228 = arith.constant 0.000000e+00 : f32
    %cst_229 = arith.constant 6.000000e+00 : f32
    %405 = vector.broadcast %cst_228 : f32 to vector<2x96xf32>
    %406 = arith.maximumf %405, %404 : vector<2x96xf32>
    %407 = vector.broadcast %cst_229 : f32 to vector<2x96xf32>
    %408 = arith.minimumf %407, %406 : vector<2x96xf32>
    %409 = arith.mulf %402, %408 : vector<2x96xf32>
    %cst_230 = arith.constant 0.166666672 : f32
    %410 = vector.broadcast %cst_230 : f32 to vector<2x96xf32>
    %411 = arith.mulf %409, %410 : vector<2x96xf32>
    %c3_231 = arith.constant 3 : index
    %c0_232 = arith.constant 0 : index
    %c0_233 = arith.constant 0 : index
    %412 = vector.load %arg7[%c3_231, %c0_232, %c0_233] : memref<4x96x64xf32, #tpu.memory_space<vmem>>, vector<1x96x64xf32>
    %413 = vector.shape_cast %412 : vector<1x96x64xf32> to vector<96x64xf32>
    %cst_234 = arith.constant dense<0.000000e+00> : vector<2x64xf32>
    %414 = tpu.matmul %411, %413, %cst_234 {dimension_numbers = #tpu.dot_dimension_numbers<[1], [0], [0], [1], [0, 0, 1, 1], [], []>} : vector<2x96xf32>, vector<96x64xf32>, vector<2x64xf32> -> vector<2x64xf32>
    %c3_235 = arith.constant 3 : index
    %c0_236 = arith.constant 0 : index
    %c0_237 = arith.constant 0 : index
    %415 = vector.load %arg8[%c3_235, %c0_236, %c0_237] : memref<4x1x64xf32, #tpu.memory_space<vmem>>, vector<1x1x64xf32>
    %416 = vector.shape_cast %415 : vector<1x1x64xf32> to vector<1x64xf32>
    %417 = vector.broadcast %416 : vector<1x64xf32> to vector<2x64xf32>
    %418 = arith.addf %414, %417 : vector<2x64xf32>
    %cst_238 = arith.constant 3.000000e+00 : f32
    %419 = vector.broadcast %cst_238 : f32 to vector<2x64xf32>
    %420 = arith.addf %418, %419 : vector<2x64xf32>
    %cst_239 = arith.constant 0.000000e+00 : f32
    %cst_240 = arith.constant 6.000000e+00 : f32
    %421 = vector.broadcast %cst_239 : f32 to vector<2x64xf32>
    %422 = arith.maximumf %421, %420 : vector<2x64xf32>
    %423 = vector.broadcast %cst_240 : f32 to vector<2x64xf32>
    %424 = arith.minimumf %423, %422 : vector<2x64xf32>
    %425 = arith.mulf %418, %424 : vector<2x64xf32>
    %cst_241 = arith.constant 0.166666672 : f32
    %426 = vector.broadcast %cst_241 : f32 to vector<2x64xf32>
    %427 = arith.mulf %425, %426 : vector<2x64xf32>
    %c3_242 = arith.constant 3 : index
    %c0_243 = arith.constant 0 : index
    %c0_244 = arith.constant 0 : index
    %428 = vector.load %arg9[%c3_242, %c0_243, %c0_244] : memref<4x64x32xf32, #tpu.memory_space<vmem>>, vector<1x64x32xf32>
    %429 = vector.shape_cast %428 : vector<1x64x32xf32> to vector<64x32xf32>
    %cst_245 = arith.constant dense<0.000000e+00> : vector<2x32xf32>
    %430 = tpu.matmul %427, %429, %cst_245 {dimension_numbers = #tpu.dot_dimension_numbers<[1], [0], [0], [1], [0, 0, 1, 1], [], []>} : vector<2x64xf32>, vector<64x32xf32>, vector<2x32xf32> -> vector<2x32xf32>
    %c3_246 = arith.constant 3 : index
    %c0_247 = arith.constant 0 : index
    %c0_248 = arith.constant 0 : index
    %431 = vector.load %arg10[%c3_246, %c0_247, %c0_248] : memref<4x1x32xf32, #tpu.memory_space<vmem>>, vector<1x1x32xf32>
    %432 = vector.shape_cast %431 : vector<1x1x32xf32> to vector<1x32xf32>
    %433 = vector.broadcast %432 : vector<1x32xf32> to vector<2x32xf32>
    %434 = arith.addf %430, %433 : vector<2x32xf32>
    %cst_249 = arith.constant 3.000000e+00 : f32
    %435 = vector.broadcast %cst_249 : f32 to vector<2x32xf32>
    %436 = arith.addf %434, %435 : vector<2x32xf32>
    %cst_250 = arith.constant 0.000000e+00 : f32
    %cst_251 = arith.constant 6.000000e+00 : f32
    %437 = vector.broadcast %cst_250 : f32 to vector<2x32xf32>
    %438 = arith.maximumf %437, %436 : vector<2x32xf32>
    %439 = vector.broadcast %cst_251 : f32 to vector<2x32xf32>
    %440 = arith.minimumf %439, %438 : vector<2x32xf32>
    %441 = arith.mulf %434, %440 : vector<2x32xf32>
    %cst_252 = arith.constant 0.166666672 : f32
    %442 = vector.broadcast %cst_252 : f32 to vector<2x32xf32>
    %443 = arith.mulf %441, %442 : vector<2x32xf32>
    %444 = vector.extract_strided_slice %214 {offsets = [3, 0], sizes = [1, 32], strides = [1, 1]} : vector<4x32xf32> to vector<1x32xf32>
    %445 = vector.broadcast %444 : vector<1x32xf32> to vector<2x32xf32>
    %446 = arith.mulf %443, %445 : vector<2x32xf32>
    %cst_253 = arith.constant dense<0.000000e+00> : vector<2xf32>
    %447 = vector.multi_reduction <add>, %446, %cst_253 [1] : vector<2x32xf32> to vector<2xf32>
    %448 = vector.shape_cast %447 : vector<2xf32> to vector<2x1xf32>
    %c3_254 = arith.constant 3 : index
    %449 = memref.load %arg12[%c3_254] : memref<4xf32, #tpu.memory_space<smem>>
    %450 = vector.broadcast %449 : f32 to vector<2x1xf32>
    %451 = arith.addf %448, %450 : vector<2x1xf32>
    %cst_255 = arith.constant 0.000000e+00 : f32
    %452 = vector.broadcast %cst_255 : f32 to vector<2x1xf32>
    %453 = arith.maximumf %451, %452 : vector<2x1xf32>
    %c0_256 = arith.constant 0 : index
    %c3_257 = arith.constant 3 : index
    %454 = vector.load %arg13[%c0_256, %c3_257] : memref<2x4xf32, #tpu.memory_space<vmem>>, vector<2x1xf32>
    tpu.vector_store %arg13[%c0_256, %c3_257], %453 {strides = array<i32>} : memref<2x4xf32, #tpu.memory_space<vmem>>, vector<2x1xf32>,
    return
  }
}

</mosaic_0001>

<llo_original>
// kernel: transfer_model_forward.1
$region0: #{transfer_model_forward.1}
  #allocation0 [shape = 'u32[]', space=smem, size = 0x4, offset = 0x4, fixed_abs, tag = 'smem constant byte address 0x4 - core index']
  #allocation1 [shape = 'u32[144,128]{1,0:T(1,128)}', space=vmem, size = 0x12000, scoped, tag = 'internal scratch']
  %s0 = inlined_call_operand.vmem [shape: f32[2,194], index: 0, kind: input, shape index: {}]
  %s1 = inlined_call_operand.vmem [shape: f32[8,3], index: 1, kind: input, shape index: {}]
  %s2 = inlined_call_operand.hbm [shape: f32[8], index: 2, kind: input, shape index: {}]
  %s3 = inlined_call_operand.hbm [shape: f32[8,192,512], index: 3, kind: input, shape index: {}]
  %s4 = inlined_call_operand.hbm [shape: f32[1,512], index: 4, kind: input, shape index: {}]
  %s5 = inlined_call_operand.vmem [shape: f32[4,128,96], index: 5, kind: input, shape index: {}]
  %s6 = inlined_call_operand.hbm [shape: f32[4,1,96], index: 6, kind: input, shape index: {}]
  %s7 = inlined_call_operand.vmem [shape: f32[4,96,64], index: 7, kind: input, shape index: {}]
  %s8 = inlined_call_operand.hbm [shape: f32[4,1,64], index: 8, kind: input, shape index: {}]
  %s9 = inlined_call_operand.vmem [shape: f32[4,64,32], index: 9, kind: input, shape index: {}]
  %s10 = inlined_call_operand.hbm [shape: f32[4,1,32], index: 10, kind: input, shape index: {}]
  %s11 = inlined_call_operand.hbm [shape: f32[4,32], index: 11, kind: input, shape index: {}]
  %s12 = inlined_call_operand.hbm [shape: f32[4], index: 12, kind: input, shape index: {}]
  %s13 = inlined_call_operand.vmem [shape: f32[2,4], index: 13, kind: output, shape index: {}]
  %s14 = sld [smem:[#allocation0]]
  $region98: #{transfer_model_forward.1} parent=0
    _
  %s16 = ssub.s32 1, %s14
  %s17 = scalar_select 0, %s16, %s14
  $region1: #{transfer_model_forward.1} parent=0
    #allocation2 [shape = 'u8[4096]{0}', space=smem, size = 0x1000, scoped, tag = 'input window, operand 1, single buffered']
    #allocation3 [shape = 's32[1]{0}', space=sflag, size = 0x4, scoped, tag = 'scoped memory for transfer_model_forward.1']
    #allocation4 [shape = 's32[1]{0}', space=sflag, size = 0x4, scoped, tag = 'scoped memory for transfer_model_forward.1']
    #allocation5 [shape = 's32[1]{0}', space=sflag, size = 0x4, scoped, tag = 'scoped memory for transfer_model_forward.1']
    #allocation6 [shape = 'u8[512]{0}', space=smem, size = 0x200, scoped, tag = 'input window, operand 2, single buffered']
    #allocation7 [shape = 'u8[3145728]{0}', space=vmem, size = 0x300000, scoped, tag = 'input window, operand 3, single buffered']
    #allocation8 [shape = 'u8[2048]{0}', space=vmem, size = 0x800, scoped, tag = 'input window, operand 4, single buffered']
    #allocation9 [shape = 's32[1]{0}', space=sflag, size = 0x4, scoped, tag = 'scoped memory for transfer_model_forward.1']
    #allocation10 [shape = 'u8[2048]{0}', space=vmem, size = 0x800, scoped, tag = 'input window, operand 6, single buffered']
    #allocation11 [shape = 'u8[2048]{0}', space=vmem, size = 0x800, scoped, tag = 'input window, operand 8, single buffered']
    #allocation12 [shape = 's32[1]{0}', space=sflag, size = 0x4, scoped, tag = 'scoped memory for transfer_model_forward.1']
    #allocation13 [shape = 'u8[2048]{0}', space=vmem, size = 0x800, scoped, tag = 'input window, operand 10, single buffered']
    #allocation14 [shape = 'u8[2048]{0}', space=vmem, size = 0x800, scoped, tag = 'input window, operand 11, single buffered']
    #allocation15 [shape = 's32[1]{0}', space=sflag, size = 0x4, scoped, tag = 'scoped memory for transfer_model_forward.1']
    #allocation16 [shape = 'u8[512]{0}', space=smem, size = 0x200, scoped, tag = 'input window, operand 12, single buffered']
    #allocation17 [shape = 's32[1]{0}', space=sflag, size = 0x4, scoped, tag = 'scoped memory for transfer_model_forward.1']
    %18 = vsyncpa [#allocation5], 0
    %19 = vsyncpa [#allocation4], 0
    %20 = vsyncpa [#allocation3], 0
    %21 = vsyncpa [#allocation9], 0
    %22 = vsyncpa [#allocation12], 0
    %23 = vsyncpa [#allocation15], 0
    %24 = vsyncpa [#allocation17], 0
    // Predicated region
    $region2: #{transfer_model_forward.1} parent=1 // pred_check
      _
    $region3: #{transfer_model_forward.1} parent=1 // pred_check_branch
      %26 = sbr.rel (0) target = $region5
    $region4: #{transfer_model_forward.1} parent=1 // pred_region
      _
    $region5: #{transfer_model_forward.1} parent=1 // pred_fallthru
      _
    // Predicated region
    $region6: #{transfer_model_forward.1} parent=1 // pred_check
      _
    $region7: #{transfer_model_forward.1} parent=1 // pred_check_branch
      %28 = sbr.rel (0) target = $region9
    $region8: #{transfer_model_forward.1} parent=1 // pred_region
      %s30 = ssub.s32 128, 128
      %31 = vsyncadd [#allocation5], %s30
      %s33 = sshll.u32 %s1, 4
      %s34 = int_to_ptr.vmem [resolvable:$true] %s33
      %36 = dma.vmem_to_smem %s34, 128, [#allocation2], [#allocation5]
    $region9: #{transfer_model_forward.1} parent=1 // pred_fallthru
      _
    // Predicated region
    $region10: #{transfer_model_forward.1} parent=1 // pred_check
      _
    $region11: #{transfer_model_forward.1} parent=1 // pred_check_branch
      %38 = sbr.rel (0) target = $region13
    $region12: #{transfer_model_forward.1} parent=1 // pred_region
      %s40 = ssub.s32 16, 16
      %41 = vsyncadd [#allocation4], %s40
      %44 = dma.hbm_to_smem %s2, 16, [#allocation6], [#allocation4]
    $region13: #{transfer_model_forward.1} parent=1 // pred_fallthru
      _
    // Predicated region
    $region14: #{transfer_model_forward.1} parent=1 // pred_check
      _
    $region15: #{transfer_model_forward.1} parent=1 // pred_check_branch
      %46 = sbr.rel (0) target = $region17
    $region16: #{transfer_model_forward.1} parent=1 // pred_region
      %s48 = ssub.s32 98304, 98304
      %49 = vsyncadd [#allocation3], %s48
      %s50 = sshll.u32 [#allocation7], 4
      %s51 = int_to_ptr.vmem [resolvable:$true] %s50
      %56 = dma.hbm_to_vmem [thread:$0]  %s3, 98304, %s51, [#allocation3], 512, 512, 32
    $region17: #{transfer_model_forward.1} parent=1 // pred_fallthru
      _
    // Predicated region
    $region18: #{transfer_model_forward.1} parent=1 // pred_check
      _
    $region19: #{transfer_model_forward.1} parent=1 // pred_check_branch
      %58 = sbr.rel (0) target = $region21
    $region20: #{transfer_model_forward.1} parent=1 // pred_region
      %s60 = ssub.s32 64, 64
      %61 = vsyncadd [#allocation9], %s60
      %s63 = sshll.u32 [#allocation8], 4
      %s64 = int_to_ptr.vmem [resolvable:$true] %s63
      %66 = dma.hbm_to_vmem [thread:$0]  %s4, 64, %s64, [#allocation9]
    $region21: #{transfer_model_forward.1} parent=1 // pred_fallthru
      _
    // Predicated region
    $region22: #{transfer_model_forward.1} parent=1 // pred_check
      _
    $region23: #{transfer_model_forward.1} parent=1 // pred_check_branch
      %68 = sbr.rel (0) target = $region25
    $region24: #{transfer_model_forward.1} parent=1 // pred_region
      _
    $region25: #{transfer_model_forward.1} parent=1 // pred_fallthru
      _
    // Predicated region
    $region26: #{transfer_model_forward.1} parent=1 // pred_check
      _
    $region27: #{transfer_model_forward.1} parent=1 // pred_check_branch
      %70 = sbr.rel (0) target = $region29
    $region28: #{transfer_model_forward.1} parent=1 // pred_region
      %s72 = ssub.s32 64, 64
      %73 = vsyncadd [#allocation9], %s72
      %s74 = sshll.u32 [#allocation10], 4
      %s75 = int_to_ptr.vmem [resolvable:$true] %s74
      %80 = dma.hbm_to_vmem [thread:$0]  %s6, 64, %s75, [#allocation9], 16, 16, 1
    $region29: #{transfer_model_forward.1} parent=1 // pred_fallthru
      _
    // Predicated region
    $region30: #{transfer_model_forward.1} parent=1 // pred_check
      _
    $region31: #{transfer_model_forward.1} parent=1 // pred_check_branch
      %82 = sbr.rel (0) target = $region33
    $region32: #{transfer_model_forward.1} parent=1 // pred_region
      _
    $region33: #{transfer_model_forward.1} parent=1 // pred_fallthru
      _
    // Predicated region
    $region34: #{transfer_model_forward.1} parent=1 // pred_check
      _
    $region35: #{transfer_model_forward.1} parent=1 // pred_check_branch
      %84 = sbr.rel (0) target = $region37
    $region36: #{transfer_model_forward.1} parent=1 // pred_region
      %s86 = ssub.s32 64, 64
      %87 = vsyncadd [#allocation12], %s86
      %s88 = sshll.u32 [#allocation11], 4
      %s89 = int_to_ptr.vmem [resolvable:$true] %s88
      %94 = dma.hbm_to_vmem [thread:$0]  %s8, 64, %s89, [#allocation12], 16, 16, 1
    $region37: #{transfer_model_forward.1} parent=1 // pred_fallthru
      _
    // Predicated region
    $region38: #{transfer_model_forward.1} parent=1 // pred_check
      _
    $region39: #{transfer_model_forward.1} parent=1 // pred_check_branch
      %96 = sbr.rel (0) target = $region41
    $region40: #{transfer_model_forward.1} parent=1 // pred_region
      _
    $region41: #{transfer_model_forward.1} parent=1 // pred_fallthru
      _
    // Predicated region
    $region42: #{transfer_model_forward.1} parent=1 // pred_check
      _
    $region43: #{transfer_model_forward.1} parent=1 // pred_check_branch
      %98 = sbr.rel (0) target = $region45
    $region44: #{transfer_model_forward.1} parent=1 // pred_region
      %s100 = ssub.s32 64, 64
      %101 = vsyncadd [#allocation12], %s100
      %s102 = sshll.u32 [#allocation13], 4
      %s103 = int_to_ptr.vmem [resolvable:$true] %s102
      %108 = dma.hbm_to_vmem [thread:$0]  %s10, 64, %s103, [#allocation12], 16, 16, 1
    $region45: #{transfer_model_forward.1} parent=1 // pred_fallthru
      _
    // Predicated region
    $region46: #{transfer_model_forward.1} parent=1 // pred_check
      _
    $region47: #{transfer_model_forward.1} parent=1 // pred_check_branch
      %110 = sbr.rel (0) target = $region49
    $region48: #{transfer_model_forward.1} parent=1 // pred_region
      %s112 = ssub.s32 64, 64
      %113 = vsyncadd [#allocation15], %s112
      %s115 = sshll.u32 [#allocation14], 4
      %s116 = int_to_ptr.vmem [resolvable:$true] %s115
      %118 = dma.hbm_to_vmem [thread:$0]  %s11, 64, %s116, [#allocation15]
    $region49: #{transfer_model_forward.1} parent=1 // pred_fallthru
      _
    // Predicated region
    $region50: #{transfer_model_forward.1} parent=1 // pred_check
      _
    $region51: #{transfer_model_forward.1} parent=1 // pred_check_branch
      %120 = sbr.rel (0) target = $region53
    $region52: #{transfer_model_forward.1} parent=1 // pred_region
      %s122 = ssub.s32 16, 16
      %123 = vsyncadd [#allocation17], %s122
      %126 = dma.hbm_to_smem %s12, 16, [#allocation16], [#allocation17]
    $region53: #{transfer_model_forward.1} parent=1 // pred_fallthru
      _
    // Predicated region
    $region54: #{transfer_model_forward.1} parent=1 // pred_check
      _
    $region55: #{transfer_model_forward.1} parent=1 // pred_check_branch
      %128 = sbr.rel (0) target = $region57
    $region56: #{transfer_model_forward.1} parent=1 // pred_region
      %129 = dma.done [#allocation5], 128
    $region57: #{transfer_model_forward.1} parent=1 // pred_fallthru
      _
    // Predicated region
    $region58: #{transfer_model_forward.1} parent=1 // pred_check
      _
    $region59: #{transfer_model_forward.1} parent=1 // pred_check_branch
      %131 = sbr.rel (0) target = $region61
    $region60: #{transfer_model_forward.1} parent=1 // pred_region
      %132 = dma.done [#allocation4], 16
    $region61: #{transfer_model_forward.1} parent=1 // pred_fallthru
      _
    // Predicated region
    $region62: #{transfer_model_forward.1} parent=1 // pred_check
      _
    $region63: #{transfer_model_forward.1} parent=1 // pred_check_branch
      %134 = sbr.rel (0) target = $region65
    $region64: #{transfer_model_forward.1} parent=1 // pred_region
      %135 = dma.done [#allocation3], 98304
    $region65: #{transfer_model_forward.1} parent=1 // pred_fallthru
      _
    // Predicated region
    $region66: #{transfer_model_forward.1} parent=1 // pred_check
      _
    $region67: #{transfer_model_forward.1} parent=1 // pred_check_branch
      %137 = sbr.rel (0) target = $region69
    $region68: #{transfer_model_forward.1} parent=1 // pred_region
      %138 = dma.done [#allocation9], 64
    $region69: #{transfer_model_forward.1} parent=1 // pred_fallthru
      _
    // Predicated region
    $region70: #{transfer_model_forward.1} parent=1 // pred_check
      _
    $region71: #{transfer_model_forward.1} parent=1 // pred_check_branch
      %140 = sbr.rel (0) target = $region73
    $region72: #{transfer_model_forward.1} parent=1 // pred_region
      %141 = dma.done [#allocation9], 64
    $region73: #{transfer_model_forward.1} parent=1 // pred_fallthru
      _
    // Predicated region
    $region74: #{transfer_model_forward.1} parent=1 // pred_check
      _
    $region75: #{transfer_model_forward.1} parent=1 // pred_check_branch
      %143 = sbr.rel (0) target = $region77
    $region76: #{transfer_model_forward.1} parent=1 // pred_region
      %144 = dma.done [#allocation12], 64
    $region77: #{transfer_model_forward.1} parent=1 // pred_fallthru
      _
    // Predicated region
    $region78: #{transfer_model_forward.1} parent=1 // pred_check
      _
    $region79: #{transfer_model_forward.1} parent=1 // pred_check_branch
      %146 = sbr.rel (0) target = $region81
    $region80: #{transfer_model_forward.1} parent=1 // pred_region
      %147 = dma.done [#allocation12], 64
    $region81: #{transfer_model_forward.1} parent=1 // pred_fallthru
      _
    // Predicated region
    $region82: #{transfer_model_forward.1} parent=1 // pred_check
      _
    $region83: #{transfer_model_forward.1} parent=1 // pred_check_branch
      %149 = sbr.rel (0) target = $region85
    $region84: #{transfer_model_forward.1} parent=1 // pred_region
      %150 = dma.done [#allocation15], 64
    $region85: #{transfer_model_forward.1} parent=1 // pred_fallthru
      _
    // Predicated region
    $region86: #{transfer_model_forward.1} parent=1 // pred_check
      _
    $region87: #{transfer_model_forward.1} parent=1 // pred_check_branch
      %152 = sbr.rel (0) target = $region89
    $region88: #{transfer_model_forward.1} parent=1 // pred_region
      %153 = dma.done [#allocation17], 16
    $region89: #{transfer_model_forward.1} parent=1 // pred_fallthru
      _
    %154 = sfence
    %v155 = vld [vmem:[%s0] sm:$0xf]
    %s156 = sld [smem:[#allocation2]]
    %v157 = vstv %s156
    %v158 = vmul.f32 %v155, %v157
    %v159 = vadd.f32 %v158, 0.0
    %s160 = sld [smem:[#allocation2 + $0x1]]
    %v161 = vstv %s160
    %v162 = vmul.f32 %v155, %v161
    %164 = vrot.lane.b32.xlu0 %v162, 127
    %v165 = vpop.permute.xlu0 %164
    %v166 = vrot.slane %v165, 2
    %vm167 = vcmask 1039360
    %v168 = vsel %vm167, %v165, %v166
    %v170 = vadd.f32 %v159, %v168
    %s171 = sld [smem:[#allocation2 + $0x2]]
    %v172 = vstv %s171
    %v173 = vmul.f32 %v155, %v172
    %175 = vrot.lane.b32.xlu0 %v173, 126
    %v176 = vpop.permute.xlu0 %175
    %v177 = vrot.slane %v176, 2
    %vm178 = vcmask 1031168
    %v179 = vsel %vm178, %v176, %v177
    %v181 = vadd.f32 %v170, %v179
    %s182 = sld [smem:[#allocation6]]
    %v183 = vstv %s182
    %v184 = vadd.f32 %v181, %v183
    %v185 = vmax.f32 %v184, 0.0
    %v186 = vld [vmem:[#allocation7] sm:$0xff]
    %v187 = vld [vmem:[#allocation7 + $0x8] sm:$0xff]
    %v188 = vld [vmem:[#allocation7 + $0x10] sm:$0xff]
    %v189 = vld [vmem:[#allocation7 + $0x18] sm:$0xff]
    %v190 = vld [vmem:[#allocation7 + $0x20] sm:$0xff]
    %v191 = vld [vmem:[#allocation7 + $0x28] sm:$0xff]
    %v192 = vld [vmem:[#allocation7 + $0x30] sm:$0xff]
    %v193 = vld [vmem:[#allocation7 + $0x38] sm:$0xff]
    %v194 = vld [vmem:[#allocation7 + $0x40] sm:$0xff]
    %v195 = vld [vmem:[#allocation7 + $0x48] sm:$0xff]
    %v196 = vld [vmem:[#allocation7 + $0x50] sm:$0xff]
    %v197 = vld [vmem:[#allocation7 + $0x58] sm:$0xff]
    %v198 = vld [vmem:[#allocation7 + $0x60] sm:$0xff]
    %v199 = vld [vmem:[#allocation7 + $0x68] sm:$0xff]
    %v200 = vld [vmem:[#allocation7 + $0x70] sm:$0xff]
    %v201 = vld [vmem:[#allocation7 + $0x78] sm:$0xff]
    %v202 = vld [vmem:[#allocation7 + $0x80] sm:$0xff]
    %v203 = vld [vmem:[#allocation7 + $0x88] sm:$0xff]
    %v204 = vld [vmem:[#allocation7 + $0x90] sm:$0xff]
    %v205 = vld [vmem:[#allocation7 + $0x98] sm:$0xff]
    %v206 = vld [vmem:[#allocation7 + $0xa0] sm:$0xff]
    %v207 = vld [vmem:[#allocation7 + $0xa8] sm:$0xff]
    %v208 = vld [vmem:[#allocation7 + $0xb0] sm:$0xff]
    %v209 = vld [vmem:[#allocation7 + $0xb8] sm:$0xff]
    %v210 = vld [vmem:[#allocation7 + $0xc0] sm:$0xff]
    %v211 = vld [vmem:[#allocation7 + $0xc8] sm:$0xff]
    %v212 = vld [vmem:[#allocation7 + $0xd0] sm:$0xff]
    %v213 = vld [vmem:[#allocation7 + $0xd8] sm:$0xff]
    %v214 = vld [vmem:[#allocation7 + $0xe0] sm:$0xff]
    %v215 = vld [vmem:[#allocation7 + $0xe8] sm:$0xff]
    %v216 = vld [vmem:[#allocation7 + $0xf0] sm:$0xff]
    %v217 = vld [vmem:[#allocation7 + $0xf8] sm:$0xff]
    %v218 = vld [vmem:[#allocation7 + $0x100] sm:$0xff]
    %v219 = vld [vmem:[#allocation7 + $0x108] sm:$0xff]
    %v220 = vld [vmem:[#allocation7 + $0x110] sm:$0xff]
    %v221 = vld [vmem:[#allocation7 + $0x118] sm:$0xff]
    %v222 = vld [vmem:[#allocation7 + $0x120] sm:$0xff]
    %v223 = vld [vmem:[#allocation7 + $0x128] sm:$0xff]
    %v224 = vld [vmem:[#allocation7 + $0x130] sm:$0xff]
    %v225 = vld [vmem:[#allocation7 + $0x138] sm:$0xff]
    %v226 = vld [vmem:[#allocation7 + $0x140] sm:$0xff]
    %v227 = vld [vmem:[#allocation7 + $0x148] sm:$0xff]
    %v228 = vld [vmem:[#allocation7 + $0x150] sm:$0xff]
    %v229 = vld [vmem:[#allocation7 + $0x158] sm:$0xff]
    %v230 = vld [vmem:[#allocation7 + $0x160] sm:$0xff]
    %v231 = vld [vmem:[#allocation7 + $0x168] sm:$0xff]
    %v232 = vld [vmem:[#allocation7 + $0x170] sm:$0xff]
    %v233 = vld [vmem:[#allocation7 + $0x178] sm:$0xff]
    %v234 = vld [vmem:[#allocation7 + $0x180] sm:$0xff]
    %v235 = vld [vmem:[#allocation7 + $0x188] sm:$0xff]
    %v236 = vld [vmem:[#allocation7 + $0x190] sm:$0xff]
    %v237 = vld [vmem:[#allocation7 + $0x198] sm:$0xff]
    %v238 = vld [vmem:[#allocation7 + $0x1a0] sm:$0xff]
    %v239 = vld [vmem:[#allocation7 + $0x1a8] sm:$0xff]
    %v240 = vld [vmem:[#allocation7 + $0x1b0] sm:$0xff]
    %v241 = vld [vmem:[#allocation7 + $0x1b8] sm:$0xff]
    %v242 = vld [vmem:[#allocation7 + $0x1c0] sm:$0xff]
    %v243 = vld [vmem:[#allocation7 + $0x1c8] sm:$0xff]
    %v244 = vld [vmem:[#allocation7 + $0x1d0] sm:$0xff]
    %v245 = vld [vmem:[#allocation7 + $0x1d8] sm:$0xff]
    %v246 = vld [vmem:[#allocation7 + $0x1e0] sm:$0xff]
    %v247 = vld [vmem:[#allocation7 + $0x1e8] sm:$0xff]
    %v248 = vld [vmem:[#allocation7 + $0x1f0] sm:$0xff]
    %v249 = vld [vmem:[#allocation7 + $0x1f8] sm:$0xff]
    %v250 = vld [vmem:[#allocation7 + $0x200] sm:$0xff]
    %v251 = vld [vmem:[#allocation7 + $0x208] sm:$0xff]
    %v252 = vld [vmem:[#allocation7 + $0x210] sm:$0xff]
    %v253 = vld [vmem:[#allocation7 + $0x218] sm:$0xff]
    %v254 = vld [vmem:[#allocation7 + $0x220] sm:$0xff]
    %v255 = vld [vmem:[#allocation7 + $0x228] sm:$0xff]
    %v256 = vld [vmem:[#allocation7 + $0x230] sm:$0xff]
    %v257 = vld [vmem:[#allocation7 + $0x238] sm:$0xff]
    %v258 = vld [vmem:[#allocation7 + $0x240] sm:$0xff]
    %v259 = vld [vmem:[#allocation7 + $0x248] sm:$0xff]
    %v260 = vld [vmem:[#allocation7 + $0x250] sm:$0xff]
    %v261 = vld [vmem:[#allocation7 + $0x258] sm:$0xff]
    %v262 = vld [vmem:[#allocation7 + $0x260] sm:$0xff]
    %v263 = vld [vmem:[#allocation7 + $0x268] sm:$0xff]
    %v264 = vld [vmem:[#allocation7 + $0x270] sm:$0xff]
    %v265 = vld [vmem:[#allocation7 + $0x278] sm:$0xff]
    %v266 = vld [vmem:[#allocation7 + $0x280] sm:$0xff]
    %v267 = vld [vmem:[#allocation7 + $0x288] sm:$0xff]
    %v268 = vld [vmem:[#allocation7 + $0x290] sm:$0xff]
    %v269 = vld [vmem:[#allocation7 + $0x298] sm:$0xff]
    %v270 = vld [vmem:[#allocation7 + $0x2a0] sm:$0xff]
    %v271 = vld [vmem:[#allocation7 + $0x2a8] sm:$0xff]
    %v272 = vld [vmem:[#allocation7 + $0x2b0] sm:$0xff]
    %v273 = vld [vmem:[#allocation7 + $0x2b8] sm:$0xff]
    %v274 = vld [vmem:[#allocation7 + $0x2c0] sm:$0xff]
    %v275 = vld [vmem:[#allocation7 + $0x2c8] sm:$0xff]
    %v276 = vld [vmem:[#allocation7 + $0x2d0] sm:$0xff]
    %v277 = vld [vmem:[#allocation7 + $0x2d8] sm:$0xff]
    %v278 = vld [vmem:[#allocation7 + $0x2e0] sm:$0xff]
    %v279 = vld [vmem:[#allocation7 + $0x2e8] sm:$0xff]
    %v280 = vld [vmem:[#allocation7 + $0x2f0] sm:$0xff]
    %v281 = vld [vmem:[#allocation7 + $0x2f8] sm:$0xff]
    %s282 = sld [smem:[#allocation2 + $0x80]]
    %v283 = vstv %s282
    %v284 = vmul.f32 %v155, %v283
    %v285 = vadd.f32 %v284, 0.0
    %s286 = sld [smem:[#allocation2 + $0x81]]
    %v287 = vstv %s286
    %v288 = vmul.f32 %v155, %v287
    %290 = vrot.lane.b32.xlu0 %v288, 127
    %v291 = vpop.permute.xlu0 %290
    %v292 = vrot.slane %v291, 2
    %v293 = vsel %vm167, %v291, %v292
    %v295 = vadd.f32 %v285, %v293
    %s296 = sld [smem:[#allocation2 + $0x82]]
    %v297 = vstv %s296
    %v298 = vmul.f32 %v155, %v297
    %300 = vrot.lane.b32.xlu0 %v298, 126
    %v301 = vpop.permute.xlu0 %300
    %v302 = vrot.slane %v301, 2
    %v303 = vsel %vm178, %v301, %v302
    %v305 = vadd.f32 %v295, %v303
    %s306 = sld [smem:[#allocation6 + $0x1]]
    %v307 = vstv %s306
    %v308 = vadd.f32 %v305, %v307
    %v309 = vmax.f32 %v308, 0.0
    %s310 = scalar_lea.vmem [#allocation7], 768
    %v311 = vld [vmem:[%s310] sm:$0xff]
    %v312 = vld [vmem:[%s310 + $0x8] sm:$0xff]
    %v313 = vld [vmem:[%s310 + $0x10] sm:$0xff]
    %v314 = vld [vmem:[%s310 + $0x18] sm:$0xff]
    %v315 = vld [vmem:[%s310 + $0x20] sm:$0xff]
    %v316 = vld [vmem:[%s310 + $0x28] sm:$0xff]
    %v317 = vld [vmem:[%s310 + $0x30] sm:$0xff]
    %v318 = vld [vmem:[%s310 + $0x38] sm:$0xff]
    %v319 = vld [vmem:[%s310 + $0x40] sm:$0xff]
    %v320 = vld [vmem:[%s310 + $0x48] sm:$0xff]
    %v321 = vld [vmem:[%s310 + $0x50] sm:$0xff]
    %v322 = vld [vmem:[%s310 + $0x58] sm:$0xff]
    %v323 = vld [vmem:[%s310 + $0x60] sm:$0xff]
    %v324 = vld [vmem:[%s310 + $0x68] sm:$0xff]
    %v325 = vld [vmem:[%s310 + $0x70] sm:$0xff]
    %v326 = vld [vmem:[%s310 + $0x78] sm:$0xff]
    %v327 = vld [vmem:[%s310 + $0x80] sm:$0xff]
    %v328 = vld [vmem:[%s310 + $0x88] sm:$0xff]
    %v329 = vld [vmem:[%s310 + $0x90] sm:$0xff]
    %v330 = vld [vmem:[%s310 + $0x98] sm:$0xff]
    %v331 = vld [vmem:[%s310 + $0xa0] sm:$0xff]
    %v332 = vld [vmem:[%s310 + $0xa8] sm:$0xff]
    %v333 = vld [vmem:[%s310 + $0xb0] sm:$0xff]
    %v334 = vld [vmem:[%s310 + $0xb8] sm:$0xff]
    %v335 = vld [vmem:[%s310 + $0xc0] sm:$0xff]
    %v336 = vld [vmem:[%s310 + $0xc8] sm:$0xff]
    %v337 = vld [vmem:[%s310 + $0xd0] sm:$0xff]
    %v338 = vld [vmem:[%s310 + $0xd8] sm:$0xff]
    %v339 = vld [vmem:[%s310 + $0xe0] sm:$0xff]
    %v340 = vld [vmem:[%s310 + $0xe8] sm:$0xff]
    %v341 = vld [vmem:[%s310 + $0xf0] sm:$0xff]
    %v342 = vld [vmem:[%s310 + $0xf8] sm:$0xff]
    %v343 = vld [vmem:[%s310 + $0x100] sm:$0xff]
    %v344 = vld [vmem:[%s310 + $0x108] sm:$0xff]
    %v345 = vld [vmem:[%s310 + $0x110] sm:$0xff]
    %v346 = vld [vmem:[%s310 + $0x118] sm:$0xff]
    %v347 = vld [vmem:[%s310 + $0x120] sm:$0xff]
    %v348 = vld [vmem:[%s310 + $0x128] sm:$0xff]
    %v349 = vld [vmem:[%s310 + $0x130] sm:$0xff]
    %v350 = vld [vmem:[%s310 + $0x138] sm:$0xff]
    %v351 = vld [vmem:[%s310 + $0x140] sm:$0xff]
    %v352 = vld [vmem:[%s310 + $0x148] sm:$0xff]
    %v353 = vld [vmem:[%s310 + $0x150] sm:$0xff]
    %v354 = vld [vmem:[%s310 + $0x158] sm:$0xff]
    %v355 = vld [vmem:[%s310 + $0x160] sm:$0xff]
    %v356 = vld [vmem:[%s310 + $0x168] sm:$0xff]
    %v357 = vld [vmem:[%s310 + $0x170] sm:$0xff]
    %v358 = vld [vmem:[%s310 + $0x178] sm:$0xff]
    %v359 = vld [vmem:[%s310 + $0x180] sm:$0xff]
    %v360 = vld [vmem:[%s310 + $0x188] sm:$0xff]
    %v361 = vld [vmem:[%s310 + $0x190] sm:$0xff]
    %v362 = vld [vmem:[%s310 + $0x198] sm:$0xff]
    %v363 = vld [vmem:[%s310 + $0x1a0] sm:$0xff]
    %v364 = vld [vmem:[%s310 + $0x1a8] sm:$0xff]
    %v365 = vld [vmem:[%s310 + $0x1b0] sm:$0xff]
    %v366 = vld [vmem:[%s310 + $0x1b8] sm:$0xff]
    %v367 = vld [vmem:[%s310 + $0x1c0] sm:$0xff]
    %v368 = vld [vmem:[%s310 + $0x1c8] sm:$0xff]
    %v369 = vld [vmem:[%s310 + $0x1d0] sm:$0xff]
    %v370 = vld [vmem:[%s310 + $0x1d8] sm:$0xff]
    %v371 = vld [vmem:[%s310 + $0x1e0] sm:$0xff]
    %v372 = vld [vmem:[%s310 + $0x1e8] sm:$0xff]
    %v373 = vld [vmem:[%s310 + $0x1f0] sm:$0xff]
    %v374 = vld [vmem:[%s310 + $0x1f8] sm:$0xff]
    %v375 = vld [vmem:[%s310 + $0x200] sm:$0xff]
    %v376 = vld [vmem:[%s310 + $0x208] sm:$0xff]
    %v377 = vld [vmem:[%s310 + $0x210] sm:$0xff]
    %v378 = vld [vmem:[%s310 + $0x218] sm:$0xff]
    %v379 = vld [vmem:[%s310 + $0x220] sm:$0xff]
    %v380 = vld [vmem:[%s310 + $0x228] sm:$0xff]
    %v381 = vld [vmem:[%s310 + $0x230] sm:$0xff]
    %v382 = vld [vmem:[%s310 + $0x238] sm:$0xff]
    %v383 = vld [vmem:[%s310 + $0x240] sm:$0xff]
    %v384 = vld [vmem:[%s310 + $0x248] sm:$0xff]
    %v385 = vld [vmem:[%s310 + $0x250] sm:$0xff]
    %v386 = vld [vmem:[%s310 + $0x258] sm:$0xff]
    %v387 = vld [vmem:[%s310 + $0x260] sm:$0xff]
    %v388 = vld [vmem:[%s310 + $0x268] sm:$0xff]
    %v389 = vld [vmem:[%s310 + $0x270] sm:$0xff]
    %v390 = vld [vmem:[%s310 + $0x278] sm:$0xff]
    %v391 = vld [vmem:[%s310 + $0x280] sm:$0xff]
    %v392 = vld [vmem:[%s310 + $0x288] sm:$0xff]
    %v393 = vld [vmem:[%s310 + $0x290] sm:$0xff]
    %v394 = vld [vmem:[%s310 + $0x298] sm:$0xff]
    %v395 = vld [vmem:[%s310 + $0x2a0] sm:$0xff]
    %v396 = vld [vmem:[%s310 + $0x2a8] sm:$0xff]
    %v397 = vld [vmem:[%s310 + $0x2b0] sm:$0xff]
    %v398 = vld [vmem:[%s310 + $0x2b8] sm:$0xff]
    %v399 = vld [vmem:[%s310 + $0x2c0] sm:$0xff]
    %v400 = vld [vmem:[%s310 + $0x2c8] sm:$0xff]
    %v401 = vld [vmem:[%s310 + $0x2d0] sm:$0xff]
    %v402 = vld [vmem:[%s310 + $0x2d8] sm:$0xff]
    %v403 = vld [vmem:[%s310 + $0x2e0] sm:$0xff]
    %v404 = vld [vmem:[%s310 + $0x2e8] sm:$0xff]
    %v405 = vld [vmem:[%s310 + $0x2f0] sm:$0xff]
    %v406 = vld [vmem:[%s310 + $0x2f8] sm:$0xff]
    %v409 = vunpack.c.l.s4 1983009808
    %v410 = vunpack.c.0.s8 %v409
    %v411 = vlaneseq
    %v412 = vshrl.u32 %v411, 7
    %v413 = vsub.s32 %v410, %v412
    %v414 = vrot.slane %v309, %v413
    %v415 = vcombine.high %v414, %v414
    %vm417 = vcmask 523264
    %v418 = vsel %vm417, %v415, 0
    %420 = vmatprep.subr.mxu0 %v372
    %421 = vmatpush1.msra.mxu0 %v371
    %422 = vmatprep.subr.mxu0 %v368
    %423 = vmatpush1.msra.mxu0 %v367
    %424 = vmatprep.subr.mxu0 %v364
    %425 = vmatpush1.msra.mxu0 %v363
    %426 = vmatprep.subr.mxu0 %v360
    %427 = vmatpush1.msra.mxu0 %v359
    %428 = vmatprep.subr.mxu0 %v356
    %429 = vmatpush1.msra.mxu0 %v355
    %430 = vmatprep.subr.mxu0 %v352
    %431 = vmatpush1.msra.mxu0 %v351
    %432 = vmatprep.subr.mxu0 %v348
    %433 = vmatpush1.msra.mxu0 %v347
    %434 = vmatprep.subr.mxu0 %v344
    %435 = vmatpush1.msra.mxu0 %v343
    %436 = vmatprep.subr.mxu0 %v340
    %437 = vmatpush1.msra.mxu0 %v339
    %438 = vmatprep.subr.mxu0 %v336
    %439 = vmatpush1.msra.mxu0 %v335
    %440 = vmatprep.subr.mxu0 %v332
    %441 = vmatpush1.msra.mxu0 %v331
    %442 = vmatprep.subr.mxu0 %v328
    %443 = vmatpush1.msra.mxu0 %v327
    %444 = vmatprep.subr.mxu0 %v324
    %445 = vmatpush1.msra.mxu0 %v323
    %446 = vmatprep.subr.mxu0 %v320
    %447 = vmatpush1.msra.mxu0 %v319
    %448 = vmatprep.subr.mxu0 %v316
    %449 = vmatpush1.msra.mxu0 %v315
    %450 = vmatprep.subr.mxu0 %v312
    %451 = vmatpush1.msra.mxu0 %v311
    %452 = vmatprep.subr.mxu0 0.0
    %453 = vmatpush2.msra.mxu0 0.0
    %454 = vmatprep.subr.mxu0 0.0
    %455 = vmatpush2.msra.mxu0 0.0
    %456 = vmatprep.subr.mxu0 0.0
    %457 = vmatpush2.msra.mxu0 0.0
    %458 = vmatprep.subr.mxu0 0.0
    %459 = vmatpush2.msra.mxu0 0.0
    %460 = vmatprep.subr.mxu0 0.0
    %461 = vmatpush2.msra.mxu0 0.0
    %462 = vmatprep.subr.mxu0 0.0
    %463 = vmatpush2.msra.mxu0 0.0
    %464 = vmatprep.subr.mxu0 0.0
    %465 = vmatpush2.msra.mxu0 0.0
    %466 = vmatprep.subr.mxu0 0.0
    %467 = vmatpush2.msra.mxu0 0.0
    %468 = vmatprep.subr.mxu0 %v404
    %469 = vmatpush2.msra.mxu0 %v403
    %470 = vmatprep.subr.mxu0 %v400
    %471 = vmatpush2.msra.mxu0 %v399
    %472 = vmatprep.subr.mxu0 %v396
    %473 = vmatpush2.msra.mxu0 %v395
    %474 = vmatprep.subr.mxu0 %v392
    %475 = vmatpush2.msra.mxu0 %v391
    %476 = vmatprep.subr.mxu0 %v388
    %477 = vmatpush2.msra.mxu0 %v387
    %478 = vmatprep.subr.mxu0 %v384
    %479 = vmatpush2.msra.mxu0 %v383
    %480 = vmatprep.subr.mxu0 %v380
    %481 = vmatpush2.msra.mxu0 %v379
    %482 = vmatprep.subr.mxu0 %v376
    %483 = vmatpush2.msra.mxu0 %v375
    %484 = vmatprep.mubr.f32.mxu0 %v418
    %485 = vmatmul.mubr.f32.gmra.mxu0 %v414
    %v486 = vpop.f32.mrf.mxu0
    %v487 = vadd.f32 0.0, %v486
    %v488 = vpop.f32.mrf.mxu0
    %v489 = vadd.f32 0.0, %v488
    %490 = vdwg.mxu0
    %491 = vmatprep.subr.mxu0 %v374
    %492 = vmatpush1.msra.mxu0 %v373
    %493 = vmatprep.subr.mxu0 %v370
    %494 = vmatpush1.msra.mxu0 %v369
    %495 = vmatprep.subr.mxu0 %v366
    %496 = vmatpush1.msra.mxu0 %v365
    %497 = vmatprep.subr.mxu0 %v362
    %498 = vmatpush1.msra.mxu0 %v361
    %499 = vmatprep.subr.mxu0 %v358
    %500 = vmatpush1.msra.mxu0 %v357
    %501 = vmatprep.subr.mxu0 %v354
    %502 = vmatpush1.msra.mxu0 %v353
    %503 = vmatprep.subr.mxu0 %v350
    %504 = vmatpush1.msra.mxu0 %v349
    %505 = vmatprep.subr.mxu0 %v346
    %506 = vmatpush1.msra.mxu0 %v345
    %507 = vmatprep.subr.mxu0 %v342
    %508 = vmatpush1.msra.mxu0 %v341
    %509 = vmatprep.subr.mxu0 %v338
    %510 = vmatpush1.msra.mxu0 %v337
    %511 = vmatprep.subr.mxu0 %v334
    %512 = vmatpush1.msra.mxu0 %v333
    %513 = vmatprep.subr.mxu0 %v330
    %514 = vmatpush1.msra.mxu0 %v329
    %515 = vmatprep.subr.mxu0 %v326
    %516 = vmatpush1.msra.mxu0 %v325
    %517 = vmatprep.subr.mxu0 %v322
    %518 = vmatpush1.msra.mxu0 %v321
    %519 = vmatprep.subr.mxu0 %v318
    %520 = vmatpush1.msra.mxu0 %v317
    %521 = vmatprep.subr.mxu0 %v314
    %522 = vmatpush1.msra.mxu0 %v313
    %523 = vmatprep.subr.mxu0 0.0
    %524 = vmatpush2.msra.mxu0 0.0
    %525 = vmatprep.subr.mxu0 0.0
    %526 = vmatpush2.msra.mxu0 0.0
    %527 = vmatprep.subr.mxu0 0.0
    %528 = vmatpush2.msra.mxu0 0.0
    %529 = vmatprep.subr.mxu0 0.0
    %530 = vmatpush2.msra.mxu0 0.0
    %531 = vmatprep.subr.mxu0 0.0
    %532 = vmatpush2.msra.mxu0 0.0
    %533 = vmatprep.subr.mxu0 0.0
    %534 = vmatpush2.msra.mxu0 0.0
    %535 = vmatprep.subr.mxu0 0.0
    %536 = vmatpush2.msra.mxu0 0.0
    %537 = vmatprep.subr.mxu0 0.0
    %538 = vmatpush2.msra.mxu0 0.0
    %539 = vmatprep.subr.mxu0 %v406
    %540 = vmatpush2.msra.mxu0 %v405
    %541 = vmatprep.subr.mxu0 %v402
    %542 = vmatpush2.msra.mxu0 %v401
    %543 = vmatprep.subr.mxu0 %v398
    %544 = vmatpush2.msra.mxu0 %v397
    %545 = vmatprep.subr.mxu0 %v394
    %546 = vmatpush2.msra.mxu0 %v393
    %547 = vmatprep.subr.mxu0 %v390
    %548 = vmatpush2.msra.mxu0 %v389
    %549 = vmatprep.subr.mxu0 %v386
    %550 = vmatpush2.msra.mxu0 %v385
    %551 = vmatprep.subr.mxu0 %v382
    %552 = vmatpush2.msra.mxu0 %v381
    %553 = vmatprep.subr.mxu0 %v378
    %554 = vmatpush2.msra.mxu0 %v377
    %555 = vmatprep.mubr.f32.mxu0 %v418
    %556 = vmatmul.mubr.f32.gmra.mxu0 %v414
    %v557 = vpop.f32.mrf.mxu0
    %v558 = vadd.f32 0.0, %v557
    %v559 = vpop.f32.mrf.mxu0
    %v560 = vadd.f32 0.0, %v559
    %561 = vdwg.mxu0
    %v564 = vunpack.c.l.s4 1983009808
    %v565 = vunpack.c.0.s8 %v564
    %v566 = vlaneseq
    %v567 = vshrl.u32 %v566, 7
    %v568 = vsub.s32 %v565, %v567
    %v569 = vrot.slane %v185, %v568
    %v570 = vcombine.high %v569, %v569
    %v572 = vsel %vm417, %v570, 0
    %574 = vmatprep.subr.mxu0 %v247
    %575 = vmatpush1.msra.mxu0 %v246
    %576 = vmatprep.subr.mxu0 %v243
    %577 = vmatpush1.msra.mxu0 %v242
    %578 = vmatprep.subr.mxu0 %v239
    %579 = vmatpush1.msra.mxu0 %v238
    %580 = vmatprep.subr.mxu0 %v235
    %581 = vmatpush1.msra.mxu0 %v234
    %582 = vmatprep.subr.mxu0 %v231
    %583 = vmatpush1.msra.mxu0 %v230
    %584 = vmatprep.subr.mxu0 %v227
    %585 = vmatpush1.msra.mxu0 %v226
    %586 = vmatprep.subr.mxu0 %v223
    %587 = vmatpush1.msra.mxu0 %v222
    %588 = vmatprep.subr.mxu0 %v219
    %589 = vmatpush1.msra.mxu0 %v218
    %590 = vmatprep.subr.mxu0 %v215
    %591 = vmatpush1.msra.mxu0 %v214
    %592 = vmatprep.subr.mxu0 %v211
    %593 = vmatpush1.msra.mxu0 %v210
    %594 = vmatprep.subr.mxu0 %v207
    %595 = vmatpush1.msra.mxu0 %v206
    %596 = vmatprep.subr.mxu0 %v203
    %597 = vmatpush1.msra.mxu0 %v202
    %598 = vmatprep.subr.mxu0 %v199
    %599 = vmatpush1.msra.mxu0 %v198
    %600 = vmatprep.subr.mxu0 %v195
    %601 = vmatpush1.msra.mxu0 %v194
    %602 = vmatprep.subr.mxu0 %v191
    %603 = vmatpush1.msra.mxu0 %v190
    %604 = vmatprep.subr.mxu0 %v187
    %605 = vmatpush1.msra.mxu0 %v186
    %606 = vmatprep.subr.mxu0 0.0
    %607 = vmatpush2.msra.mxu0 0.0
    %608 = vmatprep.subr.mxu0 0.0
    %609 = vmatpush2.msra.mxu0 0.0
    %610 = vmatprep.subr.mxu0 0.0
    %611 = vmatpush2.msra.mxu0 0.0
    %612 = vmatprep.subr.mxu0 0.0
    %613 = vmatpush2.msra.mxu0 0.0
    %614 = vmatprep.subr.mxu0 0.0
    %615 = vmatpush2.msra.mxu0 0.0
    %616 = vmatprep.subr.mxu0 0.0
    %617 = vmatpush2.msra.mxu0 0.0
    %618 = vmatprep.subr.mxu0 0.0
    %619 = vmatpush2.msra.mxu0 0.0
    %620 = vmatprep.subr.mxu0 0.0
    %621 = vmatpush2.msra.mxu0 0.0
    %622 = vmatprep.subr.mxu0 %v279
    %623 = vmatpush2.msra.mxu0 %v278
    %624 = vmatprep.subr.mxu0 %v275
    %625 = vmatpush2.msra.mxu0 %v274
    %626 = vmatprep.subr.mxu0 %v271
    %627 = vmatpush2.msra.mxu0 %v270
    %628 = vmatprep.subr.mxu0 %v267
    %629 = vmatpush2.msra.mxu0 %v266
    %630 = vmatprep.subr.mxu0 %v263
    %631 = vmatpush2.msra.mxu0 %v262
    %632 = vmatprep.subr.mxu0 %v259
    %633 = vmatpush2.msra.mxu0 %v258
    %634 = vmatprep.subr.mxu0 %v255
    %635 = vmatpush2.msra.mxu0 %v254
    %636 = vmatprep.subr.mxu0 %v251
    %637 = vmatpush2.msra.mxu0 %v250
    %638 = vmatprep.mubr.f32.mxu0 %v572
    %639 = vmatmul.mubr.f32.gmra.mxu0 %v569
    %v640 = vpop.f32.mrf.mxu0
    %v641 = vadd.f32 %v487, %v640
    %v642 = vpop.f32.mrf.mxu0
    %v643 = vadd.f32 %v489, %v642
    %644 = vdwg.mxu0
    %645 = vmatprep.subr.mxu0 %v249
    %646 = vmatpush1.msra.mxu0 %v248
    %647 = vmatprep.subr.mxu0 %v245
    %648 = vmatpush1.msra.mxu0 %v244
    %649 = vmatprep.subr.mxu0 %v241
    %650 = vmatpush1.msra.mxu0 %v240
    %651 = vmatprep.subr.mxu0 %v237
    %652 = vmatpush1.msra.mxu0 %v236
    %653 = vmatprep.subr.mxu0 %v233
    %654 = vmatpush1.msra.mxu0 %v232
    %655 = vmatprep.subr.mxu0 %v229
    %656 = vmatpush1.msra.mxu0 %v228
    %657 = vmatprep.subr.mxu0 %v225
    %658 = vmatpush1.msra.mxu0 %v224
    %659 = vmatprep.subr.mxu0 %v221
    %660 = vmatpush1.msra.mxu0 %v220
    %661 = vmatprep.subr.mxu0 %v217
    %662 = vmatpush1.msra.mxu0 %v216
    %663 = vmatprep.subr.mxu0 %v213
    %664 = vmatpush1.msra.mxu0 %v212
    %665 = vmatprep.subr.mxu0 %v209
    %666 = vmatpush1.msra.mxu0 %v208
    %667 = vmatprep.subr.mxu0 %v205
    %668 = vmatpush1.msra.mxu0 %v204
    %669 = vmatprep.subr.mxu0 %v201
    %670 = vmatpush1.msra.mxu0 %v200
    %671 = vmatprep.subr.mxu0 %v197
    %672 = vmatpush1.msra.mxu0 %v196
    %673 = vmatprep.subr.mxu0 %v193
    %674 = vmatpush1.msra.mxu0 %v192
    %675 = vmatprep.subr.mxu0 %v189
    %676 = vmatpush1.msra.mxu0 %v188
    %677 = vmatprep.subr.mxu0 0.0
    %678 = vmatpush2.msra.mxu0 0.0
    %679 = vmatprep.subr.mxu0 0.0
    %680 = vmatpush2.msra.mxu0 0.0
    %681 = vmatprep.subr.mxu0 0.0
    %682 = vmatpush2.msra.mxu0 0.0
    %683 = vmatprep.subr.mxu0 0.0
    %684 = vmatpush2.msra.mxu0 0.0
    %685 = vmatprep.subr.mxu0 0.0
    %686 = vmatpush2.msra.mxu0 0.0
    %687 = vmatprep.subr.mxu0 0.0
    %688 = vmatpush2.msra.mxu0 0.0
    %689 = vmatprep.subr.mxu0 0.0
    %690 = vmatpush2.msra.mxu0 0.0
    %691 = vmatprep.subr.mxu0 0.0
    %692 = vmatpush2.msra.mxu0 0.0
    %693 = vmatprep.subr.mxu0 %v281
    %694 = vmatpush2.msra.mxu0 %v280
    %695 = vmatprep.subr.mxu0 %v277
    %696 = vmatpush2.msra.mxu0 %v276
    %697 = vmatprep.subr.mxu0 %v273
    %698 = vmatpush2.msra.mxu0 %v272
    %699 = vmatprep.subr.mxu0 %v269
    %700 = vmatpush2.msra.mxu0 %v268
    %701 = vmatprep.subr.mxu0 %v265
    %702 = vmatpush2.msra.mxu0 %v264
    %703 = vmatprep.subr.mxu0 %v261
    %704 = vmatpush2.msra.mxu0 %v260
    %705 = vmatprep.subr.mxu0 %v257
    %706 = vmatpush2.msra.mxu0 %v256
    %707 = vmatprep.subr.mxu0 %v253
    %708 = vmatpush2.msra.mxu0 %v252
    %709 = vmatprep.mubr.f32.mxu0 %v572
    %710 = vmatmul.mubr.f32.gmra.mxu0 %v569
    %v711 = vpop.f32.mrf.mxu0
    %v712 = vadd.f32 %v558, %v711
    %v713 = vpop.f32.mrf.mxu0
    %v714 = vadd.f32 %v560, %v713
    %715 = vdwg.mxu0
    %s716 = sld [smem:[#allocation2 + $0x100]]
    %v717 = vstv %s716
    %v718 = vmul.f32 %v155, %v717
    %v719 = vadd.f32 %v718, 0.0
    %s720 = sld [smem:[#allocation2 + $0x101]]
    %v721 = vstv %s720
    %v722 = vmul.f32 %v155, %v721
    %724 = vrot.lane.b32.xlu0 %v722, 127
    %v725 = vpop.permute.xlu0 %724
    %v726 = vrot.slane %v725, 2
    %v727 = vsel %vm167, %v725, %v726
    %v729 = vadd.f32 %v719, %v727
    %s730 = sld [smem:[#allocation2 + $0x102]]
    %v731 = vstv %s730
    %v732 = vmul.f32 %v155, %v731
    %734 = vrot.lane.b32.xlu0 %v732, 126
    %v735 = vpop.permute.xlu0 %734
    %v736 = vrot.slane %v735, 2
    %v737 = vsel %vm178, %v735, %v736
    %v739 = vadd.f32 %v729, %v737
    %s740 = sld [smem:[#allocation6 + $0x2]]
    %v741 = vstv %s740
    %v742 = vadd.f32 %v739, %v741
    %v743 = vmax.f32 %v742, 0.0
    %s744 = scalar_lea.vmem [#allocation7], 1536
    %v745 = vld [vmem:[%s744] sm:$0xff]
    %v746 = vld [vmem:[%s744 + $0x8] sm:$0xff]
    %v747 = vld [vmem:[%s744 + $0x10] sm:$0xff]
    %v748 = vld [vmem:[%s744 + $0x18] sm:$0xff]
    %v749 = vld [vmem:[%s744 + $0x20] sm:$0xff]
    %v750 = vld [vmem:[%s744 + $0x28] sm:$0xff]
    %v751 = vld [vmem:[%s744 + $0x30] sm:$0xff]
    %v752 = vld [vmem:[%s744 + $0x38] sm:$0xff]
    %v753 = vld [vmem:[%s744 + $0x40] sm:$0xff]
    %v754 = vld [vmem:[%s744 + $0x48] sm:$0xff]
    %v755 = vld [vmem:[%s744 + $0x50] sm:$0xff]
    %v756 = vld [vmem:[%s744 + $0x58] sm:$0xff]
    %v757 = vld [vmem:[%s744 + $0x60] sm:$0xff]
    %v758 = vld [vmem:[%s744 + $0x68] sm:$0xff]
    %v759 = vld [vmem:[%s744 + $0x70] sm:$0xff]
    %v760 = vld [vmem:[%s744 + $0x78] sm:$0xff]
    %v761 = vld [vmem:[%s744 + $0x80] sm:$0xff]
    %v762 = vld [vmem:[%s744 + $0x88] sm:$0xff]
    %v763 = vld [vmem:[%s744 + $0x90] sm:$0xff]
    %v764 = vld [vmem:[%s744 + $0x98] sm:$0xff]
    %v765 = vld [vmem:[%s744 + $0xa0] sm:$0xff]
    %v766 = vld [vmem:[%s744 + $0xa8] sm:$0xff]
    %v767 = vld [vmem:[%s744 + $0xb0] sm:$0xff]
    %v768 = vld [vmem:[%s744 + $0xb8] sm:$0xff]
    %v769 = vld [vmem:[%s744 + $0xc0] sm:$0xff]
    %v770 = vld [vmem:[%s744 + $0xc8] sm:$0xff]
    %v771 = vld [vmem:[%s744 + $0xd0] sm:$0xff]
    %v772 = vld [vmem:[%s744 + $0xd8] sm:$0xff]
    %v773 = vld [vmem:[%s744 + $0xe0] sm:$0xff]
    %v774 = vld [vmem:[%s744 + $0xe8] sm:$0xff]
    %v775 = vld [vmem:[%s744 + $0xf0] sm:$0xff]
    %v776 = vld [vmem:[%s744 + $0xf8] sm:$0xff]
    %v777 = vld [vmem:[%s744 + $0x100] sm:$0xff]
    %v778 = vld [vmem:[%s744 + $0x108] sm:$0xff]
    %v779 = vld [vmem:[%s744 + $0x110] sm:$0xff]
    %v780 = vld [vmem:[%s744 + $0x118] sm:$0xff]
    %v781 = vld [vmem:[%s744 + $0x120] sm:$0xff]
    %v782 = vld [vmem:[%s744 + $0x128] sm:$0xff]
    %v783 = vld [vmem:[%s744 + $0x130] sm:$0xff]
    %v784 = vld [vmem:[%s744 + $0x138] sm:$0xff]
    %v785 = vld [vmem:[%s744 + $0x140] sm:$0xff]
    %v786 = vld [vmem:[%s744 + $0x148] sm:$0xff]
    %v787 = vld [vmem:[%s744 + $0x150] sm:$0xff]
    %v788 = vld [vmem:[%s744 + $0x158] sm:$0xff]
    %v789 = vld [vmem:[%s744 + $0x160] sm:$0xff]
    %v790 = vld [vmem:[%s744 + $0x168] sm:$0xff]
    %v791 = vld [vmem:[%s744 + $0x170] sm:$0xff]
    %v792 = vld [vmem:[%s744 + $0x178] sm:$0xff]
    %v793 = vld [vmem:[%s744 + $0x180] sm:$0xff]
    %v794 = vld [vmem:[%s744 + $0x188] sm:$0xff]
    %v795 = vld [vmem:[%s744 + $0x190] sm:$0xff]
    %v796 = vld [vmem:[%s744 + $0x198] sm:$0xff]
    %v797 = vld [vmem:[%s744 + $0x1a0] sm:$0xff]
    %v798 = vld [vmem:[%s744 + $0x1a8] sm:$0xff]
    %v799 = vld [vmem:[%s744 + $0x1b0] sm:$0xff]
    %v800 = vld [vmem:[%s744 + $0x1b8] sm:$0xff]
    %v801 = vld [vmem:[%s744 + $0x1c0] sm:$0xff]
    %v802 = vld [vmem:[%s744 + $0x1c8] sm:$0xff]
    %v803 = vld [vmem:[%s744 + $0x1d0] sm:$0xff]
    %v804 = vld [vmem:[%s744 + $0x1d8] sm:$0xff]
    %v805 = vld [vmem:[%s744 + $0x1e0] sm:$0xff]
    %v806 = vld [vmem:[%s744 + $0x1e8] sm:$0xff]
    %v807 = vld [vmem:[%s744 + $0x1f0] sm:$0xff]
    %v808 = vld [vmem:[%s744 + $0x1f8] sm:$0xff]
    %v809 = vld [vmem:[%s744 + $0x200] sm:$0xff]
    %v810 = vld [vmem:[%s744 + $0x208] sm:$0xff]
    %v811 = vld [vmem:[%s744 + $0x210] sm:$0xff]
    %v812 = vld [vmem:[%s744 + $0x218] sm:$0xff]
    %v813 = vld [vmem:[%s744 + $0x220] sm:$0xff]
    %v814 = vld [vmem:[%s744 + $0x228] sm:$0xff]
    %v815 = vld [vmem:[%s744 + $0x230] sm:$0xff]
    %v816 = vld [vmem:[%s744 + $0x238] sm:$0xff]
    %v817 = vld [vmem:[%s744 + $0x240] sm:$0xff]
    %v818 = vld [vmem:[%s744 + $0x248] sm:$0xff]
    %v819 = vld [vmem:[%s744 + $0x250] sm:$0xff]
    %v820 = vld [vmem:[%s744 + $0x258] sm:$0xff]
    %v821 = vld [vmem:[%s744 + $0x260] sm:$0xff]
    %v822 = vld [vmem:[%s744 + $0x268] sm:$0xff]
    %v823 = vld [vmem:[%s744 + $0x270] sm:$0xff]
    %v824 = vld [vmem:[%s744 + $0x278] sm:$0xff]
    %v825 = vld [vmem:[%s744 + $0x280] sm:$0xff]
    %v826 = vld [vmem:[%s744 + $0x288] sm:$0xff]
    %v827 = vld [vmem:[%s744 + $0x290] sm:$0xff]
    %v828 = vld [vmem:[%s744 + $0x298] sm:$0xff]
    %v829 = vld [vmem:[%s744 + $0x2a0] sm:$0xff]
    %v830 = vld [vmem:[%s744 + $0x2a8] sm:$0xff]
    %v831 = vld [vmem:[%s744 + $0x2b0] sm:$0xff]
    %v832 = vld [vmem:[%s744 + $0x2b8] sm:$0xff]
    %v833 = vld [vmem:[%s744 + $0x2c0] sm:$0xff]
    %v834 = vld [vmem:[%s744 + $0x2c8] sm:$0xff]
    %v835 = vld [vmem:[%s744 + $0x2d0] sm:$0xff]
    %v836 = vld [vmem:[%s744 + $0x2d8] sm:$0xff]
    %v837 = vld [vmem:[%s744 + $0x2e0] sm:$0xff]
    %v838 = vld [vmem:[%s744 + $0x2e8] sm:$0xff]
    %v839 = vld [vmem:[%s744 + $0x2f0] sm:$0xff]
    %v840 = vld [vmem:[%s744 + $0x2f8] sm:$0xff]
    %v843 = vunpack.c.l.s4 1983009808
    %v844 = vunpack.c.0.s8 %v843
    %v845 = vlaneseq
    %v846 = vshrl.u32 %v845, 7
    %v847 = vsub.s32 %v844, %v846
    %v848 = vrot.slane %v743, %v847
    %v849 = vcombine.high %v848, %v848
    %v851 = vsel %vm417, %v849, 0
    %853 = vmatprep.subr.mxu0 %v806
    %854 = vmatpush1.msra.mxu0 %v805
    %855 = vmatprep.subr.mxu0 %v802
    %856 = vmatpush1.msra.mxu0 %v801
    %857 = vmatprep.subr.mxu0 %v798
    %858 = vmatpush1.msra.mxu0 %v797
    %859 = vmatprep.subr.mxu0 %v794
    %860 = vmatpush1.msra.mxu0 %v793
    %861 = vmatprep.subr.mxu0 %v790
    %862 = vmatpush1.msra.mxu0 %v789
    %863 = vmatprep.subr.mxu0 %v786
    %864 = vmatpush1.msra.mxu0 %v785
    %865 = vmatprep.subr.mxu0 %v782
    %866 = vmatpush1.msra.mxu0 %v781
    %867 = vmatprep.subr.mxu0 %v778
    %868 = vmatpush1.msra.mxu0 %v777
    %869 = vmatprep.subr.mxu0 %v774
    %870 = vmatpush1.msra.mxu0 %v773
    %871 = vmatprep.subr.mxu0 %v770
    %872 = vmatpush1.msra.mxu0 %v769
    %873 = vmatprep.subr.mxu0 %v766
    %874 = vmatpush1.msra.mxu0 %v765
    %875 = vmatprep.subr.mxu0 %v762
    %876 = vmatpush1.msra.mxu0 %v761
    %877 = vmatprep.subr.mxu0 %v758
    %878 = vmatpush1.msra.mxu0 %v757
    %879 = vmatprep.subr.mxu0 %v754
    %880 = vmatpush1.msra.mxu0 %v753
    %881 = vmatprep.subr.mxu0 %v750
    %882 = vmatpush1.msra.mxu0 %v749
    %883 = vmatprep.subr.mxu0 %v746
    %884 = vmatpush1.msra.mxu0 %v745
    %885 = vmatprep.subr.mxu0 0.0
    %886 = vmatpush2.msra.mxu0 0.0
    %887 = vmatprep.subr.mxu0 0.0
    %888 = vmatpush2.msra.mxu0 0.0
    %889 = vmatprep.subr.mxu0 0.0
    %890 = vmatpush2.msra.mxu0 0.0
    %891 = vmatprep.subr.mxu0 0.0
    %892 = vmatpush2.msra.mxu0 0.0
    %893 = vmatprep.subr.mxu0 0.0
    %894 = vmatpush2.msra.mxu0 0.0
    %895 = vmatprep.subr.mxu0 0.0
    %896 = vmatpush2.msra.mxu0 0.0
    %897 = vmatprep.subr.mxu0 0.0
    %898 = vmatpush2.msra.mxu0 0.0
    %899 = vmatprep.subr.mxu0 0.0
    %900 = vmatpush2.msra.mxu0 0.0
    %901 = vmatprep.subr.mxu0 %v838
    %902 = vmatpush2.msra.mxu0 %v837
    %903 = vmatprep.subr.mxu0 %v834
    %904 = vmatpush2.msra.mxu0 %v833
    %905 = vmatprep.subr.mxu0 %v830
    %906 = vmatpush2.msra.mxu0 %v829
    %907 = vmatprep.subr.mxu0 %v826
    %908 = vmatpush2.msra.mxu0 %v825
    %909 = vmatprep.subr.mxu0 %v822
    %910 = vmatpush2.msra.mxu0 %v821
    %911 = vmatprep.subr.mxu0 %v818
    %912 = vmatpush2.msra.mxu0 %v817
    %913 = vmatprep.subr.mxu0 %v814
    %914 = vmatpush2.msra.mxu0 %v813
    %915 = vmatprep.subr.mxu0 %v810
    %916 = vmatpush2.msra.mxu0 %v809
    %917 = vmatprep.mubr.f32.mxu0 %v851
    %918 = vmatmul.mubr.f32.gmra.mxu0 %v848
    %v919 = vpop.f32.mrf.mxu0
    %v920 = vadd.f32 0.0, %v919
    %v921 = vpop.f32.mrf.mxu0
    %v922 = vadd.f32 0.0, %v921
    %923 = vdwg.mxu0
    %924 = vmatprep.subr.mxu0 %v808
    %925 = vmatpush1.msra.mxu0 %v807
    %926 = vmatprep.subr.mxu0 %v804
    %927 = vmatpush1.msra.mxu0 %v803
    %928 = vmatprep.subr.mxu0 %v800
    %929 = vmatpush1.msra.mxu0 %v799
    %930 = vmatprep.subr.mxu0 %v796
    %931 = vmatpush1.msra.mxu0 %v795
    %932 = vmatprep.subr.mxu0 %v792
    %933 = vmatpush1.msra.mxu0 %v791
    %934 = vmatprep.subr.mxu0 %v788
    %935 = vmatpush1.msra.mxu0 %v787
    %936 = vmatprep.subr.mxu0 %v784
    %937 = vmatpush1.msra.mxu0 %v783
    %938 = vmatprep.subr.mxu0 %v780
    %939 = vmatpush1.msra.mxu0 %v779
    %940 = vmatprep.subr.mxu0 %v776
    %941 = vmatpush1.msra.mxu0 %v775
    %942 = vmatprep.subr.mxu0 %v772
    %943 = vmatpush1.msra.mxu0 %v771
    %944 = vmatprep.subr.mxu0 %v768
    %945 = vmatpush1.msra.mxu0 %v767
    %946 = vmatprep.subr.mxu0 %v764
    %947 = vmatpush1.msra.mxu0 %v763
    %948 = vmatprep.subr.mxu0 %v760
    %949 = vmatpush1.msra.mxu0 %v759
    %950 = vmatprep.subr.mxu0 %v756
    %951 = vmatpush1.msra.mxu0 %v755
    %952 = vmatprep.subr.mxu0 %v752
    %953 = vmatpush1.msra.mxu0 %v751
    %954 = vmatprep.subr.mxu0 %v748
    %955 = vmatpush1.msra.mxu0 %v747
    %956 = vmatprep.subr.mxu0 0.0
    %957 = vmatpush2.msra.mxu0 0.0
    %958 = vmatprep.subr.mxu0 0.0
    %959 = vmatpush2.msra.mxu0 0.0
    %960 = vmatprep.subr.mxu0 0.0
    %961 = vmatpush2.msra.mxu0 0.0
    %962 = vmatprep.subr.mxu0 0.0
    %963 = vmatpush2.msra.mxu0 0.0
    %964 = vmatprep.subr.mxu0 0.0
    %965 = vmatpush2.msra.mxu0 0.0
    %966 = vmatprep.subr.mxu0 0.0
    %967 = vmatpush2.msra.mxu0 0.0
    %968 = vmatprep.subr.mxu0 0.0
    %969 = vmatpush2.msra.mxu0 0.0
    %970 = vmatprep.subr.mxu0 0.0
    %971 = vmatpush2.msra.mxu0 0.0
    %972 = vmatprep.subr.mxu0 %v840
    %973 = vmatpush2.msra.mxu0 %v839
    %974 = vmatprep.subr.mxu0 %v836
    %975 = vmatpush2.msra.mxu0 %v835
    %976 = vmatprep.subr.mxu0 %v832
    %977 = vmatpush2.msra.mxu0 %v831
    %978 = vmatprep.subr.mxu0 %v828
    %979 = vmatpush2.msra.mxu0 %v827
    %980 = vmatprep.subr.mxu0 %v824
    %981 = vmatpush2.msra.mxu0 %v823
    %982 = vmatprep.subr.mxu0 %v820
    %983 = vmatpush2.msra.mxu0 %v819
    %984 = vmatprep.subr.mxu0 %v816
    %985 = vmatpush2.msra.mxu0 %v815
    %986 = vmatprep.subr.mxu0 %v812
    %987 = vmatpush2.msra.mxu0 %v811
    %988 = vmatprep.mubr.f32.mxu0 %v851
    %989 = vmatmul.mubr.f32.gmra.mxu0 %v848
    %v990 = vpop.f32.mrf.mxu0
    %v991 = vadd.f32 0.0, %v990
    %v992 = vpop.f32.mrf.mxu0
    %v993 = vadd.f32 0.0, %v992
    %994 = vdwg.mxu0
    %v995 = vadd.f32 %v641, %v920
    %v996 = vadd.f32 %v643, %v922
    %v997 = vadd.f32 %v712, %v991
    %v998 = vadd.f32 %v714, %v993
    %s999 = sld [smem:[#allocation2 + $0x180]]
    %v1000 = vstv %s999
    %v1001 = vmul.f32 %v155, %v1000
    %v1002 = vadd.f32 %v1001, 0.0
    %s1003 = sld [smem:[#allocation2 + $0x181]]
    %v1004 = vstv %s1003
    %v1005 = vmul.f32 %v155, %v1004
    %1007 = vrot.lane.b32.xlu0 %v1005, 127
    %v1008 = vpop.permute.xlu0 %1007
    %v1009 = vrot.slane %v1008, 2
    %v1010 = vsel %vm167, %v1008, %v1009
    %v1012 = vadd.f32 %v1002, %v1010
    %s1013 = sld [smem:[#allocation2 + $0x182]]
    %v1014 = vstv %s1013
    %v1015 = vmul.f32 %v155, %v1014
    %1017 = vrot.lane.b32.xlu0 %v1015, 126
    %v1018 = vpop.permute.xlu0 %1017
    %v1019 = vrot.slane %v1018, 2
    %v1020 = vsel %vm178, %v1018, %v1019
    %v1022 = vadd.f32 %v1012, %v1020
    %s1023 = sld [smem:[#allocation6 + $0x3]]
    %v1024 = vstv %s1023
    %v1025 = vadd.f32 %v1022, %v1024
    %v1026 = vmax.f32 %v1025, 0.0
    %s1027 = scalar_lea.vmem [#allocation7], 2304
    %v1028 = vld [vmem:[%s1027] sm:$0xff]
    %v1029 = vld [vmem:[%s1027 + $0x8] sm:$0xff]
    %v1030 = vld [vmem:[%s1027 + $0x10] sm:$0xff]
    %v1031 = vld [vmem:[%s1027 + $0x18] sm:$0xff]
    %v1032 = vld [vmem:[%s1027 + $0x20] sm:$0xff]
    %v1033 = vld [vmem:[%s1027 + $0x28] sm:$0xff]
    %v1034 = vld [vmem:[%s1027 + $0x30] sm:$0xff]
    %v1035 = vld [vmem:[%s1027 + $0x38] sm:$0xff]
    %v1036 = vld [vmem:[%s1027 + $0x40] sm:$0xff]
    %v1037 = vld [vmem:[%s1027 + $0x48] sm:$0xff]
    %v1038 = vld [vmem:[%s1027 + $0x50] sm:$0xff]
    %v1039 = vld [vmem:[%s1027 + $0x58] sm:$0xff]
    %v1040 = vld [vmem:[%s1027 + $0x60] sm:$0xff]
    %v1041 = vld [vmem:[%s1027 + $0x68] sm:$0xff]
    %v1042 = vld [vmem:[%s1027 + $0x70] sm:$0xff]
    %v1043 = vld [vmem:[%s1027 + $0x78] sm:$0xff]
    %v1044 = vld [vmem:[%s1027 + $0x80] sm:$0xff]
    %v1045 = vld [vmem:[%s1027 + $0x88] sm:$0xff]
    %v1046 = vld [vmem:[%s1027 + $0x90] sm:$0xff]
    %v1047 = vld [vmem:[%s1027 + $0x98] sm:$0xff]
    %v1048 = vld [vmem:[%s1027 + $0xa0] sm:$0xff]
    %v1049 = vld [vmem:[%s1027 + $0xa8] sm:$0xff]
    %v1050 = vld [vmem:[%s1027 + $0xb0] sm:$0xff]
    %v1051 = vld [vmem:[%s1027 + $0xb8] sm:$0xff]
    %v1052 = vld [vmem:[%s1027 + $0xc0] sm:$0xff]
    %v1053 = vld [vmem:[%s1027 + $0xc8] sm:$0xff]
    %v1054 = vld [vmem:[%s1027 + $0xd0] sm:$0xff]
    %v1055 = vld [vmem:[%s1027 + $0xd8] sm:$0xff]
    %v1056 = vld [vmem:[%s1027 + $0xe0] sm:$0xff]
    %v1057 = vld [vmem:[%s1027 + $0xe8] sm:$0xff]
    %v1058 = vld [vmem:[%s1027 + $0xf0] sm:$0xff]
    %v1059 = vld [vmem:[%s1027 + $0xf8] sm:$0xff]
    %v1060 = vld [vmem:[%s1027 + $0x100] sm:$0xff]
    %v1061 = vld [vmem:[%s1027 + $0x108] sm:$0xff]
    %v1062 = vld [vmem:[%s1027 + $0x110] sm:$0xff]
    %v1063 = vld [vmem:[%s1027 + $0x118] sm:$0xff]
    %v1064 = vld [vmem:[%s1027 + $0x120] sm:$0xff]
    %v1065 = vld [vmem:[%s1027 + $0x128] sm:$0xff]
    %v1066 = vld [vmem:[%s1027 + $0x130] sm:$0xff]
    %v1067 = vld [vmem:[%s1027 + $0x138] sm:$0xff]
    %v1068 = vld [vmem:[%s1027 + $0x140] sm:$0xff]
    %v1069 = vld [vmem:[%s1027 + $0x148] sm:$0xff]
    %v1070 = vld [vmem:[%s1027 + $0x150] sm:$0xff]
    %v1071 = vld [vmem:[%s1027 + $0x158] sm:$0xff]
    %v1072 = vld [vmem:[%s1027 + $0x160] sm:$0xff]
    %v1073 = vld [vmem:[%s1027 + $0x168] sm:$0xff]
    %v1074 = vld [vmem:[%s1027 + $0x170] sm:$0xff]
    %v1075 = vld [vmem:[%s1027 + $0x178] sm:$0xff]
    %v1076 = vld [vmem:[%s1027 + $0x180] sm:$0xff]
    %v1077 = vld [vmem:[%s1027 + $0x188] sm:$0xff]
    %v1078 = vld [vmem:[%s1027 + $0x190] sm:$0xff]
    %v1079 = vld [vmem:[%s1027 + $0x198] sm:$0xff]
    %v1080 = vld [vmem:[%s1027 + $0x1a0] sm:$0xff]
    %v1081 = vld [vmem:[%s1027 + $0x1a8] sm:$0xff]
    %v1082 = vld [vmem:[%s1027 + $0x1b0] sm:$0xff]
    %v1083 = vld [vmem:[%s1027 + $0x1b8] sm:$0xff]
    %v1084 = vld [vmem:[%s1027 + $0x1c0] sm:$0xff]
    %v1085 = vld [vmem:[%s1027 + $0x1c8] sm:$0xff]
    %v1086 = vld [vmem:[%s1027 + $0x1d0] sm:$0xff]
    %v1087 = vld [vmem:[%s1027 + $0x1d8] sm:$0xff]
    %v1088 = vld [vmem:[%s1027 + $0x1e0] sm:$0xff]
    %v1089 = vld [vmem:[%s1027 + $0x1e8] sm:$0xff]
    %v1090 = vld [vmem:[%s1027 + $0x1f0] sm:$0xff]
    %v1091 = vld [vmem:[%s1027 + $0x1f8] sm:$0xff]
    %v1092 = vld [vmem:[%s1027 + $0x200] sm:$0xff]
    %v1093 = vld [vmem:[%s1027 + $0x208] sm:$0xff]
    %v1094 = vld [vmem:[%s1027 + $0x210] sm:$0xff]
    %v1095 = vld [vmem:[%s1027 + $0x218] sm:$0xff]
    %v1096 = vld [vmem:[%s1027 + $0x220] sm:$0xff]
    %v1097 = vld [vmem:[%s1027 + $0x228] sm:$0xff]
    %v1098 = vld [vmem:[%s1027 + $0x230] sm:$0xff]
    %v1099 = vld [vmem:[%s1027 + $0x238] sm:$0xff]
    %v1100 = vld [vmem:[%s1027 + $0x240] sm:$0xff]
    %v1101 = vld [vmem:[%s1027 + $0x248] sm:$0xff]
    %v1102 = vld [vmem:[%s1027 + $0x250] sm:$0xff]
    %v1103 = vld [vmem:[%s1027 + $0x258] sm:$0xff]
    %v1104 = vld [vmem:[%s1027 + $0x260] sm:$0xff]
    %v1105 = vld [vmem:[%s1027 + $0x268] sm:$0xff]
    %v1106 = vld [vmem:[%s1027 + $0x270] sm:$0xff]
    %v1107 = vld [vmem:[%s1027 + $0x278] sm:$0xff]
    %v1108 = vld [vmem:[%s1027 + $0x280] sm:$0xff]
    %v1109 = vld [vmem:[%s1027 + $0x288] sm:$0xff]
    %v1110 = vld [vmem:[%s1027 + $0x290] sm:$0xff]
    %v1111 = vld [vmem:[%s1027 + $0x298] sm:$0xff]
    %v1112 = vld [vmem:[%s1027 + $0x2a0] sm:$0xff]
    %v1113 = vld [vmem:[%s1027 + $0x2a8] sm:$0xff]
    %v1114 = vld [vmem:[%s1027 + $0x2b0] sm:$0xff]
    %v1115 = vld [vmem:[%s1027 + $0x2b8] sm:$0xff]
    %v1116 = vld [vmem:[%s1027 + $0x2c0] sm:$0xff]
    %v1117 = vld [vmem:[%s1027 + $0x2c8] sm:$0xff]
    %v1118 = vld [vmem:[%s1027 + $0x2d0] sm:$0xff]
    %v1119 = vld [vmem:[%s1027 + $0x2d8] sm:$0xff]
    %v1120 = vld [vmem:[%s1027 + $0x2e0] sm:$0xff]
    %v1121 = vld [vmem:[%s1027 + $0x2e8] sm:$0xff]
    %v1122 = vld [vmem:[%s1027 + $0x2f0] sm:$0xff]
    %v1123 = vld [vmem:[%s1027 + $0x2f8] sm:$0xff]
    %v1126 = vunpack.c.l.s4 1983009808
    %v1127 = vunpack.c.0.s8 %v1126
    %v1128 = vlaneseq
    %v1129 = vshrl.u32 %v1128, 7
    %v1130 = vsub.s32 %v1127, %v1129
    %v1131 = vrot.slane %v1026, %v1130
    %v1132 = vcombine.high %v1131, %v1131
    %v1134 = vsel %vm417, %v1132, 0
    %1136 = vmatprep.subr.mxu0 %v1089
    %1137 = vmatpush1.msra.mxu0 %v1088
    %1138 = vmatprep.subr.mxu0 %v1085
    %1139 = vmatpush1.msra.mxu0 %v1084
    %1140 = vmatprep.subr.mxu0 %v1081
    %1141 = vmatpush1.msra.mxu0 %v1080
    %1142 = vmatprep.subr.mxu0 %v1077
    %1143 = vmatpush1.msra.mxu0 %v1076
    %1144 = vmatprep.subr.mxu0 %v1073
    %1145 = vmatpush1.msra.mxu0 %v1072
    %1146 = vmatprep.subr.mxu0 %v1069
    %1147 = vmatpush1.msra.mxu0 %v1068
    %1148 = vmatprep.subr.mxu0 %v1065
    %1149 = vmatpush1.msra.mxu0 %v1064
    %1150 = vmatprep.subr.mxu0 %v1061
    %1151 = vmatpush1.msra.mxu0 %v1060
    %1152 = vmatprep.subr.mxu0 %v1057
    %1153 = vmatpush1.msra.mxu0 %v1056
    %1154 = vmatprep.subr.mxu0 %v1053
    %1155 = vmatpush1.msra.mxu0 %v1052
    %1156 = vmatprep.subr.mxu0 %v1049
    %1157 = vmatpush1.msra.mxu0 %v1048
    %1158 = vmatprep.subr.mxu0 %v1045
    %1159 = vmatpush1.msra.mxu0 %v1044
    %1160 = vmatprep.subr.mxu0 %v1041
    %1161 = vmatpush1.msra.mxu0 %v1040
    %1162 = vmatprep.subr.mxu0 %v1037
    %1163 = vmatpush1.msra.mxu0 %v1036
    %1164 = vmatprep.subr.mxu0 %v1033
    %1165 = vmatpush1.msra.mxu0 %v1032
    %1166 = vmatprep.subr.mxu0 %v1029
    %1167 = vmatpush1.msra.mxu0 %v1028
    %1168 = vmatprep.subr.mxu0 0.0
    %1169 = vmatpush2.msra.mxu0 0.0
    %1170 = vmatprep.subr.mxu0 0.0
    %1171 = vmatpush2.msra.mxu0 0.0
    %1172 = vmatprep.subr.mxu0 0.0
    %1173 = vmatpush2.msra.mxu0 0.0
    %1174 = vmatprep.subr.mxu0 0.0
    %1175 = vmatpush2.msra.mxu0 0.0
    %1176 = vmatprep.subr.mxu0 0.0
    %1177 = vmatpush2.msra.mxu0 0.0
    %1178 = vmatprep.subr.mxu0 0.0
    %1179 = vmatpush2.msra.mxu0 0.0
    %1180 = vmatprep.subr.mxu0 0.0
    %1181 = vmatpush2.msra.mxu0 0.0
    %1182 = vmatprep.subr.mxu0 0.0
    %1183 = vmatpush2.msra.mxu0 0.0
    %1184 = vmatprep.subr.mxu0 %v1121
    %1185 = vmatpush2.msra.mxu0 %v1120
    %1186 = vmatprep.subr.mxu0 %v1117
    %1187 = vmatpush2.msra.mxu0 %v1116
    %1188 = vmatprep.subr.mxu0 %v1113
    %1189 = vmatpush2.msra.mxu0 %v1112
    %1190 = vmatprep.subr.mxu0 %v1109
    %1191 = vmatpush2.msra.mxu0 %v1108
    %1192 = vmatprep.subr.mxu0 %v1105
    %1193 = vmatpush2.msra.mxu0 %v1104
    %1194 = vmatprep.subr.mxu0 %v1101
    %1195 = vmatpush2.msra.mxu0 %v1100
    %1196 = vmatprep.subr.mxu0 %v1097
    %1197 = vmatpush2.msra.mxu0 %v1096
    %1198 = vmatprep.subr.mxu0 %v1093
    %1199 = vmatpush2.msra.mxu0 %v1092
    %1200 = vmatprep.mubr.f32.mxu0 %v1134
    %1201 = vmatmul.mubr.f32.gmra.mxu0 %v1131
    %v1202 = vpop.f32.mrf.mxu0
    %v1203 = vadd.f32 0.0, %v1202
    %v1204 = vpop.f32.mrf.mxu0
    %v1205 = vadd.f32 0.0, %v1204
    %1206 = vdwg.mxu0
    %1207 = vmatprep.subr.mxu0 %v1091
    %1208 = vmatpush1.msra.mxu0 %v1090
    %1209 = vmatprep.subr.mxu0 %v1087
    %1210 = vmatpush1.msra.mxu0 %v1086
    %1211 = vmatprep.subr.mxu0 %v1083
    %1212 = vmatpush1.msra.mxu0 %v1082
    %1213 = vmatprep.subr.mxu0 %v1079
    %1214 = vmatpush1.msra.mxu0 %v1078
    %1215 = vmatprep.subr.mxu0 %v1075
    %1216 = vmatpush1.msra.mxu0 %v1074
    %1217 = vmatprep.subr.mxu0 %v1071
    %1218 = vmatpush1.msra.mxu0 %v1070
    %1219 = vmatprep.subr.mxu0 %v1067
    %1220 = vmatpush1.msra.mxu0 %v1066
    %1221 = vmatprep.subr.mxu0 %v1063
    %1222 = vmatpush1.msra.mxu0 %v1062
    %1223 = vmatprep.subr.mxu0 %v1059
    %1224 = vmatpush1.msra.mxu0 %v1058
    %1225 = vmatprep.subr.mxu0 %v1055
    %1226 = vmatpush1.msra.mxu0 %v1054
    %1227 = vmatprep.subr.mxu0 %v1051
    %1228 = vmatpush1.msra.mxu0 %v1050
    %1229 = vmatprep.subr.mxu0 %v1047
    %1230 = vmatpush1.msra.mxu0 %v1046
    %1231 = vmatprep.subr.mxu0 %v1043
    %1232 = vmatpush1.msra.mxu0 %v1042
    %1233 = vmatprep.subr.mxu0 %v1039
    %1234 = vmatpush1.msra.mxu0 %v1038
    %1235 = vmatprep.subr.mxu0 %v1035
    %1236 = vmatpush1.msra.mxu0 %v1034
    %1237 = vmatprep.subr.mxu0 %v1031
    %1238 = vmatpush1.msra.mxu0 %v1030
    %1239 = vmatprep.subr.mxu0 0.0
    %1240 = vmatpush2.msra.mxu0 0.0
    %1241 = vmatprep.subr.mxu0 0.0
    %1242 = vmatpush2.msra.mxu0 0.0
    %1243 = vmatprep.subr.mxu0 0.0
    %1244 = vmatpush2.msra.mxu0 0.0
    %1245 = vmatprep.subr.mxu0 0.0
    %1246 = vmatpush2.msra.mxu0 0.0
    %1247 = vmatprep.subr.mxu0 0.0
    %1248 = vmatpush2.msra.mxu0 0.0
    %1249 = vmatprep.subr.mxu0 0.0
    %1250 = vmatpush2.msra.mxu0 0.0
    %1251 = vmatprep.subr.mxu0 0.0
    %1252 = vmatpush2.msra.mxu0 0.0
    %1253 = vmatprep.subr.mxu0 0.0
    %1254 = vmatpush2.msra.mxu0 0.0
    %1255 = vmatprep.subr.mxu0 %v1123
    %1256 = vmatpush2.msra.mxu0 %v1122
    %1257 = vmatprep.subr.mxu0 %v1119
    %1258 = vmatpush2.msra.mxu0 %v1118
    %1259 = vmatprep.subr.mxu0 %v1115
    %1260 = vmatpush2.msra.mxu0 %v1114
    %1261 = vmatprep.subr.mxu0 %v1111
    %1262 = vmatpush2.msra.mxu0 %v1110
    %1263 = vmatprep.subr.mxu0 %v1107
    %1264 = vmatpush2.msra.mxu0 %v1106
    %1265 = vmatprep.subr.mxu0 %v1103
    %1266 = vmatpush2.msra.mxu0 %v1102
    %1267 = vmatprep.subr.mxu0 %v1099
    %1268 = vmatpush2.msra.mxu0 %v1098
    %1269 = vmatprep.subr.mxu0 %v1095
    %1270 = vmatpush2.msra.mxu0 %v1094
    %1271 = vmatprep.mubr.f32.mxu0 %v1134
    %1272 = vmatmul.mubr.f32.gmra.mxu0 %v1131
    %v1273 = vpop.f32.mrf.mxu0
    %v1274 = vadd.f32 0.0, %v1273
    %v1275 = vpop.f32.mrf.mxu0
    %v1276 = vadd.f32 0.0, %v1275
    %1277 = vdwg.mxu0
    %v1278 = vadd.f32 %v995, %v1203
    %v1279 = vadd.f32 %v996, %v1205
    %v1280 = vadd.f32 %v997, %v1274
    %v1281 = vadd.f32 %v998, %v1276
    %s1282 = sld [smem:[#allocation2 + $0x200]]
    %v1283 = vstv %s1282
    %v1284 = vmul.f32 %v155, %v1283
    %v1285 = vadd.f32 %v1284, 0.0
    %s1286 = sld [smem:[#allocation2 + $0x201]]
    %v1287 = vstv %s1286
    %v1288 = vmul.f32 %v155, %v1287
    %1290 = vrot.lane.b32.xlu0 %v1288, 127
    %v1291 = vpop.permute.xlu0 %1290
    %v1292 = vrot.slane %v1291, 2
    %v1293 = vsel %vm167, %v1291, %v1292
    %v1295 = vadd.f32 %v1285, %v1293
    %s1296 = sld [smem:[#allocation2 + $0x202]]
    %v1297 = vstv %s1296
    %v1298 = vmul.f32 %v155, %v1297
    %1300 = vrot.lane.b32.xlu0 %v1298, 126
    %v1301 = vpop.permute.xlu0 %1300
    %v1302 = vrot.slane %v1301, 2
    %v1303 = vsel %vm178, %v1301, %v1302
    %v1305 = vadd.f32 %v1295, %v1303
    %s1306 = sld [smem:[#allocation6 + $0x4]]
    %v1307 = vstv %s1306
    %v1308 = vadd.f32 %v1305, %v1307
    %v1309 = vmax.f32 %v1308, 0.0
    %s1310 = scalar_lea.vmem [#allocation7], 3072
    %v1311 = vld [vmem:[%s1310] sm:$0xff]
    %v1312 = vld [vmem:[%s1310 + $0x8] sm:$0xff]
    %v1313 = vld [vmem:[%s1310 + $0x10] sm:$0xff]
    %v1314 = vld [vmem:[%s1310 + $0x18] sm:$0xff]
    %v1315 = vld [vmem:[%s1310 + $0x20] sm:$0xff]
    %v1316 = vld [vmem:[%s1310 + $0x28] sm:$0xff]
    %v1317 = vld [vmem:[%s1310 + $0x30] sm:$0xff]
    %v1318 = vld [vmem:[%s1310 + $0x38] sm:$0xff]
    %v1319 = vld [vmem:[%s1310 + $0x40] sm:$0xff]
    %v1320 = vld [vmem:[%s1310 + $0x48] sm:$0xff]
    %v1321 = vld [vmem:[%s1310 + $0x50] sm:$0xff]
    %v1322 = vld [vmem:[%s1310 + $0x58] sm:$0xff]
    %v1323 = vld [vmem:[%s1310 + $0x60] sm:$0xff]
    %v1324 = vld [vmem:[%s1310 + $0x68] sm:$0xff]
    %v1325 = vld [vmem:[%s1310 + $0x70] sm:$0xff]
    %v1326 = vld [vmem:[%s1310 + $0x78] sm:$0xff]
    %v1327 = vld [vmem:[%s1310 + $0x80] sm:$0xff]
    %v1328 = vld [vmem:[%s1310 + $0x88] sm:$0xff]
    %v1329 = vld [vmem:[%s1310 + $0x90] sm:$0xff]
    %v1330 = vld [vmem:[%s1310 + $0x98] sm:$0xff]
    %v1331 = vld [vmem:[%s1310 + $0xa0] sm:$0xff]
    %v1332 = vld [vmem:[%s1310 + $0xa8] sm:$0xff]
    %v1333 = vld [vmem:[%s1310 + $0xb0] sm:$0xff]
    %v1334 = vld [vmem:[%s1310 + $0xb8] sm:$0xff]
    %v1335 = vld [vmem:[%s1310 + $0xc0] sm:$0xff]
    %v1336 = vld [vmem:[%s1310 + $0xc8] sm:$0xff]
    %v1337 = vld [vmem:[%s1310 + $0xd0] sm:$0xff]
    %v1338 = vld [vmem:[%s1310 + $0xd8] sm:$0xff]
    %v1339 = vld [vmem:[%s1310 + $0xe0] sm:$0xff]
    %v1340 = vld [vmem:[%s1310 + $0xe8] sm:$0xff]
    %v1341 = vld [vmem:[%s1310 + $0xf0] sm:$0xff]
    %v1342 = vld [vmem:[%s1310 + $0xf8] sm:$0xff]
    %v1343 = vld [vmem:[%s1310 + $0x100] sm:$0xff]
    %v1344 = vld [vmem:[%s1310 + $0x108] sm:$0xff]
    %v1345 = vld [vmem:[%s1310 + $0x110] sm:$0xff]
    %v1346 = vld [vmem:[%s1310 + $0x118] sm:$0xff]
    %v1347 = vld [vmem:[%s1310 + $0x120] sm:$0xff]
    %v1348 = vld [vmem:[%s1310 + $0x128] sm:$0xff]
    %v1349 = vld [vmem:[%s1310 + $0x130] sm:$0xff]
    %v1350 = vld [vmem:[%s1310 + $0x138] sm:$0xff]
    %v1351 = vld [vmem:[%s1310 + $0x140] sm:$0xff]
    %v1352 = vld [vmem:[%s1310 + $0x148] sm:$0xff]
    %v1353 = vld [vmem:[%s1310 + $0x150] sm:$0xff]
    %v1354 = vld [vmem:[%s1310 + $0x158] sm:$0xff]
    %v1355 = vld [vmem:[%s1310 + $0x160] sm:$0xff]
    %v1356 = vld [vmem:[%s1310 + $0x168] sm:$0xff]
    %v1357 = vld [vmem:[%s1310 + $0x170] sm:$0xff]
    %v1358 = vld [vmem:[%s1310 + $0x178] sm:$0xff]
    %v1359 = vld [vmem:[%s1310 + $0x180] sm:$0xff]
    %v1360 = vld [vmem:[%s1310 + $0x188] sm:$0xff]
    %v1361 = vld [vmem:[%s1310 + $0x190] sm:$0xff]
    %v1362 = vld [vmem:[%s1310 + $0x198] sm:$0xff]
    %v1363 = vld [vmem:[%s1310 + $0x1a0] sm:$0xff]
    %v1364 = vld [vmem:[%s1310 + $0x1a8] sm:$0xff]
    %v1365 = vld [vmem:[%s1310 + $0x1b0] sm:$0xff]
    %v1366 = vld [vmem:[%s1310 + $0x1b8] sm:$0xff]
    %v1367 = vld [vmem:[%s1310 + $0x1c0] sm:$0xff]
    %v1368 = vld [vmem:[%s1310 + $0x1c8] sm:$0xff]
    %v1369 = vld [vmem:[%s1310 + $0x1d0] sm:$0xff]
    %v1370 = vld [vmem:[%s1310 + $0x1d8] sm:$0xff]
    %v1371 = vld [vmem:[%s1310 + $0x1e0] sm:$0xff]
    %v1372 = vld [vmem:[%s1310 + $0x1e8] sm:$0xff]
    %v1373 = vld [vmem:[%s1310 + $0x1f0] sm:$0xff]
    %v1374 = vld [vmem:[%s1310 + $0x1f8] sm:$0xff]
    %v1375 = vld [vmem:[%s1310 + $0x200] sm:$0xff]
    %v1376 = vld [vmem:[%s1310 + $0x208] sm:$0xff]
    %v1377 = vld [vmem:[%s1310 + $0x210] sm:$0xff]
    %v1378 = vld [vmem:[%s1310 + $0x218] sm:$0xff]
    %v1379 = vld [vmem:[%s1310 + $0x220] sm:$0xff]
    %v1380 = vld [vmem:[%s1310 + $0x228] sm:$0xff]
    %v1381 = vld [vmem:[%s1310 + $0x230] sm:$0xff]
    %v1382 = vld [vmem:[%s1310 + $0x238] sm:$0xff]
    %v1383 = vld [vmem:[%s1310 + $0x240] sm:$0xff]
    %v1384 = vld [vmem:[%s1310 + $0x248] sm:$0xff]
    %v1385 = vld [vmem:[%s1310 + $0x250] sm:$0xff]
    %v1386 = vld [vmem:[%s1310 + $0x258] sm:$0xff]
    %v1387 = vld [vmem:[%s1310 + $0x260] sm:$0xff]
    %v1388 = vld [vmem:[%s1310 + $0x268] sm:$0xff]
    %v1389 = vld [vmem:[%s1310 + $0x270] sm:$0xff]
    %v1390 = vld [vmem:[%s1310 + $0x278] sm:$0xff]
    %v1391 = vld [vmem:[%s1310 + $0x280] sm:$0xff]
    %v1392 = vld [vmem:[%s1310 + $0x288] sm:$0xff]
    %v1393 = vld [vmem:[%s1310 + $0x290] sm:$0xff]
    %v1394 = vld [vmem:[%s1310 + $0x298] sm:$0xff]
    %v1395 = vld [vmem:[%s1310 + $0x2a0] sm:$0xff]
    %v1396 = vld [vmem:[%s1310 + $0x2a8] sm:$0xff]
    %v1397 = vld [vmem:[%s1310 + $0x2b0] sm:$0xff]
    %v1398 = vld [vmem:[%s1310 + $0x2b8] sm:$0xff]
    %v1399 = vld [vmem:[%s1310 + $0x2c0] sm:$0xff]
    %v1400 = vld [vmem:[%s1310 + $0x2c8] sm:$0xff]
    %v1401 = vld [vmem:[%s1310 + $0x2d0] sm:$0xff]
    %v1402 = vld [vmem:[%s1310 + $0x2d8] sm:$0xff]
    %v1403 = vld [vmem:[%s1310 + $0x2e0] sm:$0xff]
    %v1404 = vld [vmem:[%s1310 + $0x2e8] sm:$0xff]
    %v1405 = vld [vmem:[%s1310 + $0x2f0] sm:$0xff]
    %v1406 = vld [vmem:[%s1310 + $0x2f8] sm:$0xff]
    %v1409 = vunpack.c.l.s4 1983009808
    %v1410 = vunpack.c.0.s8 %v1409
    %v1411 = vlaneseq
    %v1412 = vshrl.u32 %v1411, 7
    %v1413 = vsub.s32 %v1410, %v1412
    %v1414 = vrot.slane %v1309, %v1413
    %v1415 = vcombine.high %v1414, %v1414
    %v1417 = vsel %vm417, %v1415, 0
    %1419 = vmatprep.subr.mxu0 %v1372
    %1420 = vmatpush1.msra.mxu0 %v1371
    %1421 = vmatprep.subr.mxu0 %v1368
    %1422 = vmatpush1.msra.mxu0 %v1367
    %1423 = vmatprep.subr.mxu0 %v1364
    %1424 = vmatpush1.msra.mxu0 %v1363
    %1425 = vmatprep.subr.mxu0 %v1360
    %1426 = vmatpush1.msra.mxu0 %v1359
    %1427 = vmatprep.subr.mxu0 %v1356
    %1428 = vmatpush1.msra.mxu0 %v1355
    %1429 = vmatprep.subr.mxu0 %v1352
    %1430 = vmatpush1.msra.mxu0 %v1351
    %1431 = vmatprep.subr.mxu0 %v1348
    %1432 = vmatpush1.msra.mxu0 %v1347
    %1433 = vmatprep.subr.mxu0 %v1344
    %1434 = vmatpush1.msra.mxu0 %v1343
    %1435 = vmatprep.subr.mxu0 %v1340
    %1436 = vmatpush1.msra.mxu0 %v1339
    %1437 = vmatprep.subr.mxu0 %v1336
    %1438 = vmatpush1.msra.mxu0 %v1335
    %1439 = vmatprep.subr.mxu0 %v1332
    %1440 = vmatpush1.msra.mxu0 %v1331
    %1441 = vmatprep.subr.mxu0 %v1328
    %1442 = vmatpush1.msra.mxu0 %v1327
    %1443 = vmatprep.subr.mxu0 %v1324
    %1444 = vmatpush1.msra.mxu0 %v1323
    %1445 = vmatprep.subr.mxu0 %v1320
    %1446 = vmatpush1.msra.mxu0 %v1319
    %1447 = vmatprep.subr.mxu0 %v1316
    %1448 = vmatpush1.msra.mxu0 %v1315
    %1449 = vmatprep.subr.mxu0 %v1312
    %1450 = vmatpush1.msra.mxu0 %v1311
    %1451 = vmatprep.subr.mxu0 0.0
    %1452 = vmatpush2.msra.mxu0 0.0
    %1453 = vmatprep.subr.mxu0 0.0
    %1454 = vmatpush2.msra.mxu0 0.0
    %1455 = vmatprep.subr.mxu0 0.0
    %1456 = vmatpush2.msra.mxu0 0.0
    %1457 = vmatprep.subr.mxu0 0.0
    %1458 = vmatpush2.msra.mxu0 0.0
    %1459 = vmatprep.subr.mxu0 0.0
    %1460 = vmatpush2.msra.mxu0 0.0
    %1461 = vmatprep.subr.mxu0 0.0
    %1462 = vmatpush2.msra.mxu0 0.0
    %1463 = vmatprep.subr.mxu0 0.0
    %1464 = vmatpush2.msra.mxu0 0.0
    %1465 = vmatprep.subr.mxu0 0.0
    %1466 = vmatpush2.msra.mxu0 0.0
    %1467 = vmatprep.subr.mxu0 %v1404
    %1468 = vmatpush2.msra.mxu0 %v1403
    %1469 = vmatprep.subr.mxu0 %v1400
    %1470 = vmatpush2.msra.mxu0 %v1399
    %1471 = vmatprep.subr.mxu0 %v1396
    %1472 = vmatpush2.msra.mxu0 %v1395
    %1473 = vmatprep.subr.mxu0 %v1392
    %1474 = vmatpush2.msra.mxu0 %v1391
    %1475 = vmatprep.subr.mxu0 %v1388
    %1476 = vmatpush2.msra.mxu0 %v1387
    %1477 = vmatprep.subr.mxu0 %v1384
    %1478 = vmatpush2.msra.mxu0 %v1383
    %1479 = vmatprep.subr.mxu0 %v1380
    %1480 = vmatpush2.msra.mxu0 %v1379
    %1481 = vmatprep.subr.mxu0 %v1376
    %1482 = vmatpush2.msra.mxu0 %v1375
    %1483 = vmatprep.mubr.f32.mxu0 %v1417
    %1484 = vmatmul.mubr.f32.gmra.mxu0 %v1414
    %v1485 = vpop.f32.mrf.mxu0
    %v1486 = vadd.f32 0.0, %v1485
    %v1487 = vpop.f32.mrf.mxu0
    %v1488 = vadd.f32 0.0, %v1487
    %1489 = vdwg.mxu0
    %1490 = vmatprep.subr.mxu0 %v1374
    %1491 = vmatpush1.msra.mxu0 %v1373
    %1492 = vmatprep.subr.mxu0 %v1370
    %1493 = vmatpush1.msra.mxu0 %v1369
    %1494 = vmatprep.subr.mxu0 %v1366
    %1495 = vmatpush1.msra.mxu0 %v1365
    %1496 = vmatprep.subr.mxu0 %v1362
    %1497 = vmatpush1.msra.mxu0 %v1361
    %1498 = vmatprep.subr.mxu0 %v1358
    %1499 = vmatpush1.msra.mxu0 %v1357
    %1500 = vmatprep.subr.mxu0 %v1354
    %1501 = vmatpush1.msra.mxu0 %v1353
    %1502 = vmatprep.subr.mxu0 %v1350
    %1503 = vmatpush1.msra.mxu0 %v1349
    %1504 = vmatprep.subr.mxu0 %v1346
    %1505 = vmatpush1.msra.mxu0 %v1345
    %1506 = vmatprep.subr.mxu0 %v1342
    %1507 = vmatpush1.msra.mxu0 %v1341
    %1508 = vmatprep.subr.mxu0 %v1338
    %1509 = vmatpush1.msra.mxu0 %v1337
    %1510 = vmatprep.subr.mxu0 %v1334
    %1511 = vmatpush1.msra.mxu0 %v1333
    %1512 = vmatprep.subr.mxu0 %v1330
    %1513 = vmatpush1.msra.mxu0 %v1329
    %1514 = vmatprep.subr.mxu0 %v1326
    %1515 = vmatpush1.msra.mxu0 %v1325
    %1516 = vmatprep.subr.mxu0 %v1322
    %1517 = vmatpush1.msra.mxu0 %v1321
    %1518 = vmatprep.subr.mxu0 %v1318
    %1519 = vmatpush1.msra.mxu0 %v1317
    %1520 = vmatprep.subr.mxu0 %v1314
    %1521 = vmatpush1.msra.mxu0 %v1313
    %1522 = vmatprep.subr.mxu0 0.0
    %1523 = vmatpush2.msra.mxu0 0.0
    %1524 = vmatprep.subr.mxu0 0.0
    %1525 = vmatpush2.msra.mxu0 0.0
    %1526 = vmatprep.subr.mxu0 0.0
    %1527 = vmatpush2.msra.mxu0 0.0
    %1528 = vmatprep.subr.mxu0 0.0
    %1529 = vmatpush2.msra.mxu0 0.0
    %1530 = vmatprep.subr.mxu0 0.0
    %1531 = vmatpush2.msra.mxu0 0.0
    %1532 = vmatprep.subr.mxu0 0.0
    %1533 = vmatpush2.msra.mxu0 0.0
    %1534 = vmatprep.subr.mxu0 0.0
    %1535 = vmatpush2.msra.mxu0 0.0
    %1536 = vmatprep.subr.mxu0 0.0
    %1537 = vmatpush2.msra.mxu0 0.0
    %1538 = vmatprep.subr.mxu0 %v1406
    %1539 = vmatpush2.msra.mxu0 %v1405
    %1540 = vmatprep.subr.mxu0 %v1402
    %1541 = vmatpush2.msra.mxu0 %v1401
    %1542 = vmatprep.subr.mxu0 %v1398
    %1543 = vmatpush2.msra.mxu0 %v1397
    %1544 = vmatprep.subr.mxu0 %v1394
    %1545 = vmatpush2.msra.mxu0 %v1393
    %1546 = vmatprep.subr.mxu0 %v1390
    %1547 = vmatpush2.msra.mxu0 %v1389
    %1548 = vmatprep.subr.mxu0 %v1386
    %1549 = vmatpush2.msra.mxu0 %v1385
    %1550 = vmatprep.subr.mxu0 %v1382
    %1551 = vmatpush2.msra.mxu0 %v1381
    %1552 = vmatprep.subr.mxu0 %v1378
    %1553 = vmatpush2.msra.mxu0 %v1377
    %1554 = vmatprep.mubr.f32.mxu0 %v1417
    %1555 = vmatmul.mubr.f32.gmra.mxu0 %v1414
    %v1556 = vpop.f32.mrf.mxu0
    %v1557 = vadd.f32 0.0, %v1556
    %v1558 = vpop.f32.mrf.mxu0
    %v1559 = vadd.f32 0.0, %v1558
    %1560 = vdwg.mxu0
    %v1561 = vadd.f32 %v1278, %v1486
    %v1562 = vadd.f32 %v1279, %v1488
    %v1563 = vadd.f32 %v1280, %v1557
    %v1564 = vadd.f32 %v1281, %v1559
    %s1565 = sld [smem:[#allocation2 + $0x280]]
    %v1566 = vstv %s1565
    %v1567 = vmul.f32 %v155, %v1566
    %v1568 = vadd.f32 %v1567, 0.0
    %s1569 = sld [smem:[#allocation2 + $0x281]]
    %v1570 = vstv %s1569
    %v1571 = vmul.f32 %v155, %v1570
    %1573 = vrot.lane.b32.xlu0 %v1571, 127
    %v1574 = vpop.permute.xlu0 %1573
    %v1575 = vrot.slane %v1574, 2
    %v1576 = vsel %vm167, %v1574, %v1575
    %v1578 = vadd.f32 %v1568, %v1576
    %s1579 = sld [smem:[#allocation2 + $0x282]]
    %v1580 = vstv %s1579
    %v1581 = vmul.f32 %v155, %v1580
    %1583 = vrot.lane.b32.xlu0 %v1581, 126
    %v1584 = vpop.permute.xlu0 %1583
    %v1585 = vrot.slane %v1584, 2
    %v1586 = vsel %vm178, %v1584, %v1585
    %v1588 = vadd.f32 %v1578, %v1586
    %s1589 = sld [smem:[#allocation6 + $0x5]]
    %v1590 = vstv %s1589
    %v1591 = vadd.f32 %v1588, %v1590
    %v1592 = vmax.f32 %v1591, 0.0
    %s1593 = scalar_lea.vmem [#allocation7], 3840
    %v1594 = vld [vmem:[%s1593] sm:$0xff]
    %v1595 = vld [vmem:[%s1593 + $0x8] sm:$0xff]
    %v1596 = vld [vmem:[%s1593 + $0x10] sm:$0xff]
    %v1597 = vld [vmem:[%s1593 + $0x18] sm:$0xff]
    %v1598 = vld [vmem:[%s1593 + $0x20] sm:$0xff]
    %v1599 = vld [vmem:[%s1593 + $0x28] sm:$0xff]
    %v1600 = vld [vmem:[%s1593 + $0x30] sm:$0xff]
    %v1601 = vld [vmem:[%s1593 + $0x38] sm:$0xff]
    %v1602 = vld [vmem:[%s1593 + $0x40] sm:$0xff]
    %v1603 = vld [vmem:[%s1593 + $0x48] sm:$0xff]
    %v1604 = vld [vmem:[%s1593 + $0x50] sm:$0xff]
    %v1605 = vld [vmem:[%s1593 + $0x58] sm:$0xff]
    %v1606 = vld [vmem:[%s1593 + $0x60] sm:$0xff]
    %v1607 = vld [vmem:[%s1593 + $0x68] sm:$0xff]
    %v1608 = vld [vmem:[%s1593 + $0x70] sm:$0xff]
    %v1609 = vld [vmem:[%s1593 + $0x78] sm:$0xff]
    %v1610 = vld [vmem:[%s1593 + $0x80] sm:$0xff]
    %v1611 = vld [vmem:[%s1593 + $0x88] sm:$0xff]
    %v1612 = vld [vmem:[%s1593 + $0x90] sm:$0xff]
    %v1613 = vld [vmem:[%s1593 + $0x98] sm:$0xff]
    %v1614 = vld [vmem:[%s1593 + $0xa0] sm:$0xff]
    %v1615 = vld [vmem:[%s1593 + $0xa8] sm:$0xff]
    %v1616 = vld [vmem:[%s1593 + $0xb0] sm:$0xff]
    %v1617 = vld [vmem:[%s1593 + $0xb8] sm:$0xff]
    %v1618 = vld [vmem:[%s1593 + $0xc0] sm:$0xff]
    %v1619 = vld [vmem:[%s1593 + $0xc8] sm:$0xff]
    %v1620 = vld [vmem:[%s1593 + $0xd0] sm:$0xff]
    %v1621 = vld [vmem:[%s1593 + $0xd8] sm:$0xff]
    %v1622 = vld [vmem:[%s1593 + $0xe0] sm:$0xff]
    %v1623 = vld [vmem:[%s1593 + $0xe8] sm:$0xff]
    %v1624 = vld [vmem:[%s1593 + $0xf0] sm:$0xff]
    %v1625 = vld [vmem:[%s1593 + $0xf8] sm:$0xff]
    %v1626 = vld [vmem:[%s1593 + $0x100] sm:$0xff]
    %v1627 = vld [vmem:[%s1593 + $0x108] sm:$0xff]
    %v1628 = vld [vmem:[%s1593 + $0x110] sm:$0xff]
    %v1629 = vld [vmem:[%s1593 + $0x118] sm:$0xff]
    %v1630 = vld [vmem:[%s1593 + $0x120] sm:$0xff]
    %v1631 = vld [vmem:[%s1593 + $0x128] sm:$0xff]
    %v1632 = vld [vmem:[%s1593 + $0x130] sm:$0xff]
    %v1633 = vld [vmem:[%s1593 + $0x138] sm:$0xff]
    %v1634 = vld [vmem:[%s1593 + $0x140] sm:$0xff]
    %v1635 = vld [vmem:[%s1593 + $0x148] sm:$0xff]
    %v1636 = vld [vmem:[%s1593 + $0x150] sm:$0xff]
    %v1637 = vld [vmem:[%s1593 + $0x158] sm:$0xff]
    %v1638 = vld [vmem:[%s1593 + $0x160] sm:$0xff]
    %v1639 = vld [vmem:[%s1593 + $0x168] sm:$0xff]
    %v1640 = vld [vmem:[%s1593 + $0x170] sm:$0xff]
    %v1641 = vld [vmem:[%s1593 + $0x178] sm:$0xff]
    %v1642 = vld [vmem:[%s1593 + $0x180] sm:$0xff]
    %v1643 = vld [vmem:[%s1593 + $0x188] sm:$0xff]
    %v1644 = vld [vmem:[%s1593 + $0x190] sm:$0xff]
    %v1645 = vld [vmem:[%s1593 + $0x198] sm:$0xff]
    %v1646 = vld [vmem:[%s1593 + $0x1a0] sm:$0xff]
    %v1647 = vld [vmem:[%s1593 + $0x1a8] sm:$0xff]
    %v1648 = vld [vmem:[%s1593 + $0x1b0] sm:$0xff]
    %v1649 = vld [vmem:[%s1593 + $0x1b8] sm:$0xff]
    %v1650 = vld [vmem:[%s1593 + $0x1c0] sm:$0xff]
    %v1651 = vld [vmem:[%s1593 + $0x1c8] sm:$0xff]
    %v1652 = vld [vmem:[%s1593 + $0x1d0] sm:$0xff]
    %v1653 = vld [vmem:[%s1593 + $0x1d8] sm:$0xff]
    %v1654 = vld [vmem:[%s1593 + $0x1e0] sm:$0xff]
    %v1655 = vld [vmem:[%s1593 + $0x1e8] sm:$0xff]
    %v1656 = vld [vmem:[%s1593 + $0x1f0] sm:$0xff]
    %v1657 = vld [vmem:[%s1593 + $0x1f8] sm:$0xff]
    %v1658 = vld [vmem:[%s1593 + $0x200] sm:$0xff]
    %v1659 = vld [vmem:[%s1593 + $0x208] sm:$0xff]
    %v1660 = vld [vmem:[%s1593 + $0x210] sm:$0xff]
    %v1661 = vld [vmem:[%s1593 + $0x218] sm:$0xff]
    %v1662 = vld [vmem:[%s1593 + $0x220] sm:$0xff]
    %v1663 = vld [vmem:[%s1593 + $0x228] sm:$0xff]
    %v1664 = vld [vmem:[%s1593 + $0x230] sm:$0xff]
    %v1665 = vld [vmem:[%s1593 + $0x238] sm:$0xff]
    %v1666 = vld [vmem:[%s1593 + $0x240] sm:$0xff]
    %v1667 = vld [vmem:[%s1593 + $0x248] sm:$0xff]
    %v1668 = vld [vmem:[%s1593 + $0x250] sm:$0xff]
    %v1669 = vld [vmem:[%s1593 + $0x258] sm:$0xff]
    %v1670 = vld [vmem:[%s1593 + $0x260] sm:$0xff]
    %v1671 = vld [vmem:[%s1593 + $0x268] sm:$0xff]
    %v1672 = vld [vmem:[%s1593 + $0x270] sm:$0xff]
    %v1673 = vld [vmem:[%s1593 + $0x278] sm:$0xff]
    %v1674 = vld [vmem:[%s1593 + $0x280] sm:$0xff]
    %v1675 = vld [vmem:[%s1593 + $0x288] sm:$0xff]
    %v1676 = vld [vmem:[%s1593 + $0x290] sm:$0xff]
    %v1677 = vld [vmem:[%s1593 + $0x298] sm:$0xff]
    %v1678 = vld [vmem:[%s1593 + $0x2a0] sm:$0xff]
    %v1679 = vld [vmem:[%s1593 + $0x2a8] sm:$0xff]
    %v1680 = vld [vmem:[%s1593 + $0x2b0] sm:$0xff]
    %v1681 = vld [vmem:[%s1593 + $0x2b8] sm:$0xff]
    %v1682 = vld [vmem:[%s1593 + $0x2c0] sm:$0xff]
    %v1683 = vld [vmem:[%s1593 + $0x2c8] sm:$0xff]
    %v1684 = vld [vmem:[%s1593 + $0x2d0] sm:$0xff]
    %v1685 = vld [vmem:[%s1593 + $0x2d8] sm:$0xff]
    %v1686 = vld [vmem:[%s1593 + $0x2e0] sm:$0xff]
    %v1687 = vld [vmem:[%s1593 + $0x2e8] sm:$0xff]
    %v1688 = vld [vmem:[%s1593 + $0x2f0] sm:$0xff]
    %v1689 = vld [vmem:[%s1593 + $0x2f8] sm:$0xff]
    %v1692 = vunpack.c.l.s4 1983009808
    %v1693 = vunpack.c.0.s8 %v1692
    %v1694 = vlaneseq
    %v1695 = vshrl.u32 %v1694, 7
    %v1696 = vsub.s32 %v1693, %v1695
    %v1697 = vrot.slane %v1592, %v1696
    %v1698 = vcombine.high %v1697, %v1697
    %v1700 = vsel %vm417, %v1698, 0
    %1702 = vmatprep.subr.mxu0 %v1655
    %1703 = vmatpush1.msra.mxu0 %v1654
    %1704 = vmatprep.subr.mxu0 %v1651
    %1705 = vmatpush1.msra.mxu0 %v1650
    %1706 = vmatprep.subr.mxu0 %v1647
    %1707 = vmatpush1.msra.mxu0 %v1646
    %1708 = vmatprep.subr.mxu0 %v1643
    %1709 = vmatpush1.msra.mxu0 %v1642
    %1710 = vmatprep.subr.mxu0 %v1639
    %1711 = vmatpush1.msra.mxu0 %v1638
    %1712 = vmatprep.subr.mxu0 %v1635
    %1713 = vmatpush1.msra.mxu0 %v1634
    %1714 = vmatprep.subr.mxu0 %v1631
    %1715 = vmatpush1.msra.mxu0 %v1630
    %1716 = vmatprep.subr.mxu0 %v1627
    %1717 = vmatpush1.msra.mxu0 %v1626
    %1718 = vmatprep.subr.mxu0 %v1623
    %1719 = vmatpush1.msra.mxu0 %v1622
    %1720 = vmatprep.subr.mxu0 %v1619
    %1721 = vmatpush1.msra.mxu0 %v1618
    %1722 = vmatprep.subr.mxu0 %v1615
    %1723 = vmatpush1.msra.mxu0 %v1614
    %1724 = vmatprep.subr.mxu0 %v1611
    %1725 = vmatpush1.msra.mxu0 %v1610
    %1726 = vmatprep.subr.mxu0 %v1607
    %1727 = vmatpush1.msra.mxu0 %v1606
    %1728 = vmatprep.subr.mxu0 %v1603
    %1729 = vmatpush1.msra.mxu0 %v1602
    %1730 = vmatprep.subr.mxu0 %v1599
    %1731 = vmatpush1.msra.mxu0 %v1598
    %1732 = vmatprep.subr.mxu0 %v1595
    %1733 = vmatpush1.msra.mxu0 %v1594
    %1734 = vmatprep.subr.mxu0 0.0
    %1735 = vmatpush2.msra.mxu0 0.0
    %1736 = vmatprep.subr.mxu0 0.0
    %1737 = vmatpush2.msra.mxu0 0.0
    %1738 = vmatprep.subr.mxu0 0.0
    %1739 = vmatpush2.msra.mxu0 0.0
    %1740 = vmatprep.subr.mxu0 0.0
    %1741 = vmatpush2.msra.mxu0 0.0
    %1742 = vmatprep.subr.mxu0 0.0
    %1743 = vmatpush2.msra.mxu0 0.0
    %1744 = vmatprep.subr.mxu0 0.0
    %1745 = vmatpush2.msra.mxu0 0.0
    %1746 = vmatprep.subr.mxu0 0.0
    %1747 = vmatpush2.msra.mxu0 0.0
    %1748 = vmatprep.subr.mxu0 0.0
    %1749 = vmatpush2.msra.mxu0 0.0
    %1750 = vmatprep.subr.mxu0 %v1687
    %1751 = vmatpush2.msra.mxu0 %v1686
    %1752 = vmatprep.subr.mxu0 %v1683
    %1753 = vmatpush2.msra.mxu0 %v1682
    %1754 = vmatprep.subr.mxu0 %v1679
    %1755 = vmatpush2.msra.mxu0 %v1678
    %1756 = vmatprep.subr.mxu0 %v1675
    %1757 = vmatpush2.msra.mxu0 %v1674
    %1758 = vmatprep.subr.mxu0 %v1671
    %1759 = vmatpush2.msra.mxu0 %v1670
    %1760 = vmatprep.subr.mxu0 %v1667
    %1761 = vmatpush2.msra.mxu0 %v1666
    %1762 = vmatprep.subr.mxu0 %v1663
    %1763 = vmatpush2.msra.mxu0 %v1662
    %1764 = vmatprep.subr.mxu0 %v1659
    %1765 = vmatpush2.msra.mxu0 %v1658
    %1766 = vmatprep.mubr.f32.mxu0 %v1700
    %1767 = vmatmul.mubr.f32.gmra.mxu0 %v1697
    %v1768 = vpop.f32.mrf.mxu0
    %v1769 = vadd.f32 0.0, %v1768
    %v1770 = vpop.f32.mrf.mxu0
    %v1771 = vadd.f32 0.0, %v1770
    %1772 = vdwg.mxu0
    %1773 = vmatprep.subr.mxu0 %v1657
    %1774 = vmatpush1.msra.mxu0 %v1656
    %1775 = vmatprep.subr.mxu0 %v1653
    %1776 = vmatpush1.msra.mxu0 %v1652
    %1777 = vmatprep.subr.mxu0 %v1649
    %1778 = vmatpush1.msra.mxu0 %v1648
    %1779 = vmatprep.subr.mxu0 %v1645
    %1780 = vmatpush1.msra.mxu0 %v1644
    %1781 = vmatprep.subr.mxu0 %v1641
    %1782 = vmatpush1.msra.mxu0 %v1640
    %1783 = vmatprep.subr.mxu0 %v1637
    %1784 = vmatpush1.msra.mxu0 %v1636
    %1785 = vmatprep.subr.mxu0 %v1633
    %1786 = vmatpush1.msra.mxu0 %v1632
    %1787 = vmatprep.subr.mxu0 %v1629
    %1788 = vmatpush1.msra.mxu0 %v1628
    %1789 = vmatprep.subr.mxu0 %v1625
    %1790 = vmatpush1.msra.mxu0 %v1624
    %1791 = vmatprep.subr.mxu0 %v1621
    %1792 = vmatpush1.msra.mxu0 %v1620
    %1793 = vmatprep.subr.mxu0 %v1617
    %1794 = vmatpush1.msra.mxu0 %v1616
    %1795 = vmatprep.subr.mxu0 %v1613
    %1796 = vmatpush1.msra.mxu0 %v1612
    %1797 = vmatprep.subr.mxu0 %v1609
    %1798 = vmatpush1.msra.mxu0 %v1608
    %1799 = vmatprep.subr.mxu0 %v1605
    %1800 = vmatpush1.msra.mxu0 %v1604
    %1801 = vmatprep.subr.mxu0 %v1601
    %1802 = vmatpush1.msra.mxu0 %v1600
    %1803 = vmatprep.subr.mxu0 %v1597
    %1804 = vmatpush1.msra.mxu0 %v1596
    %1805 = vmatprep.subr.mxu0 0.0
    %1806 = vmatpush2.msra.mxu0 0.0
    %1807 = vmatprep.subr.mxu0 0.0
    %1808 = vmatpush2.msra.mxu0 0.0
    %1809 = vmatprep.subr.mxu0 0.0
    %1810 = vmatpush2.msra.mxu0 0.0
    %1811 = vmatprep.subr.mxu0 0.0
    %1812 = vmatpush2.msra.mxu0 0.0
    %1813 = vmatprep.subr.mxu0 0.0
    %1814 = vmatpush2.msra.mxu0 0.0
    %1815 = vmatprep.subr.mxu0 0.0
    %1816 = vmatpush2.msra.mxu0 0.0
    %1817 = vmatprep.subr.mxu0 0.0
    %1818 = vmatpush2.msra.mxu0 0.0
    %1819 = vmatprep.subr.mxu0 0.0
    %1820 = vmatpush2.msra.mxu0 0.0
    %1821 = vmatprep.subr.mxu0 %v1689
    %1822 = vmatpush2.msra.mxu0 %v1688
    %1823 = vmatprep.subr.mxu0 %v1685
    %1824 = vmatpush2.msra.mxu0 %v1684
    %1825 = vmatprep.subr.mxu0 %v1681
    %1826 = vmatpush2.msra.mxu0 %v1680
    %1827 = vmatprep.subr.mxu0 %v1677
    %1828 = vmatpush2.msra.mxu0 %v1676
    %1829 = vmatprep.subr.mxu0 %v1673
    %1830 = vmatpush2.msra.mxu0 %v1672
    %1831 = vmatprep.subr.mxu0 %v1669
    %1832 = vmatpush2.msra.mxu0 %v1668
    %1833 = vmatprep.subr.mxu0 %v1665
    %1834 = vmatpush2.msra.mxu0 %v1664
    %1835 = vmatprep.subr.mxu0 %v1661
    %1836 = vmatpush2.msra.mxu0 %v1660
    %1837 = vmatprep.mubr.f32.mxu0 %v1700
    %1838 = vmatmul.mubr.f32.gmra.mxu0 %v1697
    %v1839 = vpop.f32.mrf.mxu0
    %v1840 = vadd.f32 0.0, %v1839
    %v1841 = vpop.f32.mrf.mxu0
    %v1842 = vadd.f32 0.0, %v1841
    %1843 = vdwg.mxu0
    %v1844 = vadd.f32 %v1561, %v1769
    %v1845 = vadd.f32 %v1562, %v1771
    %v1846 = vadd.f32 %v1563, %v1840
    %v1847 = vadd.f32 %v1564, %v1842
    %s1848 = sld [smem:[#allocation2 + $0x300]]
    %v1849 = vstv %s1848
    %v1850 = vmul.f32 %v155, %v1849
    %v1851 = vadd.f32 %v1850, 0.0
    %s1852 = sld [smem:[#allocation2 + $0x301]]
    %v1853 = vstv %s1852
    %v1854 = vmul.f32 %v155, %v1853
    %1856 = vrot.lane.b32.xlu0 %v1854, 127
    %v1857 = vpop.permute.xlu0 %1856
    %v1858 = vrot.slane %v1857, 2
    %v1859 = vsel %vm167, %v1857, %v1858
    %v1861 = vadd.f32 %v1851, %v1859
    %s1862 = sld [smem:[#allocation2 + $0x302]]
    %v1863 = vstv %s1862
    %v1864 = vmul.f32 %v155, %v1863
    %1866 = vrot.lane.b32.xlu0 %v1864, 126
    %v1867 = vpop.permute.xlu0 %1866
    %v1868 = vrot.slane %v1867, 2
    %v1869 = vsel %vm178, %v1867, %v1868
    %v1871 = vadd.f32 %v1861, %v1869
    %s1872 = sld [smem:[#allocation6 + $0x6]]
    %v1873 = vstv %s1872
    %v1874 = vadd.f32 %v1871, %v1873
    %v1875 = vmax.f32 %v1874, 0.0
    %s1876 = scalar_lea.vmem [#allocation7], 4608
    %v1877 = vld [vmem:[%s1876] sm:$0xff]
    %v1878 = vld [vmem:[%s1876 + $0x8] sm:$0xff]
    %v1879 = vld [vmem:[%s1876 + $0x10] sm:$0xff]
    %v1880 = vld [vmem:[%s1876 + $0x18] sm:$0xff]
    %v1881 = vld [vmem:[%s1876 + $0x20] sm:$0xff]
    %v1882 = vld [vmem:[%s1876 + $0x28] sm:$0xff]
    %v1883 = vld [vmem:[%s1876 + $0x30] sm:$0xff]
    %v1884 = vld [vmem:[%s1876 + $0x38] sm:$0xff]
    %v1885 = vld [vmem:[%s1876 + $0x40] sm:$0xff]
    %v1886 = vld [vmem:[%s1876 + $0x48] sm:$0xff]
    %v1887 = vld [vmem:[%s1876 + $0x50] sm:$0xff]
    %v1888 = vld [vmem:[%s1876 + $0x58] sm:$0xff]
    %v1889 = vld [vmem:[%s1876 + $0x60] sm:$0xff]
    %v1890 = vld [vmem:[%s1876 + $0x68] sm:$0xff]
    %v1891 = vld [vmem:[%s1876 + $0x70] sm:$0xff]
    %v1892 = vld [vmem:[%s1876 + $0x78] sm:$0xff]
    %v1893 = vld [vmem:[%s1876 + $0x80] sm:$0xff]
    %v1894 = vld [vmem:[%s1876 + $0x88] sm:$0xff]
    %v1895 = vld [vmem:[%s1876 + $0x90] sm:$0xff]
    %v1896 = vld [vmem:[%s1876 + $0x98] sm:$0xff]
    %v1897 = vld [vmem:[%s1876 + $0xa0] sm:$0xff]
    %v1898 = vld [vmem:[%s1876 + $0xa8] sm:$0xff]
    %v1899 = vld [vmem:[%s1876 + $0xb0] sm:$0xff]
    %v1900 = vld [vmem:[%s1876 + $0xb8] sm:$0xff]
    %v1901 = vld [vmem:[%s1876 + $0xc0] sm:$0xff]
    %v1902 = vld [vmem:[%s1876 + $0xc8] sm:$0xff]
    %v1903 = vld [vmem:[%s1876 + $0xd0] sm:$0xff]
    %v1904 = vld [vmem:[%s1876 + $0xd8] sm:$0xff]
    %v1905 = vld [vmem:[%s1876 + $0xe0] sm:$0xff]
    %v1906 = vld [vmem:[%s1876 + $0xe8] sm:$0xff]
    %v1907 = vld [vmem:[%s1876 + $0xf0] sm:$0xff]
    %v1908 = vld [vmem:[%s1876 + $0xf8] sm:$0xff]
    %v1909 = vld [vmem:[%s1876 + $0x100] sm:$0xff]
    %v1910 = vld [vmem:[%s1876 + $0x108] sm:$0xff]
    %v1911 = vld [vmem:[%s1876 + $0x110] sm:$0xff]
    %v1912 = vld [vmem:[%s1876 + $0x118] sm:$0xff]
    %v1913 = vld [vmem:[%s1876 + $0x120] sm:$0xff]
    %v1914 = vld [vmem:[%s1876 + $0x128] sm:$0xff]
    %v1915 = vld [vmem:[%s1876 + $0x130] sm:$0xff]
    %v1916 = vld [vmem:[%s1876 + $0x138] sm:$0xff]
    %v1917 = vld [vmem:[%s1876 + $0x140] sm:$0xff]
    %v1918 = vld [vmem:[%s1876 + $0x148] sm:$0xff]
    %v1919 = vld [vmem:[%s1876 + $0x150] sm:$0xff]
    %v1920 = vld [vmem:[%s1876 + $0x158] sm:$0xff]
    %v1921 = vld [vmem:[%s1876 + $0x160] sm:$0xff]
    %v1922 = vld [vmem:[%s1876 + $0x168] sm:$0xff]
    %v1923 = vld [vmem:[%s1876 + $0x170] sm:$0xff]
    %v1924 = vld [vmem:[%s1876 + $0x178] sm:$0xff]
    %v1925 = vld [vmem:[%s1876 + $0x180] sm:$0xff]
    %v1926 = vld [vmem:[%s1876 + $0x188] sm:$0xff]
    %v1927 = vld [vmem:[%s1876 + $0x190] sm:$0xff]
    %v1928 = vld [vmem:[%s1876 + $0x198] sm:$0xff]
    %v1929 = vld [vmem:[%s1876 + $0x1a0] sm:$0xff]
    %v1930 = vld [vmem:[%s1876 + $0x1a8] sm:$0xff]
    %v1931 = vld [vmem:[%s1876 + $0x1b0] sm:$0xff]
    %v1932 = vld [vmem:[%s1876 + $0x1b8] sm:$0xff]
    %v1933 = vld [vmem:[%s1876 + $0x1c0] sm:$0xff]
    %v1934 = vld [vmem:[%s1876 + $0x1c8] sm:$0xff]
    %v1935 = vld [vmem:[%s1876 + $0x1d0] sm:$0xff]
    %v1936 = vld [vmem:[%s1876 + $0x1d8] sm:$0xff]
    %v1937 = vld [vmem:[%s1876 + $0x1e0] sm:$0xff]
    %v1938 = vld [vmem:[%s1876 + $0x1e8] sm:$0xff]
    %v1939 = vld [vmem:[%s1876 + $0x1f0] sm:$0xff]
    %v1940 = vld [vmem:[%s1876 + $0x1f8] sm:$0xff]
    %v1941 = vld [vmem:[%s1876 + $0x200] sm:$0xff]
    %v1942 = vld [vmem:[%s1876 + $0x208] sm:$0xff]
    %v1943 = vld [vmem:[%s1876 + $0x210] sm:$0xff]
    %v1944 = vld [vmem:[%s1876 + $0x218] sm:$0xff]
    %v1945 = vld [vmem:[%s1876 + $0x220] sm:$0xff]
    %v1946 = vld [vmem:[%s1876 + $0x228] sm:$0xff]
    %v1947 = vld [vmem:[%s1876 + $0x230] sm:$0xff]
    %v1948 = vld [vmem:[%s1876 + $0x238] sm:$0xff]
    %v1949 = vld [vmem:[%s1876 + $0x240] sm:$0xff]
    %v1950 = vld [vmem:[%s1876 + $0x248] sm:$0xff]
    %v1951 = vld [vmem:[%s1876 + $0x250] sm:$0xff]
    %v1952 = vld [vmem:[%s1876 + $0x258] sm:$0xff]
    %v1953 = vld [vmem:[%s1876 + $0x260] sm:$0xff]
    %v1954 = vld [vmem:[%s1876 + $0x268] sm:$0xff]
    %v1955 = vld [vmem:[%s1876 + $0x270] sm:$0xff]
    %v1956 = vld [vmem:[%s1876 + $0x278] sm:$0xff]
    %v1957 = vld [vmem:[%s1876 + $0x280] sm:$0xff]
    %v1958 = vld [vmem:[%s1876 + $0x288] sm:$0xff]
    %v1959 = vld [vmem:[%s1876 + $0x290] sm:$0xff]
    %v1960 = vld [vmem:[%s1876 + $0x298] sm:$0xff]
    %v1961 = vld [vmem:[%s1876 + $0x2a0] sm:$0xff]
    %v1962 = vld [vmem:[%s1876 + $0x2a8] sm:$0xff]
    %v1963 = vld [vmem:[%s1876 + $0x2b0] sm:$0xff]
    %v1964 = vld [vmem:[%s1876 + $0x2b8] sm:$0xff]
    %v1965 = vld [vmem:[%s1876 + $0x2c0] sm:$0xff]
    %v1966 = vld [vmem:[%s1876 + $0x2c8] sm:$0xff]
    %v1967 = vld [vmem:[%s1876 + $0x2d0] sm:$0xff]
    %v1968 = vld [vmem:[%s1876 + $0x2d8] sm:$0xff]
    %v1969 = vld [vmem:[%s1876 + $0x2e0] sm:$0xff]
    %v1970 = vld [vmem:[%s1876 + $0x2e8] sm:$0xff]
    %v1971 = vld [vmem:[%s1876 + $0x2f0] sm:$0xff]
    %v1972 = vld [vmem:[%s1876 + $0x2f8] sm:$0xff]
    %v1975 = vunpack.c.l.s4 1983009808
    %v1976 = vunpack.c.0.s8 %v1975
    %v1977 = vlaneseq
    %v1978 = vshrl.u32 %v1977, 7
    %v1979 = vsub.s32 %v1976, %v1978
    %v1980 = vrot.slane %v1875, %v1979
    %v1981 = vcombine.high %v1980, %v1980
    %v1983 = vsel %vm417, %v1981, 0
    %1985 = vmatprep.subr.mxu0 %v1938
    %1986 = vmatpush1.msra.mxu0 %v1937
    %1987 = vmatprep.subr.mxu0 %v1934
    %1988 = vmatpush1.msra.mxu0 %v1933
    %1989 = vmatprep.subr.mxu0 %v1930
    %1990 = vmatpush1.msra.mxu0 %v1929
    %1991 = vmatprep.subr.mxu0 %v1926
    %1992 = vmatpush1.msra.mxu0 %v1925
    %1993 = vmatprep.subr.mxu0 %v1922
    %1994 = vmatpush1.msra.mxu0 %v1921
    %1995 = vmatprep.subr.mxu0 %v1918
    %1996 = vmatpush1.msra.mxu0 %v1917
    %1997 = vmatprep.subr.mxu0 %v1914
    %1998 = vmatpush1.msra.mxu0 %v1913
    %1999 = vmatprep.subr.mxu0 %v1910
    %2000 = vmatpush1.msra.mxu0 %v1909
    %2001 = vmatprep.subr.mxu0 %v1906
    %2002 = vmatpush1.msra.mxu0 %v1905
    %2003 = vmatprep.subr.mxu0 %v1902
    %2004 = vmatpush1.msra.mxu0 %v1901
    %2005 = vmatprep.subr.mxu0 %v1898
    %2006 = vmatpush1.msra.mxu0 %v1897
    %2007 = vmatprep.subr.mxu0 %v1894
    %2008 = vmatpush1.msra.mxu0 %v1893
    %2009 = vmatprep.subr.mxu0 %v1890
    %2010 = vmatpush1.msra.mxu0 %v1889
    %2011 = vmatprep.subr.mxu0 %v1886
    %2012 = vmatpush1.msra.mxu0 %v1885
    %2013 = vmatprep.subr.mxu0 %v1882
    %2014 = vmatpush1.msra.mxu0 %v1881
    %2015 = vmatprep.subr.mxu0 %v1878
    %2016 = vmatpush1.msra.mxu0 %v1877
    %2017 = vmatprep.subr.mxu0 0.0
    %2018 = vmatpush2.msra.mxu0 0.0
    %2019 = vmatprep.subr.mxu0 0.0
    %2020 = vmatpush2.msra.mxu0 0.0
    %2021 = vmatprep.subr.mxu0 0.0
    %2022 = vmatpush2.msra.mxu0 0.0
    %2023 = vmatprep.subr.mxu0 0.0
    %2024 = vmatpush2.msra.mxu0 0.0
    %2025 = vmatprep.subr.mxu0 0.0
    %2026 = vmatpush2.msra.mxu0 0.0
    %2027 = vmatprep.subr.mxu0 0.0
    %2028 = vmatpush2.msra.mxu0 0.0
    %2029 = vmatprep.subr.mxu0 0.0
    %2030 = vmatpush2.msra.mxu0 0.0
    %2031 = vmatprep.subr.mxu0 0.0
    %2032 = vmatpush2.msra.mxu0 0.0
    %2033 = vmatprep.subr.mxu0 %v1970
    %2034 = vmatpush2.msra.mxu0 %v1969
    %2035 = vmatprep.subr.mxu0 %v1966
    %2036 = vmatpush2.msra.mxu0 %v1965
    %2037 = vmatprep.subr.mxu0 %v1962
    %2038 = vmatpush2.msra.mxu0 %v1961
    %2039 = vmatprep.subr.mxu0 %v1958
    %2040 = vmatpush2.msra.mxu0 %v1957
    %2041 = vmatprep.subr.mxu0 %v1954
    %2042 = vmatpush2.msra.mxu0 %v1953
    %2043 = vmatprep.subr.mxu0 %v1950
    %2044 = vmatpush2.msra.mxu0 %v1949
    %2045 = vmatprep.subr.mxu0 %v1946
    %2046 = vmatpush2.msra.mxu0 %v1945
    %2047 = vmatprep.subr.mxu0 %v1942
    %2048 = vmatpush2.msra.mxu0 %v1941
    %2049 = vmatprep.mubr.f32.mxu0 %v1983
    %2050 = vmatmul.mubr.f32.gmra.mxu0 %v1980
    %v2051 = vpop.f32.mrf.mxu0
    %v2052 = vadd.f32 0.0, %v2051
    %v2053 = vpop.f32.mrf.mxu0
    %v2054 = vadd.f32 0.0, %v2053
    %2055 = vdwg.mxu0
    %2056 = vmatprep.subr.mxu0 %v1940
    %2057 = vmatpush1.msra.mxu0 %v1939
    %2058 = vmatprep.subr.mxu0 %v1936
    %2059 = vmatpush1.msra.mxu0 %v1935
    %2060 = vmatprep.subr.mxu0 %v1932
    %2061 = vmatpush1.msra.mxu0 %v1931
    %2062 = vmatprep.subr.mxu0 %v1928
    %2063 = vmatpush1.msra.mxu0 %v1927
    %2064 = vmatprep.subr.mxu0 %v1924
    %2065 = vmatpush1.msra.mxu0 %v1923
    %2066 = vmatprep.subr.mxu0 %v1920
    %2067 = vmatpush1.msra.mxu0 %v1919
    %2068 = vmatprep.subr.mxu0 %v1916
    %2069 = vmatpush1.msra.mxu0 %v1915
    %2070 = vmatprep.subr.mxu0 %v1912
    %2071 = vmatpush1.msra.mxu0 %v1911
    %2072 = vmatprep.subr.mxu0 %v1908
    %2073 = vmatpush1.msra.mxu0 %v1907
    %2074 = vmatprep.subr.mxu0 %v1904
    %2075 = vmatpush1.msra.mxu0 %v1903
    %2076 = vmatprep.subr.mxu0 %v1900
    %2077 = vmatpush1.msra.mxu0 %v1899
    %2078 = vmatprep.subr.mxu0 %v1896
    %2079 = vmatpush1.msra.mxu0 %v1895
    %2080 = vmatprep.subr.mxu0 %v1892
    %2081 = vmatpush1.msra.mxu0 %v1891
    %2082 = vmatprep.subr.mxu0 %v1888
    %2083 = vmatpush1.msra.mxu0 %v1887
    %2084 = vmatprep.subr.mxu0 %v1884
    %2085 = vmatpush1.msra.mxu0 %v1883
    %2086 = vmatprep.subr.mxu0 %v1880
    %2087 = vmatpush1.msra.mxu0 %v1879
    %2088 = vmatprep.subr.mxu0 0.0
    %2089 = vmatpush2.msra.mxu0 0.0
    %2090 = vmatprep.subr.mxu0 0.0
    %2091 = vmatpush2.msra.mxu0 0.0
    %2092 = vmatprep.subr.mxu0 0.0
    %2093 = vmatpush2.msra.mxu0 0.0
    %2094 = vmatprep.subr.mxu0 0.0
    %2095 = vmatpush2.msra.mxu0 0.0
    %2096 = vmatprep.subr.mxu0 0.0
    %2097 = vmatpush2.msra.mxu0 0.0
    %2098 = vmatprep.subr.mxu0 0.0
    %2099 = vmatpush2.msra.mxu0 0.0
    %2100 = vmatprep.subr.mxu0 0.0
    %2101 = vmatpush2.msra.mxu0 0.0
    %2102 = vmatprep.subr.mxu0 0.0
    %2103 = vmatpush2.msra.mxu0 0.0
    %2104 = vmatprep.subr.mxu0 %v1972
    %2105 = vmatpush2.msra.mxu0 %v1971
    %2106 = vmatprep.subr.mxu0 %v1968
    %2107 = vmatpush2.msra.mxu0 %v1967
    %2108 = vmatprep.subr.mxu0 %v1964
    %2109 = vmatpush2.msra.mxu0 %v1963
    %2110 = vmatprep.subr.mxu0 %v1960
    %2111 = vmatpush2.msra.mxu0 %v1959
    %2112 = vmatprep.subr.mxu0 %v1956
    %2113 = vmatpush2.msra.mxu0 %v1955
    %2114 = vmatprep.subr.mxu0 %v1952
    %2115 = vmatpush2.msra.mxu0 %v1951
    %2116 = vmatprep.subr.mxu0 %v1948
    %2117 = vmatpush2.msra.mxu0 %v1947
    %2118 = vmatprep.subr.mxu0 %v1944
    %2119 = vmatpush2.msra.mxu0 %v1943
    %2120 = vmatprep.mubr.f32.mxu0 %v1983
    %2121 = vmatmul.mubr.f32.gmra.mxu0 %v1980
    %v2122 = vpop.f32.mrf.mxu0
    %v2123 = vadd.f32 0.0, %v2122
    %v2124 = vpop.f32.mrf.mxu0
    %v2125 = vadd.f32 0.0, %v2124
    %2126 = vdwg.mxu0
    %v2127 = vadd.f32 %v1844, %v2052
    %v2128 = vadd.f32 %v1845, %v2054
    %v2129 = vadd.f32 %v1846, %v2123
    %v2130 = vadd.f32 %v1847, %v2125
    %s2131 = sld [smem:[#allocation2 + $0x380]]
    %v2132 = vstv %s2131
    %v2133 = vmul.f32 %v155, %v2132
    %v2134 = vadd.f32 %v2133, 0.0
    %s2135 = sld [smem:[#allocation2 + $0x381]]
    %v2136 = vstv %s2135
    %v2137 = vmul.f32 %v155, %v2136
    %2139 = vrot.lane.b32.xlu0 %v2137, 127
    %v2140 = vpop.permute.xlu0 %2139
    %v2141 = vrot.slane %v2140, 2
    %v2142 = vsel %vm167, %v2140, %v2141
    %v2144 = vadd.f32 %v2134, %v2142
    %s2145 = sld [smem:[#allocation2 + $0x382]]
    %v2146 = vstv %s2145
    %v2147 = vmul.f32 %v155, %v2146
    %2149 = vrot.lane.b32.xlu0 %v2147, 126
    %v2150 = vpop.permute.xlu0 %2149
    %v2151 = vrot.slane %v2150, 2
    %v2152 = vsel %vm178, %v2150, %v2151
    %v2154 = vadd.f32 %v2144, %v2152
    %s2155 = sld [smem:[#allocation6 + $0x7]]
    %v2156 = vstv %s2155
    %v2157 = vadd.f32 %v2154, %v2156
    %v2158 = vmax.f32 %v2157, 0.0
    %s2159 = scalar_lea.vmem [#allocation7], 5376
    %v2160 = vld [vmem:[%s2159] sm:$0xff]
    %v2161 = vld [vmem:[%s2159 + $0x8] sm:$0xff]
    %v2162 = vld [vmem:[%s2159 + $0x10] sm:$0xff]
    %v2163 = vld [vmem:[%s2159 + $0x18] sm:$0xff]
    %v2164 = vld [vmem:[%s2159 + $0x20] sm:$0xff]
    %v2165 = vld [vmem:[%s2159 + $0x28] sm:$0xff]
    %v2166 = vld [vmem:[%s2159 + $0x30] sm:$0xff]
    %v2167 = vld [vmem:[%s2159 + $0x38] sm:$0xff]
    %v2168 = vld [vmem:[%s2159 + $0x40] sm:$0xff]
    %v2169 = vld [vmem:[%s2159 + $0x48] sm:$0xff]
    %v2170 = vld [vmem:[%s2159 + $0x50] sm:$0xff]
    %v2171 = vld [vmem:[%s2159 + $0x58] sm:$0xff]
    %v2172 = vld [vmem:[%s2159 + $0x60] sm:$0xff]
    %v2173 = vld [vmem:[%s2159 + $0x68] sm:$0xff]
    %v2174 = vld [vmem:[%s2159 + $0x70] sm:$0xff]
    %v2175 = vld [vmem:[%s2159 + $0x78] sm:$0xff]
    %v2176 = vld [vmem:[%s2159 + $0x80] sm:$0xff]
    %v2177 = vld [vmem:[%s2159 + $0x88] sm:$0xff]
    %v2178 = vld [vmem:[%s2159 + $0x90] sm:$0xff]
    %v2179 = vld [vmem:[%s2159 + $0x98] sm:$0xff]
    %v2180 = vld [vmem:[%s2159 + $0xa0] sm:$0xff]
    %v2181 = vld [vmem:[%s2159 + $0xa8] sm:$0xff]
    %v2182 = vld [vmem:[%s2159 + $0xb0] sm:$0xff]
    %v2183 = vld [vmem:[%s2159 + $0xb8] sm:$0xff]
    %v2184 = vld [vmem:[%s2159 + $0xc0] sm:$0xff]
    %v2185 = vld [vmem:[%s2159 + $0xc8] sm:$0xff]
    %v2186 = vld [vmem:[%s2159 + $0xd0] sm:$0xff]
    %v2187 = vld [vmem:[%s2159 + $0xd8] sm:$0xff]
    %v2188 = vld [vmem:[%s2159 + $0xe0] sm:$0xff]
    %v2189 = vld [vmem:[%s2159 + $0xe8] sm:$0xff]
    %v2190 = vld [vmem:[%s2159 + $0xf0] sm:$0xff]
    %v2191 = vld [vmem:[%s2159 + $0xf8] sm:$0xff]
    %v2192 = vld [vmem:[%s2159 + $0x100] sm:$0xff]
    %v2193 = vld [vmem:[%s2159 + $0x108] sm:$0xff]
    %v2194 = vld [vmem:[%s2159 + $0x110] sm:$0xff]
    %v2195 = vld [vmem:[%s2159 + $0x118] sm:$0xff]
    %v2196 = vld [vmem:[%s2159 + $0x120] sm:$0xff]
    %v2197 = vld [vmem:[%s2159 + $0x128] sm:$0xff]
    %v2198 = vld [vmem:[%s2159 + $0x130] sm:$0xff]
    %v2199 = vld [vmem:[%s2159 + $0x138] sm:$0xff]
    %v2200 = vld [vmem:[%s2159 + $0x140] sm:$0xff]
    %v2201 = vld [vmem:[%s2159 + $0x148] sm:$0xff]
    %v2202 = vld [vmem:[%s2159 + $0x150] sm:$0xff]
    %v2203 = vld [vmem:[%s2159 + $0x158] sm:$0xff]
    %v2204 = vld [vmem:[%s2159 + $0x160] sm:$0xff]
    %v2205 = vld [vmem:[%s2159 + $0x168] sm:$0xff]
    %v2206 = vld [vmem:[%s2159 + $0x170] sm:$0xff]
    %v2207 = vld [vmem:[%s2159 + $0x178] sm:$0xff]
    %v2208 = vld [vmem:[%s2159 + $0x180] sm:$0xff]
    %v2209 = vld [vmem:[%s2159 + $0x188] sm:$0xff]
    %v2210 = vld [vmem:[%s2159 + $0x190] sm:$0xff]
    %v2211 = vld [vmem:[%s2159 + $0x198] sm:$0xff]
    %v2212 = vld [vmem:[%s2159 + $0x1a0] sm:$0xff]
    %v2213 = vld [vmem:[%s2159 + $0x1a8] sm:$0xff]
    %v2214 = vld [vmem:[%s2159 + $0x1b0] sm:$0xff]
    %v2215 = vld [vmem:[%s2159 + $0x1b8] sm:$0xff]
    %v2216 = vld [vmem:[%s2159 + $0x1c0] sm:$0xff]
    %v2217 = vld [vmem:[%s2159 + $0x1c8] sm:$0xff]
    %v2218 = vld [vmem:[%s2159 + $0x1d0] sm:$0xff]
    %v2219 = vld [vmem:[%s2159 + $0x1d8] sm:$0xff]
    %v2220 = vld [vmem:[%s2159 + $0x1e0] sm:$0xff]
    %v2221 = vld [vmem:[%s2159 + $0x1e8] sm:$0xff]
    %v2222 = vld [vmem:[%s2159 + $0x1f0] sm:$0xff]
    %v2223 = vld [vmem:[%s2159 + $0x1f8] sm:$0xff]
    %v2224 = vld [vmem:[%s2159 + $0x200] sm:$0xff]
    %v2225 = vld [vmem:[%s2159 + $0x208] sm:$0xff]
    %v2226 = vld [vmem:[%s2159 + $0x210] sm:$0xff]
    %v2227 = vld [vmem:[%s2159 + $0x218] sm:$0xff]
    %v2228 = vld [vmem:[%s2159 + $0x220] sm:$0xff]
    %v2229 = vld [vmem:[%s2159 + $0x228] sm:$0xff]
    %v2230 = vld [vmem:[%s2159 + $0x230] sm:$0xff]
    %v2231 = vld [vmem:[%s2159 + $0x238] sm:$0xff]
    %v2232 = vld [vmem:[%s2159 + $0x240] sm:$0xff]
    %v2233 = vld [vmem:[%s2159 + $0x248] sm:$0xff]
    %v2234 = vld [vmem:[%s2159 + $0x250] sm:$0xff]
    %v2235 = vld [vmem:[%s2159 + $0x258] sm:$0xff]
    %v2236 = vld [vmem:[%s2159 + $0x260] sm:$0xff]
    %v2237 = vld [vmem:[%s2159 + $0x268] sm:$0xff]
    %v2238 = vld [vmem:[%s2159 + $0x270] sm:$0xff]
    %v2239 = vld [vmem:[%s2159 + $0x278] sm:$0xff]
    %v2240 = vld [vmem:[%s2159 + $0x280] sm:$0xff]
    %v2241 = vld [vmem:[%s2159 + $0x288] sm:$0xff]
    %v2242 = vld [vmem:[%s2159 + $0x290] sm:$0xff]
    %v2243 = vld [vmem:[%s2159 + $0x298] sm:$0xff]
    %v2244 = vld [vmem:[%s2159 + $0x2a0] sm:$0xff]
    %v2245 = vld [vmem:[%s2159 + $0x2a8] sm:$0xff]
    %v2246 = vld [vmem:[%s2159 + $0x2b0] sm:$0xff]
    %v2247 = vld [vmem:[%s2159 + $0x2b8] sm:$0xff]
    %v2248 = vld [vmem:[%s2159 + $0x2c0] sm:$0xff]
    %v2249 = vld [vmem:[%s2159 + $0x2c8] sm:$0xff]
    %v2250 = vld [vmem:[%s2159 + $0x2d0] sm:$0xff]
    %v2251 = vld [vmem:[%s2159 + $0x2d8] sm:$0xff]
    %v2252 = vld [vmem:[%s2159 + $0x2e0] sm:$0xff]
    %v2253 = vld [vmem:[%s2159 + $0x2e8] sm:$0xff]
    %v2254 = vld [vmem:[%s2159 + $0x2f0] sm:$0xff]
    %v2255 = vld [vmem:[%s2159 + $0x2f8] sm:$0xff]
    %v2258 = vunpack.c.l.s4 1983009808
    %v2259 = vunpack.c.0.s8 %v2258
    %v2260 = vlaneseq
    %v2261 = vshrl.u32 %v2260, 7
    %v2262 = vsub.s32 %v2259, %v2261
    %v2263 = vrot.slane %v2158, %v2262
    %v2264 = vcombine.high %v2263, %v2263
    %v2266 = vsel %vm417, %v2264, 0
    %2268 = vmatprep.subr.mxu0 %v2221
    %2269 = vmatpush1.msra.mxu0 %v2220
    %2270 = vmatprep.subr.mxu0 %v2217
    %2271 = vmatpush1.msra.mxu0 %v2216
    %2272 = vmatprep.subr.mxu0 %v2213
    %2273 = vmatpush1.msra.mxu0 %v2212
    %2274 = vmatprep.subr.mxu0 %v2209
    %2275 = vmatpush1.msra.mxu0 %v2208
    %2276 = vmatprep.subr.mxu0 %v2205
    %2277 = vmatpush1.msra.mxu0 %v2204
    %2278 = vmatprep.subr.mxu0 %v2201
    %2279 = vmatpush1.msra.mxu0 %v2200
    %2280 = vmatprep.subr.mxu0 %v2197
    %2281 = vmatpush1.msra.mxu0 %v2196
    %2282 = vmatprep.subr.mxu0 %v2193
    %2283 = vmatpush1.msra.mxu0 %v2192
    %2284 = vmatprep.subr.mxu0 %v2189
    %2285 = vmatpush1.msra.mxu0 %v2188
    %2286 = vmatprep.subr.mxu0 %v2185
    %2287 = vmatpush1.msra.mxu0 %v2184
    %2288 = vmatprep.subr.mxu0 %v2181
    %2289 = vmatpush1.msra.mxu0 %v2180
    %2290 = vmatprep.subr.mxu0 %v2177
    %2291 = vmatpush1.msra.mxu0 %v2176
    %2292 = vmatprep.subr.mxu0 %v2173
    %2293 = vmatpush1.msra.mxu0 %v2172
    %2294 = vmatprep.subr.mxu0 %v2169
    %2295 = vmatpush1.msra.mxu0 %v2168
    %2296 = vmatprep.subr.mxu0 %v2165
    %2297 = vmatpush1.msra.mxu0 %v2164
    %2298 = vmatprep.subr.mxu0 %v2161
    %2299 = vmatpush1.msra.mxu0 %v2160
    %2300 = vmatprep.subr.mxu0 0.0
    %2301 = vmatpush2.msra.mxu0 0.0
    %2302 = vmatprep.subr.mxu0 0.0
    %2303 = vmatpush2.msra.mxu0 0.0
    %2304 = vmatprep.subr.mxu0 0.0
    %2305 = vmatpush2.msra.mxu0 0.0
    %2306 = vmatprep.subr.mxu0 0.0
    %2307 = vmatpush2.msra.mxu0 0.0
    %2308 = vmatprep.subr.mxu0 0.0
    %2309 = vmatpush2.msra.mxu0 0.0
    %2310 = vmatprep.subr.mxu0 0.0
    %2311 = vmatpush2.msra.mxu0 0.0
    %2312 = vmatprep.subr.mxu0 0.0
    %2313 = vmatpush2.msra.mxu0 0.0
    %2314 = vmatprep.subr.mxu0 0.0
    %2315 = vmatpush2.msra.mxu0 0.0
    %2316 = vmatprep.subr.mxu0 %v2253
    %2317 = vmatpush2.msra.mxu0 %v2252
    %2318 = vmatprep.subr.mxu0 %v2249
    %2319 = vmatpush2.msra.mxu0 %v2248
    %2320 = vmatprep.subr.mxu0 %v2245
    %2321 = vmatpush2.msra.mxu0 %v2244
    %2322 = vmatprep.subr.mxu0 %v2241
    %2323 = vmatpush2.msra.mxu0 %v2240
    %2324 = vmatprep.subr.mxu0 %v2237
    %2325 = vmatpush2.msra.mxu0 %v2236
    %2326 = vmatprep.subr.mxu0 %v2233
    %2327 = vmatpush2.msra.mxu0 %v2232
    %2328 = vmatprep.subr.mxu0 %v2229
    %2329 = vmatpush2.msra.mxu0 %v2228
    %2330 = vmatprep.subr.mxu0 %v2225
    %2331 = vmatpush2.msra.mxu0 %v2224
    %2332 = vmatprep.mubr.f32.mxu0 %v2266
    %2333 = vmatmul.mubr.f32.gmra.mxu0 %v2263
    %v2334 = vpop.f32.mrf.mxu0
    %v2335 = vadd.f32 0.0, %v2334
    %v2336 = vpop.f32.mrf.mxu0
    %v2337 = vadd.f32 0.0, %v2336
    %2338 = vdwg.mxu0
    %2339 = vmatprep.subr.mxu0 %v2223
    %2340 = vmatpush1.msra.mxu0 %v2222
    %2341 = vmatprep.subr.mxu0 %v2219
    %2342 = vmatpush1.msra.mxu0 %v2218
    %2343 = vmatprep.subr.mxu0 %v2215
    %2344 = vmatpush1.msra.mxu0 %v2214
    %2345 = vmatprep.subr.mxu0 %v2211
    %2346 = vmatpush1.msra.mxu0 %v2210
    %2347 = vmatprep.subr.mxu0 %v2207
    %2348 = vmatpush1.msra.mxu0 %v2206
    %2349 = vmatprep.subr.mxu0 %v2203
    %2350 = vmatpush1.msra.mxu0 %v2202
    %2351 = vmatprep.subr.mxu0 %v2199
    %2352 = vmatpush1.msra.mxu0 %v2198
    %2353 = vmatprep.subr.mxu0 %v2195
    %2354 = vmatpush1.msra.mxu0 %v2194
    %2355 = vmatprep.subr.mxu0 %v2191
    %2356 = vmatpush1.msra.mxu0 %v2190
    %2357 = vmatprep.subr.mxu0 %v2187
    %2358 = vmatpush1.msra.mxu0 %v2186
    %2359 = vmatprep.subr.mxu0 %v2183
    %2360 = vmatpush1.msra.mxu0 %v2182
    %2361 = vmatprep.subr.mxu0 %v2179
    %2362 = vmatpush1.msra.mxu0 %v2178
    %2363 = vmatprep.subr.mxu0 %v2175
    %2364 = vmatpush1.msra.mxu0 %v2174
    %2365 = vmatprep.subr.mxu0 %v2171
    %2366 = vmatpush1.msra.mxu0 %v2170
    %2367 = vmatprep.subr.mxu0 %v2167
    %2368 = vmatpush1.msra.mxu0 %v2166
    %2369 = vmatprep.subr.mxu0 %v2163
    %2370 = vmatpush1.msra.mxu0 %v2162
    %2371 = vmatprep.subr.mxu0 0.0
    %2372 = vmatpush2.msra.mxu0 0.0
    %2373 = vmatprep.subr.mxu0 0.0
    %2374 = vmatpush2.msra.mxu0 0.0
    %2375 = vmatprep.subr.mxu0 0.0
    %2376 = vmatpush2.msra.mxu0 0.0
    %2377 = vmatprep.subr.mxu0 0.0
    %2378 = vmatpush2.msra.mxu0 0.0
    %2379 = vmatprep.subr.mxu0 0.0
    %2380 = vmatpush2.msra.mxu0 0.0
    %2381 = vmatprep.subr.mxu0 0.0
    %2382 = vmatpush2.msra.mxu0 0.0
    %2383 = vmatprep.subr.mxu0 0.0
    %2384 = vmatpush2.msra.mxu0 0.0
    %2385 = vmatprep.subr.mxu0 0.0
    %2386 = vmatpush2.msra.mxu0 0.0
    %2387 = vmatprep.subr.mxu0 %v2255
    %2388 = vmatpush2.msra.mxu0 %v2254
    %2389 = vmatprep.subr.mxu0 %v2251
    %2390 = vmatpush2.msra.mxu0 %v2250
    %2391 = vmatprep.subr.mxu0 %v2247
    %2392 = vmatpush2.msra.mxu0 %v2246
    %2393 = vmatprep.subr.mxu0 %v2243
    %2394 = vmatpush2.msra.mxu0 %v2242
    %2395 = vmatprep.subr.mxu0 %v2239
    %2396 = vmatpush2.msra.mxu0 %v2238
    %2397 = vmatprep.subr.mxu0 %v2235
    %2398 = vmatpush2.msra.mxu0 %v2234
    %2399 = vmatprep.subr.mxu0 %v2231
    %2400 = vmatpush2.msra.mxu0 %v2230
    %2401 = vmatprep.subr.mxu0 %v2227
    %2402 = vmatpush2.msra.mxu0 %v2226
    %2403 = vmatprep.mubr.f32.mxu0 %v2266
    %2404 = vmatmul.mubr.f32.gmra.mxu0 %v2263
    %v2405 = vpop.f32.mrf.mxu0
    %v2406 = vadd.f32 0.0, %v2405
    %v2407 = vpop.f32.mrf.mxu0
    %v2408 = vadd.f32 0.0, %v2407
    %2409 = vdwg.mxu0
    %v2410 = vadd.f32 %v2127, %v2335
    %v2411 = vadd.f32 %v2128, %v2337
    %v2412 = vadd.f32 %v2129, %v2406
    %v2413 = vadd.f32 %v2130, %v2408
    %v2414 = vld [vmem:[#allocation8] sm:$0xf]
    %v2416 = vlaneseq
    %v2417 = vshrl.u32 %v2416, 7
    %v2418 = vsub.s32 0, %v2417
    %v2419 = vrot.slane %v2414, %v2418
    %v2420 = vlaneseq
    %v2421 = vshrl.u32 %v2420, 7
    %v2422 = vsub.s32 1, %v2421
    %v2423 = vrot.slane %v2414, %v2422
    %v2424 = vlaneseq
    %v2425 = vshrl.u32 %v2424, 7
    %v2426 = vsub.s32 2, %v2425
    %v2427 = vrot.slane %v2414, %v2426
    %v2428 = vlaneseq
    %v2429 = vshrl.u32 %v2428, 7
    %v2430 = vsub.s32 3, %v2429
    %v2431 = vrot.slane %v2414, %v2430
    %v2436 = vadd.f32 %v2410, %v2419
    %v2437 = vadd.f32 %v2411, %v2423
    %v2438 = vadd.f32 %v2412, %v2427
    %v2439 = vadd.f32 %v2413, %v2431
    %v2440 = vadd.f32 %v2436, 3.0
    %v2441 = vadd.f32 %v2437, 3.0
    %v2442 = vadd.f32 %v2438, 3.0
    %v2443 = vadd.f32 %v2439, 3.0
    %v2444 = vmax.f32 %v2440, 0.0
    %v2445 = vmax.f32 %v2441, 0.0
    %v2446 = vmax.f32 %v2442, 0.0
    %v2447 = vmax.f32 %v2443, 0.0
    %v2448 = vmin.f32 %v2444, 6.0
    %v2449 = vmin.f32 %v2445, 6.0
    %v2450 = vmin.f32 %v2446, 6.0
    %v2451 = vmin.f32 %v2447, 6.0
    %v2452 = vmul.f32 %v2436, %v2448
    %v2453 = vmul.f32 %v2437, %v2449
    %v2454 = vmul.f32 %v2438, %v2450
    %v2455 = vmul.f32 %v2439, %v2451
    %v2456 = vmul.f32 %v2452, 0.16666667
    %v2457 = vmul.f32 %v2453, 0.16666667
    %v2458 = vmul.f32 %v2454, 0.16666667
    %v2459 = vmul.f32 %v2455, 0.16666667
    %v2460 = vld [vmem:[#allocation14] sm:$0xf]
    %v2461 = vld [vmem:[%s5] sm:$0xff]
    %v2462 = vld [vmem:[%s5 + $0x8] sm:$0xff]
    %v2463 = vld [vmem:[%s5 + $0x10] sm:$0xff]
    %v2464 = vld [vmem:[%s5 + $0x18] sm:$0xff]
    %v2465 = vld [vmem:[%s5 + $0x20] sm:$0xff]
    %v2466 = vld [vmem:[%s5 + $0x28] sm:$0xff]
    %v2467 = vld [vmem:[%s5 + $0x30] sm:$0xff]
    %v2468 = vld [vmem:[%s5 + $0x38] sm:$0xff]
    %v2469 = vld [vmem:[%s5 + $0x40] sm:$0xff]
    %v2470 = vld [vmem:[%s5 + $0x48] sm:$0xff]
    %v2471 = vld [vmem:[%s5 + $0x50] sm:$0xff]
    %v2472 = vld [vmem:[%s5 + $0x58] sm:$0xff]
    %v2473 = vld [vmem:[%s5 + $0x60] sm:$0xff]
    %v2474 = vld [vmem:[%s5 + $0x68] sm:$0xff]
    %v2475 = vld [vmem:[%s5 + $0x70] sm:$0xff]
    %v2476 = vld [vmem:[%s5 + $0x78] sm:$0xff]
    %v2477 = vld [vmem:[#allocation10] sm:$0x1]
    %v2479 = vlaneseq
    %v2480 = vshrl.u32 %v2479, 7
    %v2481 = vsub.s32 0, %v2480
    %v2482 = vrot.slane %v2477, %v2481
    %2484 = vmatprep.subr.mxu0 0.0
    %2485 = vmatpush1.msra.mxu0 %v2476
    %2486 = vmatprep.subr.mxu0 0.0
    %2487 = vmatpush1.msra.mxu0 %v2475
    %2488 = vmatprep.subr.mxu0 0.0
    %2489 = vmatpush1.msra.mxu0 %v2474
    %2490 = vmatprep.subr.mxu0 0.0
    %2491 = vmatpush1.msra.mxu0 %v2473
    %2492 = vmatprep.subr.mxu0 0.0
    %2493 = vmatpush1.msra.mxu0 %v2472
    %2494 = vmatprep.subr.mxu0 0.0
    %2495 = vmatpush1.msra.mxu0 %v2471
    %2496 = vmatprep.subr.mxu0 0.0
    %2497 = vmatpush1.msra.mxu0 %v2470
    %2498 = vmatprep.subr.mxu0 0.0
    %2499 = vmatpush1.msra.mxu0 %v2469
    %2500 = vmatprep.subr.mxu0 0.0
    %2501 = vmatpush1.msra.mxu0 %v2468
    %2502 = vmatprep.subr.mxu0 0.0
    %2503 = vmatpush1.msra.mxu0 %v2467
    %2504 = vmatprep.subr.mxu0 0.0
    %2505 = vmatpush1.msra.mxu0 %v2466
    %2506 = vmatprep.subr.mxu0 0.0
    %2507 = vmatpush1.msra.mxu0 %v2465
    %2508 = vmatprep.subr.mxu0 0.0
    %2509 = vmatpush1.msra.mxu0 %v2464
    %2510 = vmatprep.subr.mxu0 0.0
    %2511 = vmatpush1.msra.mxu0 %v2463
    %2512 = vmatprep.subr.mxu0 0.0
    %2513 = vmatpush1.msra.mxu0 %v2462
    %2514 = vmatprep.subr.mxu0 0.0
    %2515 = vmatpush1.msra.mxu0 %v2461
    %2516 = vmatprep.subr.mxu0 0.0
    %2517 = vmatpush2.msra.mxu0 0.0
    %2518 = vmatprep.subr.mxu0 0.0
    %2519 = vmatpush2.msra.mxu0 0.0
    %2520 = vmatprep.subr.mxu0 0.0
    %2521 = vmatpush2.msra.mxu0 0.0
    %2522 = vmatprep.subr.mxu0 0.0
    %2523 = vmatpush2.msra.mxu0 0.0
    %2524 = vmatprep.subr.mxu0 0.0
    %2525 = vmatpush2.msra.mxu0 0.0
    %2526 = vmatprep.subr.mxu0 0.0
    %2527 = vmatpush2.msra.mxu0 0.0
    %2528 = vmatprep.subr.mxu0 0.0
    %2529 = vmatpush2.msra.mxu0 0.0
    %2530 = vmatprep.subr.mxu0 0.0
    %2531 = vmatpush2.msra.mxu0 0.0
    %2532 = vmatprep.subr.mxu0 0.0
    %2533 = vmatpush2.msra.mxu0 0.0
    %2534 = vmatprep.subr.mxu0 0.0
    %2535 = vmatpush2.msra.mxu0 0.0
    %2536 = vmatprep.subr.mxu0 0.0
    %2537 = vmatpush2.msra.mxu0 0.0
    %2538 = vmatprep.subr.mxu0 0.0
    %2539 = vmatpush2.msra.mxu0 0.0
    %2540 = vmatprep.subr.mxu0 0.0
    %2541 = vmatpush2.msra.mxu0 0.0
    %2542 = vmatprep.subr.mxu0 0.0
    %2543 = vmatpush2.msra.mxu0 0.0
    %2544 = vmatprep.subr.mxu0 0.0
    %2545 = vmatpush2.msra.mxu0 0.0
    %2546 = vmatprep.subr.mxu0 0.0
    %2547 = vmatpush2.msra.mxu0 0.0
    %2548 = vmatprep.mubr.f32.mxu0 0.0
    %2549 = vmatmul.mubr.f32.gmra.mxu0 %v2456
    %v2550 = vpop.f32.mrf.mxu0
    %v2551 = vadd.f32 %v2482, %v2550
    %v2552 = vpop.f32.mrf.mxu0
    %2553 = vdwg.mxu0
    %v2554 = vadd.f32 %v2551, 3.0
    %v2555 = vmax.f32 %v2554, 0.0
    %v2556 = vmin.f32 %v2555, 6.0
    %v2557 = vmul.f32 %v2551, %v2556
    %v2558 = vmul.f32 %v2557, 0.16666667
    %v2559 = vld [vmem:[%s7] sm:$0xff]
    %v2560 = vld [vmem:[%s7 + $0x8] sm:$0xff]
    %v2561 = vld [vmem:[%s7 + $0x10] sm:$0xff]
    %v2562 = vld [vmem:[%s7 + $0x18] sm:$0xff]
    %v2563 = vld [vmem:[%s7 + $0x20] sm:$0xff]
    %v2564 = vld [vmem:[%s7 + $0x28] sm:$0xff]
    %v2565 = vld [vmem:[%s7 + $0x30] sm:$0xff]
    %v2566 = vld [vmem:[%s7 + $0x38] sm:$0xff]
    %v2567 = vld [vmem:[%s7 + $0x40] sm:$0xff]
    %v2568 = vld [vmem:[%s7 + $0x48] sm:$0xff]
    %v2569 = vld [vmem:[%s7 + $0x50] sm:$0xff]
    %v2570 = vld [vmem:[%s7 + $0x58] sm:$0xff]
    %v2571 = vld [vmem:[#allocation11] sm:$0x1]
    %v2573 = vlaneseq
    %v2574 = vshrl.u32 %v2573, 7
    %v2575 = vsub.s32 0, %v2574
    %v2576 = vrot.slane %v2571, %v2575
    %vm2578 = vcmask 785408
    %v2580 = vsel %vm2578, %v2558, 0
    %2582 = vmatprep.subr.mxu0 0.0
    %2583 = vmatpush1.msra.mxu0 0.0
    %2584 = vmatprep.subr.mxu0 0.0
    %2585 = vmatpush1.msra.mxu0 0.0
    %2586 = vmatprep.subr.mxu0 0.0
    %2587 = vmatpush1.msra.mxu0 0.0
    %2588 = vmatprep.subr.mxu0 0.0
    %2589 = vmatpush1.msra.mxu0 0.0
    %2590 = vmatprep.subr.mxu0 0.0
    %2591 = vmatpush1.msra.mxu0 %v2570
    %2592 = vmatprep.subr.mxu0 0.0
    %2593 = vmatpush1.msra.mxu0 %v2569
    %2594 = vmatprep.subr.mxu0 0.0
    %2595 = vmatpush1.msra.mxu0 %v2568
    %2596 = vmatprep.subr.mxu0 0.0
    %2597 = vmatpush1.msra.mxu0 %v2567
    %2598 = vmatprep.subr.mxu0 0.0
    %2599 = vmatpush1.msra.mxu0 %v2566
    %2600 = vmatprep.subr.mxu0 0.0
    %2601 = vmatpush1.msra.mxu0 %v2565
    %2602 = vmatprep.subr.mxu0 0.0
    %2603 = vmatpush1.msra.mxu0 %v2564
    %2604 = vmatprep.subr.mxu0 0.0
    %2605 = vmatpush1.msra.mxu0 %v2563
    %2606 = vmatprep.subr.mxu0 0.0
    %2607 = vmatpush1.msra.mxu0 %v2562
    %2608 = vmatprep.subr.mxu0 0.0
    %2609 = vmatpush1.msra.mxu0 %v2561
    %2610 = vmatprep.subr.mxu0 0.0
    %2611 = vmatpush1.msra.mxu0 %v2560
    %2612 = vmatprep.subr.mxu0 0.0
    %2613 = vmatpush1.msra.mxu0 %v2559
    %2614 = vmatprep.subr.mxu0 0.0
    %2615 = vmatpush2.msra.mxu0 0.0
    %2616 = vmatprep.subr.mxu0 0.0
    %2617 = vmatpush2.msra.mxu0 0.0
    %2618 = vmatprep.subr.mxu0 0.0
    %2619 = vmatpush2.msra.mxu0 0.0
    %2620 = vmatprep.subr.mxu0 0.0
    %2621 = vmatpush2.msra.mxu0 0.0
    %2622 = vmatprep.subr.mxu0 0.0
    %2623 = vmatpush2.msra.mxu0 0.0
    %2624 = vmatprep.subr.mxu0 0.0
    %2625 = vmatpush2.msra.mxu0 0.0
    %2626 = vmatprep.subr.mxu0 0.0
    %2627 = vmatpush2.msra.mxu0 0.0
    %2628 = vmatprep.subr.mxu0 0.0
    %2629 = vmatpush2.msra.mxu0 0.0
    %2630 = vmatprep.subr.mxu0 0.0
    %2631 = vmatpush2.msra.mxu0 0.0
    %2632 = vmatprep.subr.mxu0 0.0
    %2633 = vmatpush2.msra.mxu0 0.0
    %2634 = vmatprep.subr.mxu0 0.0
    %2635 = vmatpush2.msra.mxu0 0.0
    %2636 = vmatprep.subr.mxu0 0.0
    %2637 = vmatpush2.msra.mxu0 0.0
    %2638 = vmatprep.subr.mxu0 0.0
    %2639 = vmatpush2.msra.mxu0 0.0
    %2640 = vmatprep.subr.mxu0 0.0
    %2641 = vmatpush2.msra.mxu0 0.0
    %2642 = vmatprep.subr.mxu0 0.0
    %2643 = vmatpush2.msra.mxu0 0.0
    %2644 = vmatprep.subr.mxu0 0.0
    %2645 = vmatpush2.msra.mxu0 0.0
    %2646 = vmatprep.mubr.f32.mxu0 0.0
    %2647 = vmatmul.mubr.f32.gmra.mxu0 %v2580
    %v2648 = vpop.f32.mrf.mxu0
    %v2649 = vadd.f32 %v2576, %v2648
    %v2650 = vpop.f32.mrf.mxu0
    %2651 = vdwg.mxu0
    %v2652 = vadd.f32 %v2649, 3.0
    %v2653 = vmax.f32 %v2652, 0.0
    %v2654 = vmin.f32 %v2653, 6.0
    %v2655 = vmul.f32 %v2649, %v2654
    %v2656 = vmul.f32 %v2655, 0.16666667
    %v2657 = vld [vmem:[%s9] sm:$0xff]
    %v2658 = vld [vmem:[%s9 + $0x8] sm:$0xff]
    %v2659 = vld [vmem:[%s9 + $0x10] sm:$0xff]
    %v2660 = vld [vmem:[%s9 + $0x18] sm:$0xff]
    %v2661 = vld [vmem:[%s9 + $0x20] sm:$0xff]
    %v2662 = vld [vmem:[%s9 + $0x28] sm:$0xff]
    %v2663 = vld [vmem:[%s9 + $0x30] sm:$0xff]
    %v2664 = vld [vmem:[%s9 + $0x38] sm:$0xff]
    %v2665 = vld [vmem:[#allocation13] sm:$0x1]
    %v2667 = vlaneseq
    %v2668 = vshrl.u32 %v2667, 7
    %v2669 = vsub.s32 0, %v2668
    %v2670 = vrot.slane %v2665, %v2669
    %v2673 = vsel %vm417, %v2656, 0
    %2675 = vmatprep.subr.mxu0 0.0
    %2676 = vmatpush1.msra.mxu0 0.0
    %2677 = vmatprep.subr.mxu0 0.0
    %2678 = vmatpush1.msra.mxu0 0.0
    %2679 = vmatprep.subr.mxu0 0.0
    %2680 = vmatpush1.msra.mxu0 0.0
    %2681 = vmatprep.subr.mxu0 0.0
    %2682 = vmatpush1.msra.mxu0 0.0
    %2683 = vmatprep.subr.mxu0 0.0
    %2684 = vmatpush1.msra.mxu0 0.0
    %2685 = vmatprep.subr.mxu0 0.0
    %2686 = vmatpush1.msra.mxu0 0.0
    %2687 = vmatprep.subr.mxu0 0.0
    %2688 = vmatpush1.msra.mxu0 0.0
    %2689 = vmatprep.subr.mxu0 0.0
    %2690 = vmatpush1.msra.mxu0 0.0
    %2691 = vmatprep.subr.mxu0 0.0
    %2692 = vmatpush1.msra.mxu0 %v2664
    %2693 = vmatprep.subr.mxu0 0.0
    %2694 = vmatpush1.msra.mxu0 %v2663
    %2695 = vmatprep.subr.mxu0 0.0
    %2696 = vmatpush1.msra.mxu0 %v2662
    %2697 = vmatprep.subr.mxu0 0.0
    %2698 = vmatpush1.msra.mxu0 %v2661
    %2699 = vmatprep.subr.mxu0 0.0
    %2700 = vmatpush1.msra.mxu0 %v2660
    %2701 = vmatprep.subr.mxu0 0.0
    %2702 = vmatpush1.msra.mxu0 %v2659
    %2703 = vmatprep.subr.mxu0 0.0
    %2704 = vmatpush1.msra.mxu0 %v2658
    %2705 = vmatprep.subr.mxu0 0.0
    %2706 = vmatpush1.msra.mxu0 %v2657
    %2707 = vmatprep.subr.mxu0 0.0
    %2708 = vmatpush2.msra.mxu0 0.0
    %2709 = vmatprep.subr.mxu0 0.0
    %2710 = vmatpush2.msra.mxu0 0.0
    %2711 = vmatprep.subr.mxu0 0.0
    %2712 = vmatpush2.msra.mxu0 0.0
    %2713 = vmatprep.subr.mxu0 0.0
    %2714 = vmatpush2.msra.mxu0 0.0
    %2715 = vmatprep.subr.mxu0 0.0
    %2716 = vmatpush2.msra.mxu0 0.0
    %2717 = vmatprep.subr.mxu0 0.0
    %2718 = vmatpush2.msra.mxu0 0.0
    %2719 = vmatprep.subr.mxu0 0.0
    %2720 = vmatpush2.msra.mxu0 0.0
    %2721 = vmatprep.subr.mxu0 0.0
    %2722 = vmatpush2.msra.mxu0 0.0
    %2723 = vmatprep.subr.mxu0 0.0
    %2724 = vmatpush2.msra.mxu0 0.0
    %2725 = vmatprep.subr.mxu0 0.0
    %2726 = vmatpush2.msra.mxu0 0.0
    %2727 = vmatprep.subr.mxu0 0.0
    %2728 = vmatpush2.msra.mxu0 0.0
    %2729 = vmatprep.subr.mxu0 0.0
    %2730 = vmatpush2.msra.mxu0 0.0
    %2731 = vmatprep.subr.mxu0 0.0
    %2732 = vmatpush2.msra.mxu0 0.0
    %2733 = vmatprep.subr.mxu0 0.0
    %2734 = vmatpush2.msra.mxu0 0.0
    %2735 = vmatprep.subr.mxu0 0.0
    %2736 = vmatpush2.msra.mxu0 0.0
    %2737 = vmatprep.subr.mxu0 0.0
    %2738 = vmatpush2.msra.mxu0 0.0
    %2739 = vmatprep.mubr.f32.mxu0 0.0
    %2740 = vmatmul.mubr.f32.gmra.mxu0 %v2673
    %v2741 = vpop.f32.mrf.mxu0
    %v2742 = vadd.f32 %v2670, %v2741
    %v2743 = vpop.f32.mrf.mxu0
    %2744 = vdwg.mxu0
    %v2745 = vadd.f32 %v2742, 3.0
    %v2746 = vmax.f32 %v2745, 0.0
    %v2747 = vmin.f32 %v2746, 6.0
    %v2748 = vmul.f32 %v2742, %v2747
    %v2749 = vmul.f32 %v2748, 0.16666667
    %v2750 = vlaneseq
    %v2751 = vshrl.u32 %v2750, 7
    %v2752 = vsub.s32 0, %v2751
    %v2753 = vrot.slane %v2460, %v2752
    %v2754 = vmul.f32 %v2749, %v2753
    %vm2755 = vcmask 254976
    %v2756 = vsel %vm2755, %v2754, 0.0
    %2757 = vadd.xlane.f32.xlu0 %v2756
    %v2758 = vpop.xlane.xlu0 %2757
    %s2759 = sld [smem:[#allocation16]]
    %v2760 = vstv %s2759
    %v2761 = vadd.f32 %v2758, %v2760
    %v2762 = vmax.f32 %v2761, 0.0
    %vm2763 = vcmask 1024
    %2764 = vst.msk [vmem:[%s13] sm:$0x3] %vm2763, %v2762
    %s2765 = scalar_lea.vmem %s5, 128
    %v2766 = vld [vmem:[%s2765] sm:$0xff]
    %v2767 = vld [vmem:[%s2765 + $0x8] sm:$0xff]
    %v2768 = vld [vmem:[%s2765 + $0x10] sm:$0xff]
    %v2769 = vld [vmem:[%s2765 + $0x18] sm:$0xff]
    %v2770 = vld [vmem:[%s2765 + $0x20] sm:$0xff]
    %v2771 = vld [vmem:[%s2765 + $0x28] sm:$0xff]
    %v2772 = vld [vmem:[%s2765 + $0x30] sm:$0xff]
    %v2773 = vld [vmem:[%s2765 + $0x38] sm:$0xff]
    %v2774 = vld [vmem:[%s2765 + $0x40] sm:$0xff]
    %v2775 = vld [vmem:[%s2765 + $0x48] sm:$0xff]
    %v2776 = vld [vmem:[%s2765 + $0x50] sm:$0xff]
    %v2777 = vld [vmem:[%s2765 + $0x58] sm:$0xff]
    %v2778 = vld [vmem:[%s2765 + $0x60] sm:$0xff]
    %v2779 = vld [vmem:[%s2765 + $0x68] sm:$0xff]
    %v2780 = vld [vmem:[%s2765 + $0x70] sm:$0xff]
    %v2781 = vld [vmem:[%s2765 + $0x78] sm:$0xff]
    %s2782 = scalar_lea.vmem [#allocation10], 1
    %v2783 = vld [vmem:[%s2782] sm:$0x1]
    %v2785 = vlaneseq
    %v2786 = vshrl.u32 %v2785, 7
    %v2787 = vsub.s32 0, %v2786
    %v2788 = vrot.slane %v2783, %v2787
    %2790 = vmatprep.subr.mxu0 0.0
    %2791 = vmatpush1.msra.mxu0 %v2781
    %2792 = vmatprep.subr.mxu0 0.0
    %2793 = vmatpush1.msra.mxu0 %v2780
    %2794 = vmatprep.subr.mxu0 0.0
    %2795 = vmatpush1.msra.mxu0 %v2779
    %2796 = vmatprep.subr.mxu0 0.0
    %2797 = vmatpush1.msra.mxu0 %v2778
    %2798 = vmatprep.subr.mxu0 0.0
    %2799 = vmatpush1.msra.mxu0 %v2777
    %2800 = vmatprep.subr.mxu0 0.0
    %2801 = vmatpush1.msra.mxu0 %v2776
    %2802 = vmatprep.subr.mxu0 0.0
    %2803 = vmatpush1.msra.mxu0 %v2775
    %2804 = vmatprep.subr.mxu0 0.0
    %2805 = vmatpush1.msra.mxu0 %v2774
    %2806 = vmatprep.subr.mxu0 0.0
    %2807 = vmatpush1.msra.mxu0 %v2773
    %2808 = vmatprep.subr.mxu0 0.0
    %2809 = vmatpush1.msra.mxu0 %v2772
    %2810 = vmatprep.subr.mxu0 0.0
    %2811 = vmatpush1.msra.mxu0 %v2771
    %2812 = vmatprep.subr.mxu0 0.0
    %2813 = vmatpush1.msra.mxu0 %v2770
    %2814 = vmatprep.subr.mxu0 0.0
    %2815 = vmatpush1.msra.mxu0 %v2769
    %2816 = vmatprep.subr.mxu0 0.0
    %2817 = vmatpush1.msra.mxu0 %v2768
    %2818 = vmatprep.subr.mxu0 0.0
    %2819 = vmatpush1.msra.mxu0 %v2767
    %2820 = vmatprep.subr.mxu0 0.0
    %2821 = vmatpush1.msra.mxu0 %v2766
    %2822 = vmatprep.subr.mxu0 0.0
    %2823 = vmatpush2.msra.mxu0 0.0
    %2824 = vmatprep.subr.mxu0 0.0
    %2825 = vmatpush2.msra.mxu0 0.0
    %2826 = vmatprep.subr.mxu0 0.0
    %2827 = vmatpush2.msra.mxu0 0.0
    %2828 = vmatprep.subr.mxu0 0.0
    %2829 = vmatpush2.msra.mxu0 0.0
    %2830 = vmatprep.subr.mxu0 0.0
    %2831 = vmatpush2.msra.mxu0 0.0
    %2832 = vmatprep.subr.mxu0 0.0
    %2833 = vmatpush2.msra.mxu0 0.0
    %2834 = vmatprep.subr.mxu0 0.0
    %2835 = vmatpush2.msra.mxu0 0.0
    %2836 = vmatprep.subr.mxu0 0.0
    %2837 = vmatpush2.msra.mxu0 0.0
    %2838 = vmatprep.subr.mxu0 0.0
    %2839 = vmatpush2.msra.mxu0 0.0
    %2840 = vmatprep.subr.mxu0 0.0
    %2841 = vmatpush2.msra.mxu0 0.0
    %2842 = vmatprep.subr.mxu0 0.0
    %2843 = vmatpush2.msra.mxu0 0.0
    %2844 = vmatprep.subr.mxu0 0.0
    %2845 = vmatpush2.msra.mxu0 0.0
    %2846 = vmatprep.subr.mxu0 0.0
    %2847 = vmatpush2.msra.mxu0 0.0
    %2848 = vmatprep.subr.mxu0 0.0
    %2849 = vmatpush2.msra.mxu0 0.0
    %2850 = vmatprep.subr.mxu0 0.0
    %2851 = vmatpush2.msra.mxu0 0.0
    %2852 = vmatprep.subr.mxu0 0.0
    %2853 = vmatpush2.msra.mxu0 0.0
    %2854 = vmatprep.mubr.f32.mxu0 0.0
    %2855 = vmatmul.mubr.f32.gmra.mxu0 %v2457
    %v2856 = vpop.f32.mrf.mxu0
    %v2857 = vadd.f32 %v2788, %v2856
    %v2858 = vpop.f32.mrf.mxu0
    %2859 = vdwg.mxu0
    %v2860 = vadd.f32 %v2857, 3.0
    %v2861 = vmax.f32 %v2860, 0.0
    %v2862 = vmin.f32 %v2861, 6.0
    %v2863 = vmul.f32 %v2857, %v2862
    %v2864 = vmul.f32 %v2863, 0.16666667
    %s2865 = scalar_lea.vmem %s7, 96
    %v2866 = vld [vmem:[%s2865] sm:$0xff]
    %v2867 = vld [vmem:[%s2865 + $0x8] sm:$0xff]
    %v2868 = vld [vmem:[%s2865 + $0x10] sm:$0xff]
    %v2869 = vld [vmem:[%s2865 + $0x18] sm:$0xff]
    %v2870 = vld [vmem:[%s2865 + $0x20] sm:$0xff]
    %v2871 = vld [vmem:[%s2865 + $0x28] sm:$0xff]
    %v2872 = vld [vmem:[%s2865 + $0x30] sm:$0xff]
    %v2873 = vld [vmem:[%s2865 + $0x38] sm:$0xff]
    %v2874 = vld [vmem:[%s2865 + $0x40] sm:$0xff]
    %v2875 = vld [vmem:[%s2865 + $0x48] sm:$0xff]
    %v2876 = vld [vmem:[%s2865 + $0x50] sm:$0xff]
    %v2877 = vld [vmem:[%s2865 + $0x58] sm:$0xff]
    %s2878 = scalar_lea.vmem [#allocation11], 1
    %v2879 = vld [vmem:[%s2878] sm:$0x1]
    %v2881 = vlaneseq
    %v2882 = vshrl.u32 %v2881, 7
    %v2883 = vsub.s32 0, %v2882
    %v2884 = vrot.slane %v2879, %v2883
    %v2887 = vsel %vm2578, %v2864, 0
    %2889 = vmatprep.subr.mxu0 0.0
    %2890 = vmatpush1.msra.mxu0 0.0
    %2891 = vmatprep.subr.mxu0 0.0
    %2892 = vmatpush1.msra.mxu0 0.0
    %2893 = vmatprep.subr.mxu0 0.0
    %2894 = vmatpush1.msra.mxu0 0.0
    %2895 = vmatprep.subr.mxu0 0.0
    %2896 = vmatpush1.msra.mxu0 0.0
    %2897 = vmatprep.subr.mxu0 0.0
    %2898 = vmatpush1.msra.mxu0 %v2877
    %2899 = vmatprep.subr.mxu0 0.0
    %2900 = vmatpush1.msra.mxu0 %v2876
    %2901 = vmatprep.subr.mxu0 0.0
    %2902 = vmatpush1.msra.mxu0 %v2875
    %2903 = vmatprep.subr.mxu0 0.0
    %2904 = vmatpush1.msra.mxu0 %v2874
    %2905 = vmatprep.subr.mxu0 0.0
    %2906 = vmatpush1.msra.mxu0 %v2873
    %2907 = vmatprep.subr.mxu0 0.0
    %2908 = vmatpush1.msra.mxu0 %v2872
    %2909 = vmatprep.subr.mxu0 0.0
    %2910 = vmatpush1.msra.mxu0 %v2871
    %2911 = vmatprep.subr.mxu0 0.0
    %2912 = vmatpush1.msra.mxu0 %v2870
    %2913 = vmatprep.subr.mxu0 0.0
    %2914 = vmatpush1.msra.mxu0 %v2869
    %2915 = vmatprep.subr.mxu0 0.0
    %2916 = vmatpush1.msra.mxu0 %v2868
    %2917 = vmatprep.subr.mxu0 0.0
    %2918 = vmatpush1.msra.mxu0 %v2867
    %2919 = vmatprep.subr.mxu0 0.0
    %2920 = vmatpush1.msra.mxu0 %v2866
    %2921 = vmatprep.subr.mxu0 0.0
    %2922 = vmatpush2.msra.mxu0 0.0
    %2923 = vmatprep.subr.mxu0 0.0
    %2924 = vmatpush2.msra.mxu0 0.0
    %2925 = vmatprep.subr.mxu0 0.0
    %2926 = vmatpush2.msra.mxu0 0.0
    %2927 = vmatprep.subr.mxu0 0.0
    %2928 = vmatpush2.msra.mxu0 0.0
    %2929 = vmatprep.subr.mxu0 0.0
    %2930 = vmatpush2.msra.mxu0 0.0
    %2931 = vmatprep.subr.mxu0 0.0
    %2932 = vmatpush2.msra.mxu0 0.0
    %2933 = vmatprep.subr.mxu0 0.0
    %2934 = vmatpush2.msra.mxu0 0.0
    %2935 = vmatprep.subr.mxu0 0.0
    %2936 = vmatpush2.msra.mxu0 0.0
    %2937 = vmatprep.subr.mxu0 0.0
    %2938 = vmatpush2.msra.mxu0 0.0
    %2939 = vmatprep.subr.mxu0 0.0
    %2940 = vmatpush2.msra.mxu0 0.0
    %2941 = vmatprep.subr.mxu0 0.0
    %2942 = vmatpush2.msra.mxu0 0.0
    %2943 = vmatprep.subr.mxu0 0.0
    %2944 = vmatpush2.msra.mxu0 0.0
    %2945 = vmatprep.subr.mxu0 0.0
    %2946 = vmatpush2.msra.mxu0 0.0
    %2947 = vmatprep.subr.mxu0 0.0
    %2948 = vmatpush2.msra.mxu0 0.0
    %2949 = vmatprep.subr.mxu0 0.0
    %2950 = vmatpush2.msra.mxu0 0.0
    %2951 = vmatprep.subr.mxu0 0.0
    %2952 = vmatpush2.msra.mxu0 0.0
    %2953 = vmatprep.mubr.f32.mxu0 0.0
    %2954 = vmatmul.mubr.f32.gmra.mxu0 %v2887
    %v2955 = vpop.f32.mrf.mxu0
    %v2956 = vadd.f32 %v2884, %v2955
    %v2957 = vpop.f32.mrf.mxu0
    %2958 = vdwg.mxu0
    %v2959 = vadd.f32 %v2956, 3.0
    %v2960 = vmax.f32 %v2959, 0.0
    %v2961 = vmin.f32 %v2960, 6.0
    %v2962 = vmul.f32 %v2956, %v2961
    %v2963 = vmul.f32 %v2962, 0.16666667
    %s2964 = scalar_lea.vmem %s9, 64
    %v2965 = vld [vmem:[%s2964] sm:$0xff]
    %v2966 = vld [vmem:[%s2964 + $0x8] sm:$0xff]
    %v2967 = vld [vmem:[%s2964 + $0x10] sm:$0xff]
    %v2968 = vld [vmem:[%s2964 + $0x18] sm:$0xff]
    %v2969 = vld [vmem:[%s2964 + $0x20] sm:$0xff]
    %v2970 = vld [vmem:[%s2964 + $0x28] sm:$0xff]
    %v2971 = vld [vmem:[%s2964 + $0x30] sm:$0xff]
    %v2972 = vld [vmem:[%s2964 + $0x38] sm:$0xff]
    %s2973 = scalar_lea.vmem [#allocation13], 1
    %v2974 = vld [vmem:[%s2973] sm:$0x1]
    %v2976 = vlaneseq
    %v2977 = vshrl.u32 %v2976, 7
    %v2978 = vsub.s32 0, %v2977
    %v2979 = vrot.slane %v2974, %v2978
    %v2982 = vsel %vm417, %v2963, 0
    %2984 = vmatprep.subr.mxu0 0.0
    %2985 = vmatpush1.msra.mxu0 0.0
    %2986 = vmatprep.subr.mxu0 0.0
    %2987 = vmatpush1.msra.mxu0 0.0
    %2988 = vmatprep.subr.mxu0 0.0
    %2989 = vmatpush1.msra.mxu0 0.0
    %2990 = vmatprep.subr.mxu0 0.0
    %2991 = vmatpush1.msra.mxu0 0.0
    %2992 = vmatprep.subr.mxu0 0.0
    %2993 = vmatpush1.msra.mxu0 0.0
    %2994 = vmatprep.subr.mxu0 0.0
    %2995 = vmatpush1.msra.mxu0 0.0
    %2996 = vmatprep.subr.mxu0 0.0
    %2997 = vmatpush1.msra.mxu0 0.0
    %2998 = vmatprep.subr.mxu0 0.0
    %2999 = vmatpush1.msra.mxu0 0.0
    %3000 = vmatprep.subr.mxu0 0.0
    %3001 = vmatpush1.msra.mxu0 %v2972
    %3002 = vmatprep.subr.mxu0 0.0
    %3003 = vmatpush1.msra.mxu0 %v2971
    %3004 = vmatprep.subr.mxu0 0.0
    %3005 = vmatpush1.msra.mxu0 %v2970
    %3006 = vmatprep.subr.mxu0 0.0
    %3007 = vmatpush1.msra.mxu0 %v2969
    %3008 = vmatprep.subr.mxu0 0.0
    %3009 = vmatpush1.msra.mxu0 %v2968
    %3010 = vmatprep.subr.mxu0 0.0
    %3011 = vmatpush1.msra.mxu0 %v2967
    %3012 = vmatprep.subr.mxu0 0.0
    %3013 = vmatpush1.msra.mxu0 %v2966
    %3014 = vmatprep.subr.mxu0 0.0
    %3015 = vmatpush1.msra.mxu0 %v2965
    %3016 = vmatprep.subr.mxu0 0.0
    %3017 = vmatpush2.msra.mxu0 0.0
    %3018 = vmatprep.subr.mxu0 0.0
    %3019 = vmatpush2.msra.mxu0 0.0
    %3020 = vmatprep.subr.mxu0 0.0
    %3021 = vmatpush2.msra.mxu0 0.0
    %3022 = vmatprep.subr.mxu0 0.0
    %3023 = vmatpush2.msra.mxu0 0.0
    %3024 = vmatprep.subr.mxu0 0.0
    %3025 = vmatpush2.msra.mxu0 0.0
    %3026 = vmatprep.subr.mxu0 0.0
    %3027 = vmatpush2.msra.mxu0 0.0
    %3028 = vmatprep.subr.mxu0 0.0
    %3029 = vmatpush2.msra.mxu0 0.0
    %3030 = vmatprep.subr.mxu0 0.0
    %3031 = vmatpush2.msra.mxu0 0.0
    %3032 = vmatprep.subr.mxu0 0.0
    %3033 = vmatpush2.msra.mxu0 0.0
    %3034 = vmatprep.subr.mxu0 0.0
    %3035 = vmatpush2.msra.mxu0 0.0
    %3036 = vmatprep.subr.mxu0 0.0
    %3037 = vmatpush2.msra.mxu0 0.0
    %3038 = vmatprep.subr.mxu0 0.0
    %3039 = vmatpush2.msra.mxu0 0.0
    %3040 = vmatprep.subr.mxu0 0.0
    %3041 = vmatpush2.msra.mxu0 0.0
    %3042 = vmatprep.subr.mxu0 0.0
    %3043 = vmatpush2.msra.mxu0 0.0
    %3044 = vmatprep.subr.mxu0 0.0
    %3045 = vmatpush2.msra.mxu0 0.0
    %3046 = vmatprep.subr.mxu0 0.0
    %3047 = vmatpush2.msra.mxu0 0.0
    %3048 = vmatprep.mubr.f32.mxu0 0.0
    %3049 = vmatmul.mubr.f32.gmra.mxu0 %v2982
    %v3050 = vpop.f32.mrf.mxu0
    %v3051 = vadd.f32 %v2979, %v3050
    %v3052 = vpop.f32.mrf.mxu0
    %3053 = vdwg.mxu0
    %v3054 = vadd.f32 %v3051, 3.0
    %v3055 = vmax.f32 %v3054, 0.0
    %v3056 = vmin.f32 %v3055, 6.0
    %v3057 = vmul.f32 %v3051, %v3056
    %v3058 = vmul.f32 %v3057, 0.16666667
    %v3059 = vlaneseq
    %v3060 = vshrl.u32 %v3059, 7
    %v3061 = vsub.s32 1, %v3060
    %v3062 = vrot.slane %v2460, %v3061
    %v3063 = vmul.f32 %v3058, %v3062
    %v3064 = vsel %vm2755, %v3063, 0.0
    %3065 = vadd.xlane.f32.xlu0 %v3064
    %v3066 = vpop.xlane.xlu0 %3065
    %s3067 = sld [smem:[#allocation16 + $0x1]]
    %v3068 = vstv %s3067
    %v3069 = vadd.f32 %v3066, %v3068
    %v3070 = vmax.f32 %v3069, 0.0
    %vm3071 = vcmask 9224
    %3072 = vst.msk [vmem:[%s13] sm:$0x3] %vm3071, %v3070
    %s3073 = scalar_lea.vmem %s5, 256
    %v3074 = vld [vmem:[%s3073] sm:$0xff]
    %v3075 = vld [vmem:[%s3073 + $0x8] sm:$0xff]
    %v3076 = vld [vmem:[%s3073 + $0x10] sm:$0xff]
    %v3077 = vld [vmem:[%s3073 + $0x18] sm:$0xff]
    %v3078 = vld [vmem:[%s3073 + $0x20] sm:$0xff]
    %v3079 = vld [vmem:[%s3073 + $0x28] sm:$0xff]
    %v3080 = vld [vmem:[%s3073 + $0x30] sm:$0xff]
    %v3081 = vld [vmem:[%s3073 + $0x38] sm:$0xff]
    %v3082 = vld [vmem:[%s3073 + $0x40] sm:$0xff]
    %v3083 = vld [vmem:[%s3073 + $0x48] sm:$0xff]
    %v3084 = vld [vmem:[%s3073 + $0x50] sm:$0xff]
    %v3085 = vld [vmem:[%s3073 + $0x58] sm:$0xff]
    %v3086 = vld [vmem:[%s3073 + $0x60] sm:$0xff]
    %v3087 = vld [vmem:[%s3073 + $0x68] sm:$0xff]
    %v3088 = vld [vmem:[%s3073 + $0x70] sm:$0xff]
    %v3089 = vld [vmem:[%s3073 + $0x78] sm:$0xff]
    %s3090 = scalar_lea.vmem [#allocation10], 2
    %v3091 = vld [vmem:[%s3090] sm:$0x1]
    %v3093 = vlaneseq
    %v3094 = vshrl.u32 %v3093, 7
    %v3095 = vsub.s32 0, %v3094
    %v3096 = vrot.slane %v3091, %v3095
    %3098 = vmatprep.subr.mxu0 0.0
    %3099 = vmatpush1.msra.mxu0 %v3089
    %3100 = vmatprep.subr.mxu0 0.0
    %3101 = vmatpush1.msra.mxu0 %v3088
    %3102 = vmatprep.subr.mxu0 0.0
    %3103 = vmatpush1.msra.mxu0 %v3087
    %3104 = vmatprep.subr.mxu0 0.0
    %3105 = vmatpush1.msra.mxu0 %v3086
    %3106 = vmatprep.subr.mxu0 0.0
    %3107 = vmatpush1.msra.mxu0 %v3085
    %3108 = vmatprep.subr.mxu0 0.0
    %3109 = vmatpush1.msra.mxu0 %v3084
    %3110 = vmatprep.subr.mxu0 0.0
    %3111 = vmatpush1.msra.mxu0 %v3083
    %3112 = vmatprep.subr.mxu0 0.0
    %3113 = vmatpush1.msra.mxu0 %v3082
    %3114 = vmatprep.subr.mxu0 0.0
    %3115 = vmatpush1.msra.mxu0 %v3081
    %3116 = vmatprep.subr.mxu0 0.0
    %3117 = vmatpush1.msra.mxu0 %v3080
    %3118 = vmatprep.subr.mxu0 0.0
    %3119 = vmatpush1.msra.mxu0 %v3079
    %3120 = vmatprep.subr.mxu0 0.0
    %3121 = vmatpush1.msra.mxu0 %v3078
    %3122 = vmatprep.subr.mxu0 0.0
    %3123 = vmatpush1.msra.mxu0 %v3077
    %3124 = vmatprep.subr.mxu0 0.0
    %3125 = vmatpush1.msra.mxu0 %v3076
    %3126 = vmatprep.subr.mxu0 0.0
    %3127 = vmatpush1.msra.mxu0 %v3075
    %3128 = vmatprep.subr.mxu0 0.0
    %3129 = vmatpush1.msra.mxu0 %v3074
    %3130 = vmatprep.subr.mxu0 0.0
    %3131 = vmatpush2.msra.mxu0 0.0
    %3132 = vmatprep.subr.mxu0 0.0
    %3133 = vmatpush2.msra.mxu0 0.0
    %3134 = vmatprep.subr.mxu0 0.0
    %3135 = vmatpush2.msra.mxu0 0.0
    %3136 = vmatprep.subr.mxu0 0.0
    %3137 = vmatpush2.msra.mxu0 0.0
    %3138 = vmatprep.subr.mxu0 0.0
    %3139 = vmatpush2.msra.mxu0 0.0
    %3140 = vmatprep.subr.mxu0 0.0
    %3141 = vmatpush2.msra.mxu0 0.0
    %3142 = vmatprep.subr.mxu0 0.0
    %3143 = vmatpush2.msra.mxu0 0.0
    %3144 = vmatprep.subr.mxu0 0.0
    %3145 = vmatpush2.msra.mxu0 0.0
    %3146 = vmatprep.subr.mxu0 0.0
    %3147 = vmatpush2.msra.mxu0 0.0
    %3148 = vmatprep.subr.mxu0 0.0
    %3149 = vmatpush2.msra.mxu0 0.0
    %3150 = vmatprep.subr.mxu0 0.0
    %3151 = vmatpush2.msra.mxu0 0.0
    %3152 = vmatprep.subr.mxu0 0.0
    %3153 = vmatpush2.msra.mxu0 0.0
    %3154 = vmatprep.subr.mxu0 0.0
    %3155 = vmatpush2.msra.mxu0 0.0
    %3156 = vmatprep.subr.mxu0 0.0
    %3157 = vmatpush2.msra.mxu0 0.0
    %3158 = vmatprep.subr.mxu0 0.0
    %3159 = vmatpush2.msra.mxu0 0.0
    %3160 = vmatprep.subr.mxu0 0.0
    %3161 = vmatpush2.msra.mxu0 0.0
    %3162 = vmatprep.mubr.f32.mxu0 0.0
    %3163 = vmatmul.mubr.f32.gmra.mxu0 %v2458
    %v3164 = vpop.f32.mrf.mxu0
    %v3165 = vadd.f32 %v3096, %v3164
    %v3166 = vpop.f32.mrf.mxu0
    %3167 = vdwg.mxu0
    %v3168 = vadd.f32 %v3165, 3.0
    %v3169 = vmax.f32 %v3168, 0.0
    %v3170 = vmin.f32 %v3169, 6.0
    %v3171 = vmul.f32 %v3165, %v3170
    %v3172 = vmul.f32 %v3171, 0.16666667
    %s3173 = scalar_lea.vmem %s7, 192
    %v3174 = vld [vmem:[%s3173] sm:$0xff]
    %v3175 = vld [vmem:[%s3173 + $0x8] sm:$0xff]
    %v3176 = vld [vmem:[%s3173 + $0x10] sm:$0xff]
    %v3177 = vld [vmem:[%s3173 + $0x18] sm:$0xff]
    %v3178 = vld [vmem:[%s3173 + $0x20] sm:$0xff]
    %v3179 = vld [vmem:[%s3173 + $0x28] sm:$0xff]
    %v3180 = vld [vmem:[%s3173 + $0x30] sm:$0xff]
    %v3181 = vld [vmem:[%s3173 + $0x38] sm:$0xff]
    %v3182 = vld [vmem:[%s3173 + $0x40] sm:$0xff]
    %v3183 = vld [vmem:[%s3173 + $0x48] sm:$0xff]
    %v3184 = vld [vmem:[%s3173 + $0x50] sm:$0xff]
    %v3185 = vld [vmem:[%s3173 + $0x58] sm:$0xff]
    %s3186 = scalar_lea.vmem [#allocation11], 2
    %v3187 = vld [vmem:[%s3186] sm:$0x1]
    %v3189 = vlaneseq
    %v3190 = vshrl.u32 %v3189, 7
    %v3191 = vsub.s32 0, %v3190
    %v3192 = vrot.slane %v3187, %v3191
    %v3195 = vsel %vm2578, %v3172, 0
    %3197 = vmatprep.subr.mxu0 0.0
    %3198 = vmatpush1.msra.mxu0 0.0
    %3199 = vmatprep.subr.mxu0 0.0
    %3200 = vmatpush1.msra.mxu0 0.0
    %3201 = vmatprep.subr.mxu0 0.0
    %3202 = vmatpush1.msra.mxu0 0.0
    %3203 = vmatprep.subr.mxu0 0.0
    %3204 = vmatpush1.msra.mxu0 0.0
    %3205 = vmatprep.subr.mxu0 0.0
    %3206 = vmatpush1.msra.mxu0 %v3185
    %3207 = vmatprep.subr.mxu0 0.0
    %3208 = vmatpush1.msra.mxu0 %v3184
    %3209 = vmatprep.subr.mxu0 0.0
    %3210 = vmatpush1.msra.mxu0 %v3183
    %3211 = vmatprep.subr.mxu0 0.0
    %3212 = vmatpush1.msra.mxu0 %v3182
    %3213 = vmatprep.subr.mxu0 0.0
    %3214 = vmatpush1.msra.mxu0 %v3181
    %3215 = vmatprep.subr.mxu0 0.0
    %3216 = vmatpush1.msra.mxu0 %v3180
    %3217 = vmatprep.subr.mxu0 0.0
    %3218 = vmatpush1.msra.mxu0 %v3179
    %3219 = vmatprep.subr.mxu0 0.0
    %3220 = vmatpush1.msra.mxu0 %v3178
    %3221 = vmatprep.subr.mxu0 0.0
    %3222 = vmatpush1.msra.mxu0 %v3177
    %3223 = vmatprep.subr.mxu0 0.0
    %3224 = vmatpush1.msra.mxu0 %v3176
    %3225 = vmatprep.subr.mxu0 0.0
    %3226 = vmatpush1.msra.mxu0 %v3175
    %3227 = vmatprep.subr.mxu0 0.0
    %3228 = vmatpush1.msra.mxu0 %v3174
    %3229 = vmatprep.subr.mxu0 0.0
    %3230 = vmatpush2.msra.mxu0 0.0
    %3231 = vmatprep.subr.mxu0 0.0
    %3232 = vmatpush2.msra.mxu0 0.0
    %3233 = vmatprep.subr.mxu0 0.0
    %3234 = vmatpush2.msra.mxu0 0.0
    %3235 = vmatprep.subr.mxu0 0.0
    %3236 = vmatpush2.msra.mxu0 0.0
    %3237 = vmatprep.subr.mxu0 0.0
    %3238 = vmatpush2.msra.mxu0 0.0
    %3239 = vmatprep.subr.mxu0 0.0
    %3240 = vmatpush2.msra.mxu0 0.0
    %3241 = vmatprep.subr.mxu0 0.0
    %3242 = vmatpush2.msra.mxu0 0.0
    %3243 = vmatprep.subr.mxu0 0.0
    %3244 = vmatpush2.msra.mxu0 0.0
    %3245 = vmatprep.subr.mxu0 0.0
    %3246 = vmatpush2.msra.mxu0 0.0
    %3247 = vmatprep.subr.mxu0 0.0
    %3248 = vmatpush2.msra.mxu0 0.0
    %3249 = vmatprep.subr.mxu0 0.0
    %3250 = vmatpush2.msra.mxu0 0.0
    %3251 = vmatprep.subr.mxu0 0.0
    %3252 = vmatpush2.msra.mxu0 0.0
    %3253 = vmatprep.subr.mxu0 0.0
    %3254 = vmatpush2.msra.mxu0 0.0
    %3255 = vmatprep.subr.mxu0 0.0
    %3256 = vmatpush2.msra.mxu0 0.0
    %3257 = vmatprep.subr.mxu0 0.0
    %3258 = vmatpush2.msra.mxu0 0.0
    %3259 = vmatprep.subr.mxu0 0.0
    %3260 = vmatpush2.msra.mxu0 0.0
    %3261 = vmatprep.mubr.f32.mxu0 0.0
    %3262 = vmatmul.mubr.f32.gmra.mxu0 %v3195
    %v3263 = vpop.f32.mrf.mxu0
    %v3264 = vadd.f32 %v3192, %v3263
    %v3265 = vpop.f32.mrf.mxu0
    %3266 = vdwg.mxu0
    %v3267 = vadd.f32 %v3264, 3.0
    %v3268 = vmax.f32 %v3267, 0.0
    %v3269 = vmin.f32 %v3268, 6.0
    %v3270 = vmul.f32 %v3264, %v3269
    %v3271 = vmul.f32 %v3270, 0.16666667
    %s3272 = scalar_lea.vmem %s9, 128
    %v3273 = vld [vmem:[%s3272] sm:$0xff]
    %v3274 = vld [vmem:[%s3272 + $0x8] sm:$0xff]
    %v3275 = vld [vmem:[%s3272 + $0x10] sm:$0xff]
    %v3276 = vld [vmem:[%s3272 + $0x18] sm:$0xff]
    %v3277 = vld [vmem:[%s3272 + $0x20] sm:$0xff]
    %v3278 = vld [vmem:[%s3272 + $0x28] sm:$0xff]
    %v3279 = vld [vmem:[%s3272 + $0x30] sm:$0xff]
    %v3280 = vld [vmem:[%s3272 + $0x38] sm:$0xff]
    %s3281 = scalar_lea.vmem [#allocation13], 2
    %v3282 = vld [vmem:[%s3281] sm:$0x1]
    %v3284 = vlaneseq
    %v3285 = vshrl.u32 %v3284, 7
    %v3286 = vsub.s32 0, %v3285
    %v3287 = vrot.slane %v3282, %v3286
    %v3290 = vsel %vm417, %v3271, 0
    %3292 = vmatprep.subr.mxu0 0.0
    %3293 = vmatpush1.msra.mxu0 0.0
    %3294 = vmatprep.subr.mxu0 0.0
    %3295 = vmatpush1.msra.mxu0 0.0
    %3296 = vmatprep.subr.mxu0 0.0
    %3297 = vmatpush1.msra.mxu0 0.0
    %3298 = vmatprep.subr.mxu0 0.0
    %3299 = vmatpush1.msra.mxu0 0.0
    %3300 = vmatprep.subr.mxu0 0.0
    %3301 = vmatpush1.msra.mxu0 0.0
    %3302 = vmatprep.subr.mxu0 0.0
    %3303 = vmatpush1.msra.mxu0 0.0
    %3304 = vmatprep.subr.mxu0 0.0
    %3305 = vmatpush1.msra.mxu0 0.0
    %3306 = vmatprep.subr.mxu0 0.0
    %3307 = vmatpush1.msra.mxu0 0.0
    %3308 = vmatprep.subr.mxu0 0.0
    %3309 = vmatpush1.msra.mxu0 %v3280
    %3310 = vmatprep.subr.mxu0 0.0
    %3311 = vmatpush1.msra.mxu0 %v3279
    %3312 = vmatprep.subr.mxu0 0.0
    %3313 = vmatpush1.msra.mxu0 %v3278
    %3314 = vmatprep.subr.mxu0 0.0
    %3315 = vmatpush1.msra.mxu0 %v3277
    %3316 = vmatprep.subr.mxu0 0.0
    %3317 = vmatpush1.msra.mxu0 %v3276
    %3318 = vmatprep.subr.mxu0 0.0
    %3319 = vmatpush1.msra.mxu0 %v3275
    %3320 = vmatprep.subr.mxu0 0.0
    %3321 = vmatpush1.msra.mxu0 %v3274
    %3322 = vmatprep.subr.mxu0 0.0
    %3323 = vmatpush1.msra.mxu0 %v3273
    %3324 = vmatprep.subr.mxu0 0.0
    %3325 = vmatpush2.msra.mxu0 0.0
    %3326 = vmatprep.subr.mxu0 0.0
    %3327 = vmatpush2.msra.mxu0 0.0
    %3328 = vmatprep.subr.mxu0 0.0
    %3329 = vmatpush2.msra.mxu0 0.0
    %3330 = vmatprep.subr.mxu0 0.0
    %3331 = vmatpush2.msra.mxu0 0.0
    %3332 = vmatprep.subr.mxu0 0.0
    %3333 = vmatpush2.msra.mxu0 0.0
    %3334 = vmatprep.subr.mxu0 0.0
    %3335 = vmatpush2.msra.mxu0 0.0
    %3336 = vmatprep.subr.mxu0 0.0
    %3337 = vmatpush2.msra.mxu0 0.0
    %3338 = vmatprep.subr.mxu0 0.0
    %3339 = vmatpush2.msra.mxu0 0.0
    %3340 = vmatprep.subr.mxu0 0.0
    %3341 = vmatpush2.msra.mxu0 0.0
    %3342 = vmatprep.subr.mxu0 0.0
    %3343 = vmatpush2.msra.mxu0 0.0
    %3344 = vmatprep.subr.mxu0 0.0
    %3345 = vmatpush2.msra.mxu0 0.0
    %3346 = vmatprep.subr.mxu0 0.0
    %3347 = vmatpush2.msra.mxu0 0.0
    %3348 = vmatprep.subr.mxu0 0.0
    %3349 = vmatpush2.msra.mxu0 0.0
    %3350 = vmatprep.subr.mxu0 0.0
    %3351 = vmatpush2.msra.mxu0 0.0
    %3352 = vmatprep.subr.mxu0 0.0
    %3353 = vmatpush2.msra.mxu0 0.0
    %3354 = vmatprep.subr.mxu0 0.0
    %3355 = vmatpush2.msra.mxu0 0.0
    %3356 = vmatprep.mubr.f32.mxu0 0.0
    %3357 = vmatmul.mubr.f32.gmra.mxu0 %v3290
    %v3358 = vpop.f32.mrf.mxu0
    %v3359 = vadd.f32 %v3287, %v3358
    %v3360 = vpop.f32.mrf.mxu0
    %3361 = vdwg.mxu0
    %v3362 = vadd.f32 %v3359, 3.0
    %v3363 = vmax.f32 %v3362, 0.0
    %v3364 = vmin.f32 %v3363, 6.0
    %v3365 = vmul.f32 %v3359, %v3364
    %v3366 = vmul.f32 %v3365, 0.16666667
    %v3367 = vlaneseq
    %v3368 = vshrl.u32 %v3367, 7
    %v3369 = vsub.s32 2, %v3368
    %v3370 = vrot.slane %v2460, %v3369
    %v3371 = vmul.f32 %v3366, %v3370
    %v3372 = vsel %vm2755, %v3371, 0.0
    %3373 = vadd.xlane.f32.xlu0 %v3372
    %v3374 = vpop.xlane.xlu0 %3373
    %s3375 = sld [smem:[#allocation16 + $0x2]]
    %v3376 = vstv %s3375
    %v3377 = vadd.f32 %v3374, %v3376
    %v3378 = vmax.f32 %v3377, 0.0
    %vm3379 = vcmask 17424
    %3380 = vst.msk [vmem:[%s13] sm:$0x3] %vm3379, %v3378
    %s3381 = scalar_lea.vmem %s5, 384
    %v3382 = vld [vmem:[%s3381] sm:$0xff]
    %v3383 = vld [vmem:[%s3381 + $0x8] sm:$0xff]
    %v3384 = vld [vmem:[%s3381 + $0x10] sm:$0xff]
    %v3385 = vld [vmem:[%s3381 + $0x18] sm:$0xff]
    %v3386 = vld [vmem:[%s3381 + $0x20] sm:$0xff]
    %v3387 = vld [vmem:[%s3381 + $0x28] sm:$0xff]
    %v3388 = vld [vmem:[%s3381 + $0x30] sm:$0xff]
    %v3389 = vld [vmem:[%s3381 + $0x38] sm:$0xff]
    %v3390 = vld [vmem:[%s3381 + $0x40] sm:$0xff]
    %v3391 = vld [vmem:[%s3381 + $0x48] sm:$0xff]
    %v3392 = vld [vmem:[%s3381 + $0x50] sm:$0xff]
    %v3393 = vld [vmem:[%s3381 + $0x58] sm:$0xff]
    %v3394 = vld [vmem:[%s3381 + $0x60] sm:$0xff]
    %v3395 = vld [vmem:[%s3381 + $0x68] sm:$0xff]
    %v3396 = vld [vmem:[%s3381 + $0x70] sm:$0xff]
    %v3397 = vld [vmem:[%s3381 + $0x78] sm:$0xff]
    %s3398 = scalar_lea.vmem [#allocation10], 3
    %v3399 = vld [vmem:[%s3398] sm:$0x1]
    %v3401 = vlaneseq
    %v3402 = vshrl.u32 %v3401, 7
    %v3403 = vsub.s32 0, %v3402
    %v3404 = vrot.slane %v3399, %v3403
    %3406 = vmatprep.subr.mxu0 0.0
    %3407 = vmatpush1.msra.mxu0 %v3397
    %3408 = vmatprep.subr.mxu0 0.0
    %3409 = vmatpush1.msra.mxu0 %v3396
    %3410 = vmatprep.subr.mxu0 0.0
    %3411 = vmatpush1.msra.mxu0 %v3395
    %3412 = vmatprep.subr.mxu0 0.0
    %3413 = vmatpush1.msra.mxu0 %v3394
    %3414 = vmatprep.subr.mxu0 0.0
    %3415 = vmatpush1.msra.mxu0 %v3393
    %3416 = vmatprep.subr.mxu0 0.0
    %3417 = vmatpush1.msra.mxu0 %v3392
    %3418 = vmatprep.subr.mxu0 0.0
    %3419 = vmatpush1.msra.mxu0 %v3391
    %3420 = vmatprep.subr.mxu0 0.0
    %3421 = vmatpush1.msra.mxu0 %v3390
    %3422 = vmatprep.subr.mxu0 0.0
    %3423 = vmatpush1.msra.mxu0 %v3389
    %3424 = vmatprep.subr.mxu0 0.0
    %3425 = vmatpush1.msra.mxu0 %v3388
    %3426 = vmatprep.subr.mxu0 0.0
    %3427 = vmatpush1.msra.mxu0 %v3387
    %3428 = vmatprep.subr.mxu0 0.0
    %3429 = vmatpush1.msra.mxu0 %v3386
    %3430 = vmatprep.subr.mxu0 0.0
    %3431 = vmatpush1.msra.mxu0 %v3385
    %3432 = vmatprep.subr.mxu0 0.0
    %3433 = vmatpush1.msra.mxu0 %v3384
    %3434 = vmatprep.subr.mxu0 0.0
    %3435 = vmatpush1.msra.mxu0 %v3383
    %3436 = vmatprep.subr.mxu0 0.0
    %3437 = vmatpush1.msra.mxu0 %v3382
    %3438 = vmatprep.subr.mxu0 0.0
    %3439 = vmatpush2.msra.mxu0 0.0
    %3440 = vmatprep.subr.mxu0 0.0
    %3441 = vmatpush2.msra.mxu0 0.0
    %3442 = vmatprep.subr.mxu0 0.0
    %3443 = vmatpush2.msra.mxu0 0.0
    %3444 = vmatprep.subr.mxu0 0.0
    %3445 = vmatpush2.msra.mxu0 0.0
    %3446 = vmatprep.subr.mxu0 0.0
    %3447 = vmatpush2.msra.mxu0 0.0
    %3448 = vmatprep.subr.mxu0 0.0
    %3449 = vmatpush2.msra.mxu0 0.0
    %3450 = vmatprep.subr.mxu0 0.0
    %3451 = vmatpush2.msra.mxu0 0.0
    %3452 = vmatprep.subr.mxu0 0.0
    %3453 = vmatpush2.msra.mxu0 0.0
    %3454 = vmatprep.subr.mxu0 0.0
    %3455 = vmatpush2.msra.mxu0 0.0
    %3456 = vmatprep.subr.mxu0 0.0
    %3457 = vmatpush2.msra.mxu0 0.0
    %3458 = vmatprep.subr.mxu0 0.0
    %3459 = vmatpush2.msra.mxu0 0.0
    %3460 = vmatprep.subr.mxu0 0.0
    %3461 = vmatpush2.msra.mxu0 0.0
    %3462 = vmatprep.subr.mxu0 0.0
    %3463 = vmatpush2.msra.mxu0 0.0
    %3464 = vmatprep.subr.mxu0 0.0
    %3465 = vmatpush2.msra.mxu0 0.0
    %3466 = vmatprep.subr.mxu0 0.0
    %3467 = vmatpush2.msra.mxu0 0.0
    %3468 = vmatprep.subr.mxu0 0.0
    %3469 = vmatpush2.msra.mxu0 0.0
    %3470 = vmatprep.mubr.f32.mxu0 0.0
    %3471 = vmatmul.mubr.f32.gmra.mxu0 %v2459
    %v3472 = vpop.f32.mrf.mxu0
    %v3473 = vadd.f32 %v3404, %v3472
    %v3474 = vpop.f32.mrf.mxu0
    %3475 = vdwg.mxu0
    %v3476 = vadd.f32 %v3473, 3.0
    %v3477 = vmax.f32 %v3476, 0.0
    %v3478 = vmin.f32 %v3477, 6.0
    %v3479 = vmul.f32 %v3473, %v3478
    %v3480 = vmul.f32 %v3479, 0.16666667
    %s3481 = scalar_lea.vmem %s7, 288
    %v3482 = vld [vmem:[%s3481] sm:$0xff]
    %v3483 = vld [vmem:[%s3481 + $0x8] sm:$0xff]
    %v3484 = vld [vmem:[%s3481 + $0x10] sm:$0xff]
    %v3485 = vld [vmem:[%s3481 + $0x18] sm:$0xff]
    %v3486 = vld [vmem:[%s3481 + $0x20] sm:$0xff]
    %v3487 = vld [vmem:[%s3481 + $0x28] sm:$0xff]
    %v3488 = vld [vmem:[%s3481 + $0x30] sm:$0xff]
    %v3489 = vld [vmem:[%s3481 + $0x38] sm:$0xff]
    %v3490 = vld [vmem:[%s3481 + $0x40] sm:$0xff]
    %v3491 = vld [vmem:[%s3481 + $0x48] sm:$0xff]
    %v3492 = vld [vmem:[%s3481 + $0x50] sm:$0xff]
    %v3493 = vld [vmem:[%s3481 + $0x58] sm:$0xff]
    %s3494 = scalar_lea.vmem [#allocation11], 3
    %v3495 = vld [vmem:[%s3494] sm:$0x1]
    %v3497 = vlaneseq
    %v3498 = vshrl.u32 %v3497, 7
    %v3499 = vsub.s32 0, %v3498
    %v3500 = vrot.slane %v3495, %v3499
    %v3503 = vsel %vm2578, %v3480, 0
    %3505 = vmatprep.subr.mxu0 0.0
    %3506 = vmatpush1.msra.mxu0 0.0
    %3507 = vmatprep.subr.mxu0 0.0
    %3508 = vmatpush1.msra.mxu0 0.0
    %3509 = vmatprep.subr.mxu0 0.0
    %3510 = vmatpush1.msra.mxu0 0.0
    %3511 = vmatprep.subr.mxu0 0.0
    %3512 = vmatpush1.msra.mxu0 0.0
    %3513 = vmatprep.subr.mxu0 0.0
    %3514 = vmatpush1.msra.mxu0 %v3493
    %3515 = vmatprep.subr.mxu0 0.0
    %3516 = vmatpush1.msra.mxu0 %v3492
    %3517 = vmatprep.subr.mxu0 0.0
    %3518 = vmatpush1.msra.mxu0 %v3491
    %3519 = vmatprep.subr.mxu0 0.0
    %3520 = vmatpush1.msra.mxu0 %v3490
    %3521 = vmatprep.subr.mxu0 0.0
    %3522 = vmatpush1.msra.mxu0 %v3489
    %3523 = vmatprep.subr.mxu0 0.0
    %3524 = vmatpush1.msra.mxu0 %v3488
    %3525 = vmatprep.subr.mxu0 0.0
    %3526 = vmatpush1.msra.mxu0 %v3487
    %3527 = vmatprep.subr.mxu0 0.0
    %3528 = vmatpush1.msra.mxu0 %v3486
    %3529 = vmatprep.subr.mxu0 0.0
    %3530 = vmatpush1.msra.mxu0 %v3485
    %3531 = vmatprep.subr.mxu0 0.0
    %3532 = vmatpush1.msra.mxu0 %v3484
    %3533 = vmatprep.subr.mxu0 0.0
    %3534 = vmatpush1.msra.mxu0 %v3483
    %3535 = vmatprep.subr.mxu0 0.0
    %3536 = vmatpush1.msra.mxu0 %v3482
    %3537 = vmatprep.subr.mxu0 0.0
    %3538 = vmatpush2.msra.mxu0 0.0
    %3539 = vmatprep.subr.mxu0 0.0
    %3540 = vmatpush2.msra.mxu0 0.0
    %3541 = vmatprep.subr.mxu0 0.0
    %3542 = vmatpush2.msra.mxu0 0.0
    %3543 = vmatprep.subr.mxu0 0.0
    %3544 = vmatpush2.msra.mxu0 0.0
    %3545 = vmatprep.subr.mxu0 0.0
    %3546 = vmatpush2.msra.mxu0 0.0
    %3547 = vmatprep.subr.mxu0 0.0
    %3548 = vmatpush2.msra.mxu0 0.0
    %3549 = vmatprep.subr.mxu0 0.0
    %3550 = vmatpush2.msra.mxu0 0.0
    %3551 = vmatprep.subr.mxu0 0.0
    %3552 = vmatpush2.msra.mxu0 0.0
    %3553 = vmatprep.subr.mxu0 0.0
    %3554 = vmatpush2.msra.mxu0 0.0
    %3555 = vmatprep.subr.mxu0 0.0
    %3556 = vmatpush2.msra.mxu0 0.0
    %3557 = vmatprep.subr.mxu0 0.0
    %3558 = vmatpush2.msra.mxu0 0.0
    %3559 = vmatprep.subr.mxu0 0.0
    %3560 = vmatpush2.msra.mxu0 0.0
    %3561 = vmatprep.subr.mxu0 0.0
    %3562 = vmatpush2.msra.mxu0 0.0
    %3563 = vmatprep.subr.mxu0 0.0
    %3564 = vmatpush2.msra.mxu0 0.0
    %3565 = vmatprep.subr.mxu0 0.0
    %3566 = vmatpush2.msra.mxu0 0.0
    %3567 = vmatprep.subr.mxu0 0.0
    %3568 = vmatpush2.msra.mxu0 0.0
    %3569 = vmatprep.mubr.f32.mxu0 0.0
    %3570 = vmatmul.mubr.f32.gmra.mxu0 %v3503
    %v3571 = vpop.f32.mrf.mxu0
    %v3572 = vadd.f32 %v3500, %v3571
    %v3573 = vpop.f32.mrf.mxu0
    %3574 = vdwg.mxu0
    %v3575 = vadd.f32 %v3572, 3.0
    %v3576 = vmax.f32 %v3575, 0.0
    %v3577 = vmin.f32 %v3576, 6.0
    %v3578 = vmul.f32 %v3572, %v3577
    %v3579 = vmul.f32 %v3578, 0.16666667
    %s3580 = scalar_lea.vmem %s9, 192
    %v3581 = vld [vmem:[%s3580] sm:$0xff]
    %v3582 = vld [vmem:[%s3580 + $0x8] sm:$0xff]
    %v3583 = vld [vmem:[%s3580 + $0x10] sm:$0xff]
    %v3584 = vld [vmem:[%s3580 + $0x18] sm:$0xff]
    %v3585 = vld [vmem:[%s3580 + $0x20] sm:$0xff]
    %v3586 = vld [vmem:[%s3580 + $0x28] sm:$0xff]
    %v3587 = vld [vmem:[%s3580 + $0x30] sm:$0xff]
    %v3588 = vld [vmem:[%s3580 + $0x38] sm:$0xff]
    %s3589 = scalar_lea.vmem [#allocation13], 3
    %v3590 = vld [vmem:[%s3589] sm:$0x1]
    %v3592 = vlaneseq
    %v3593 = vshrl.u32 %v3592, 7
    %v3594 = vsub.s32 0, %v3593
    %v3595 = vrot.slane %v3590, %v3594
    %v3598 = vsel %vm417, %v3579, 0
    %3600 = vmatprep.subr.mxu0 0.0
    %3601 = vmatpush1.msra.mxu0 0.0
    %3602 = vmatprep.subr.mxu0 0.0
    %3603 = vmatpush1.msra.mxu0 0.0
    %3604 = vmatprep.subr.mxu0 0.0
    %3605 = vmatpush1.msra.mxu0 0.0
    %3606 = vmatprep.subr.mxu0 0.0
    %3607 = vmatpush1.msra.mxu0 0.0
    %3608 = vmatprep.subr.mxu0 0.0
    %3609 = vmatpush1.msra.mxu0 0.0
    %3610 = vmatprep.subr.mxu0 0.0
    %3611 = vmatpush1.msra.mxu0 0.0
    %3612 = vmatprep.subr.mxu0 0.0
    %3613 = vmatpush1.msra.mxu0 0.0
    %3614 = vmatprep.subr.mxu0 0.0
    %3615 = vmatpush1.msra.mxu0 0.0
    %3616 = vmatprep.subr.mxu0 0.0
    %3617 = vmatpush1.msra.mxu0 %v3588
    %3618 = vmatprep.subr.mxu0 0.0
    %3619 = vmatpush1.msra.mxu0 %v3587
    %3620 = vmatprep.subr.mxu0 0.0
    %3621 = vmatpush1.msra.mxu0 %v3586
    %3622 = vmatprep.subr.mxu0 0.0
    %3623 = vmatpush1.msra.mxu0 %v3585
    %3624 = vmatprep.subr.mxu0 0.0
    %3625 = vmatpush1.msra.mxu0 %v3584
    %3626 = vmatprep.subr.mxu0 0.0
    %3627 = vmatpush1.msra.mxu0 %v3583
    %3628 = vmatprep.subr.mxu0 0.0
    %3629 = vmatpush1.msra.mxu0 %v3582
    %3630 = vmatprep.subr.mxu0 0.0
    %3631 = vmatpush1.msra.mxu0 %v3581
    %3632 = vmatprep.subr.mxu0 0.0
    %3633 = vmatpush2.msra.mxu0 0.0
    %3634 = vmatprep.subr.mxu0 0.0
    %3635 = vmatpush2.msra.mxu0 0.0
    %3636 = vmatprep.subr.mxu0 0.0
    %3637 = vmatpush2.msra.mxu0 0.0
    %3638 = vmatprep.subr.mxu0 0.0
    %3639 = vmatpush2.msra.mxu0 0.0
    %3640 = vmatprep.subr.mxu0 0.0
    %3641 = vmatpush2.msra.mxu0 0.0
    %3642 = vmatprep.subr.mxu0 0.0
    %3643 = vmatpush2.msra.mxu0 0.0
    %3644 = vmatprep.subr.mxu0 0.0
    %3645 = vmatpush2.msra.mxu0 0.0
    %3646 = vmatprep.subr.mxu0 0.0
    %3647 = vmatpush2.msra.mxu0 0.0
    %3648 = vmatprep.subr.mxu0 0.0
    %3649 = vmatpush2.msra.mxu0 0.0
    %3650 = vmatprep.subr.mxu0 0.0
    %3651 = vmatpush2.msra.mxu0 0.0
    %3652 = vmatprep.subr.mxu0 0.0
    %3653 = vmatpush2.msra.mxu0 0.0
    %3654 = vmatprep.subr.mxu0 0.0
    %3655 = vmatpush2.msra.mxu0 0.0
    %3656 = vmatprep.subr.mxu0 0.0
    %3657 = vmatpush2.msra.mxu0 0.0
    %3658 = vmatprep.subr.mxu0 0.0
    %3659 = vmatpush2.msra.mxu0 0.0
    %3660 = vmatprep.subr.mxu0 0.0
    %3661 = vmatpush2.msra.mxu0 0.0
    %3662 = vmatprep.subr.mxu0 0.0
    %3663 = vmatpush2.msra.mxu0 0.0
    %3664 = vmatprep.mubr.f32.mxu0 0.0
    %3665 = vmatmul.mubr.f32.gmra.mxu0 %v3598
    %v3666 = vpop.f32.mrf.mxu0
    %v3667 = vadd.f32 %v3595, %v3666
    %v3668 = vpop.f32.mrf.mxu0
    %3669 = vdwg.mxu0
    %v3670 = vadd.f32 %v3667, 3.0
    %v3671 = vmax.f32 %v3670, 0.0
    %v3672 = vmin.f32 %v3671, 6.0
    %v3673 = vmul.f32 %v3667, %v3672
    %v3674 = vmul.f32 %v3673, 0.16666667
    %v3675 = vlaneseq
    %v3676 = vshrl.u32 %v3675, 7
    %v3677 = vsub.s32 3, %v3676
    %v3678 = vrot.slane %v2460, %v3677
    %v3679 = vmul.f32 %v3674, %v3678
    %v3680 = vsel %vm2755, %v3679, 0.0
    %3681 = vadd.xlane.f32.xlu0 %v3680
    %v3682 = vpop.xlane.xlu0 %3681
    %s3683 = sld [smem:[#allocation16 + $0x3]]
    %v3684 = vstv %s3683
    %v3685 = vadd.f32 %v3682, %v3684
    %v3686 = vmax.f32 %v3685, 0.0
    %vm3687 = vcmask 25624
    %3688 = vst.msk [vmem:[%s13] sm:$0x3] %vm3687, %v3686
    // Predicated region
    $region90: #{transfer_model_forward.1} parent=1 // pred_check
      _
    $region91: #{transfer_model_forward.1} parent=1 // pred_check_branch
      %3690 = sbr.rel (0) target = $region93
    $region92: #{transfer_model_forward.1} parent=1 // pred_region
      _
    $region93: #{transfer_model_forward.1} parent=1 // pred_fallthru
      _
    // Predicated region
    $region94: #{transfer_model_forward.1} parent=1 // pred_check
      _
    $region95: #{transfer_model_forward.1} parent=1 // pred_check_branch
      %3692 = sbr.rel (0) target = $region97
    $region96: #{transfer_model_forward.1} parent=1 // pred_region
      _
    $region97: #{transfer_model_forward.1} parent=1 // pred_fallthru
      _
    %3693 = vsyncpa [#allocation3], 1
    %3694 = vsyncpa [#allocation9], 1
    %3695 = vsyncpa [#allocation12], 1
    %3696 = vsyncpa [#allocation15], 1
    %3697 = vsyncpa [#allocation4], 1
    %3698 = vsyncpa [#allocation17], 1
    %3699 = vsyncpa [#allocation5], 1

</llo_original>
